<compile_context>
chip_gen: v7x
topology: tpu7x:2x2x1
jax: 0.10.0
libtpu: 0.0.40
codegen_flags: <defaults>
</compile_context>

<pallas_src>
import functools

import jax
import jax.numpy as jnp
import numpy as np
from jax import lax
from jax.experimental import pallas as pl
from jax.experimental.pallas import tpu as pltpu


# ----------------------------------------------------------------------------
# Pallas kernel: B images per grid step, all convs as bf16 MXU matmuls with
# f32 accumulation; elementwise epilogue stays f32 (v5e VPU has no bf16).
# ----------------------------------------------------------------------------
def _res_block_kernel(x_ref, w1_ref, w2_ref, wid_ref, b1_ref, bf_ref,
                      out_ref, xpad_ref, y1_ref, *, H, W, B, out_hwc):
    cin = x_ref.shape[-1]
    cout = w2_ref.shape[-1]
    hw = H * W
    cdt = jnp.bfloat16  # MXU compute dtype

    # Zero the halo buffer once per grid step (cost amortized over B images;
    # the interior is fully overwritten per image so the border stays zero).
    # Scratch stays f32 so the offset-(1,1) interior store remains a plain
    # masked f32 store (bf16 scratch would need sublane-interleave stores).
    xpad_ref[...] = jnp.zeros_like(xpad_ref)

    # ---- conv1: 3x3 same-pad conv (BN1 folded into w1), per image ----------
    # 3 deep-K matmuls per image: for each kw, lane-concatenate the three
    # kh-shifted slabs (K = 3*Cin) and hit the MXU once. kw-shifted slabs are
    # built once per kw (3 relayouts, not 9).
    for b in range(B):
        xpad_ref[1:H + 1, 1:W + 1, :] = x_ref[b].astype(xpad_ref.dtype)
        acc = None
        for kw in range(3):
            xw = xpad_ref[:, kw:kw + W, :].reshape((H + 2) * W, cin)
            patch = jnp.concatenate(
                [xw[kh * W:kh * W + hw, :] for kh in range(3)],
                axis=-1).astype(cdt)                              # (H*W, 3*Cin)
            tap = jnp.dot(patch, w1_ref[kw],
                          preferred_element_type=jnp.float32)
            acc = tap if acc is None else acc + tap
        y1 = jnp.maximum(acc + b1_ref[...], 0.0)                  # (H*W, Cin) f32
        y1_ref[b] = y1.astype(cdt)

    # ---- conv2 (1x1) + identity (1x1): batched over M = B*H*W --------------
    xc = x_ref[...].reshape(B * hw, cin)                          # bf16
    o = jnp.dot(y1_ref[...].reshape(B * hw, cin), w2_ref[...],
                preferred_element_type=jnp.float32)
    o = o + jnp.dot(xc, wid_ref[...], preferred_element_type=jnp.float32)
    o = jnp.maximum(o + bf_ref[...], 0.0)                         # (B*H*W, Cout) f32

    # ---- lane-dense store ---------------------------------------------------
    if out_hwc:
        # Cout % 128 == 0 (real mmdet Cout=1024): (B, H*W, Cout), no transpose.
        out_ref[...] = o.reshape(B, hw, cout).astype(out_ref.dtype)
    else:
        # H*W % 128 == 0: (B, Cout, H*W); wrapper reshape to NCHW is free.
        o3 = o.reshape(B, hw, cout)
        for b in range(B):
            out_ref[b] = o3[b].T.astype(out_ref.dtype)


# ----------------------------------------------------------------------------
# Per-step image-batch heuristic: largest divisor of N that keeps >= 2 grid
# steps (v7x: 2 TensorCores) and fits a conservative VMEM budget.
# ----------------------------------------------------------------------------
def _pick_block_n(N, H, W, Cin, Cout, vmem_budget=16 * 1024 * 1024):
    hw = H * W
    per_img = (2 * hw * Cin * 2          # x block, bf16, double-buffered
               + 2 * hw * Cout * 2       # out block, bf16, double-buffered
               + hw * Cin * 2            # y1 scratch, bf16
               + hw * Cout * 4           # f32 conv2+identity accumulator value
               + hw * Cin * 4)           # misc f32 temporaries (conv1 acc etc.)
    best = 1
    for b in range(1, N + 1):
        if N % b:
            continue
        if N // b < 2 and N >= 2:
            continue
        if b * per_img <= vmem_budget:
            best = b
    return best


def _const_spec(shape):
    """Grid-invariant operand: constant index_map, single-buffered if possible."""
    idx = lambda n: (0,) * len(shape)
    try:
        return pl.BlockSpec(shape, idx, pipeline_mode=pl.Buffered(1))
    except (TypeError, ValueError):
        return pl.BlockSpec(shape, idx)


# ----------------------------------------------------------------------------
# Wrapper: NCHW in / NCHW out (bf16).
# ----------------------------------------------------------------------------
def basic_res_block(x_nchw, params, *, block_n=None):
    N, Cin, H, W = x_nchw.shape
    Cout = params['w2'].shape[-1]
    HW = H * W

    if block_n is None:
        block_n = _pick_block_n(N, H, W, Cin, Cout)
    B = block_n
    assert N % B == 0, f"block_n={B} must divide N={N}"

    # Lane-dense output layout choice (see kernel): prefer (H*W, Cout).
    out_hwc = (Cout % 128 == 0) or (HW % 128 != 0)

    # Single host-side input layout op: NCHW -> NHWC, fused with the bf16 cast.
    x_nhwc = jnp.transpose(x_nchw, (0, 2, 3, 1)).astype(jnp.bfloat16)

    kernel = functools.partial(_res_block_kernel, H=H, W=W, B=B, out_hwc=out_hwc)

    if out_hwc:
        out_block = (B, HW, Cout)
        out_shape = jax.ShapeDtypeStruct((N, HW, Cout), jnp.bfloat16)
    else:
        out_block = (B, Cout, HW)
        out_shape = jax.ShapeDtypeStruct((N, Cout, HW), jnp.bfloat16)

    out_flat = pl.pallas_call(
        kernel,
        out_shape=out_shape,
        grid_spec=pltpu.PrefetchScalarGridSpec(
            num_scalar_prefetch=0,
            grid=(N // B,),
            in_specs=[
                pl.BlockSpec((B, H, W, Cin), lambda n: (n, 0, 0, 0)),
                _const_spec((3, 3 * Cin, Cin)),   # w1, (kw, 3*Cin, Cin)
                _const_spec((Cin, Cout)),         # w2
                _const_spec((Cin, Cout)),         # wid
                _const_spec((1, Cin)),            # b1
                _const_spec((1, Cout)),           # bf = b2 + bid
            ],
            out_specs=pl.BlockSpec(out_block, lambda n: (n, 0, 0)),
            scratch_shapes=[
                pltpu.VMEM((H + 2, W + 2, Cin), jnp.float32),   # halo buffer
                pltpu.VMEM((B, HW, Cin), jnp.bfloat16),         # y1 staging
            ],
        ),
        compiler_params=pltpu.CompilerParams(
            dimension_semantics=("parallel",),
            vmem_limit_bytes=32 * 1024 * 1024),
    )(x_nhwc, params['w1'], params['w2'], params['wid'],
      params['b1'], params['bf'])

    if out_hwc:
        # (N, H*W, Cout) -> NCHW (transpose done by XLA in the wrapper).
        return out_flat.reshape(N, H, W, Cout).transpose(0, 3, 1, 2)
    # (N, Cout, H*W) -> NCHW: contiguous reshape only (free).
    return out_flat.reshape(N, Cout, H, W)


# ----------------------------------------------------------------------------
# Parameters: raw conv weights + eval-mode BN scale/bias, folded on the host.
# ----------------------------------------------------------------------------
def _bn_scale_bias(key, c, eps=1e-5):
    kg, kb, km, kv = jax.random.split(key, 4)
    gamma = 1.0 + 0.1 * jax.random.normal(kg, (c,), jnp.float32)
    beta = 0.1 * jax.random.normal(kb, (c,), jnp.float32)
    mean = 0.1 * jax.random.normal(km, (c,), jnp.float32)
    var = jnp.abs(jax.random.normal(kv, (c,), jnp.float32)) + 0.5
    scale = gamma / jnp.sqrt(var + eps)
    bias = beta - mean * scale
    return scale, bias


def make_raw_params(key, cin, cout):
    k1, k2, k3, kb1, kb2, kb3 = jax.random.split(key, 6)
    w1 = 0.1 * jax.random.normal(k1, (3, 3, cin, cin), jnp.float32)  # HWIO
    w2 = 0.1 * jax.random.normal(k2, (cin, cout), jnp.float32)
    wid = 0.1 * jax.random.normal(k3, (cin, cout), jnp.float32)
    s1, b1 = _bn_scale_bias(kb1, cin)
    s2, b2 = _bn_scale_bias(kb2, cout)
    sid, bid = _bn_scale_bias(kb3, cout)
    return dict(w1=w1, w2=w2, wid=wid, s1=s1, b1=b1, s2=s2, b2=b2,
                sid=sid, bid=bid)


def fold_params(raw):
    """Fold eval-mode BN scales into the conv weights (f32 on host), then cast.

    w1 is additionally re-laid-out to (kw, 3*Cin, Cin): per kw, the three kh
    taps are stacked along K to match the kernel's lane-concatenated patches.
    """
    cin = raw['w1'].shape[2]
    w1 = raw['w1'] * raw['s1'][None, None, None, :]   # scale conv1 out-channels
    w1_kw = jnp.transpose(w1, (1, 0, 2, 3)).reshape(3, 3 * cin, cin)
    w2 = raw['w2'] * raw['s2'][None, :]
    wid = raw['wid'] * raw['sid'][None, :]
    return dict(
        w1=w1_kw.astype(jnp.bfloat16),
        w2=w2.astype(jnp.bfloat16),
        wid=wid.astype(jnp.bfloat16),
        b1=raw['b1'].reshape(1, -1).astype(jnp.float32),
        bf=(raw['b2'] + raw['bid']).reshape(1, -1).astype(jnp.float32),
    )


# ----------------------------------------------------------------------------
# Pure-JAX f32 reference (uses the UN-folded params; checks the BN-fold too).
# ----------------------------------------------------------------------------
def reference(x_nchw, p):
    x = jnp.transpose(x_nchw, (0, 2, 3, 1))  # NHWC
    dn = lax.conv_dimension_numbers(x.shape, p['w1'].shape,
                                    ('NHWC', 'HWIO', 'NHWC'))
    y1 = lax.conv_general_dilated(x, p['w1'], (1, 1), 'SAME',
                                  dimension_numbers=dn)
    y1 = jnp.maximum(y1 * p['s1'] + p['b1'], 0.0)
    y2 = jnp.einsum('nhwc,cd->nhwd', y1, p['w2']) * p['s2'] + p['b2']
    yid = jnp.einsum('nhwc,cd->nhwd', x, p['wid']) * p['sid'] + p['bid']
    out = jnp.maximum(y2 + yid, 0.0)
    return jnp.transpose(out, (0, 3, 1, 2))


if __name__ == "__main__":
    key = jax.random.PRNGKey(0)
    k1, k2 = jax.random.split(key)

    def run_case(k, N, Cin, Cout, H, W):
        kx, kp = jax.random.split(k)
        x = jax.random.normal(kx, (N, Cin, H, W), jnp.float32)
        raw = make_raw_params(kp, Cin, Cout)
        params = fold_params(raw)
        out = jax.block_until_ready(basic_res_block(x, params))
        ref = jax.block_until_ready(reference(x, raw))
        assert out.shape == (N, Cout, H, W), out.shape
        # bf16 MXU operands + bf16 output -> loosened tolerance vs. f32 ref.
        np.testing.assert_allclose(np.asarray(out.astype(jnp.float32)),
                                   np.asarray(ref), rtol=2e-2, atol=2e-2)

    # Case 1: H*W % 128 == 0  -> (Cout, H*W) lane-dense store path.
    run_case(k1, N=4, Cin=4, Cout=8, H=16, W=16)
    # Case 2: Cout % 128 == 0 -> (H*W, Cout) lane-dense, no-transpose path
    # (the layout used at real mmdet shapes Cin=256, Cout=1024, H=W=7).
    run_case(k2, N=4, Cin=8, Cout=128, H=8, W=8)

    print("KERNEL_OK")
</pallas_src>

<mosaic_0001>
module attributes {stable_mosaic.version = 11 : i64} {
  func.func @_res_block_kernel(%arg0: i32, %arg1: memref<2x16x16x4xbf16, #tpu.memory_space<vmem>>, %arg2: memref<3x12x4xbf16, #tpu.memory_space<vmem>>, %arg3: memref<4x8xbf16, #tpu.memory_space<vmem>>, %arg4: memref<4x8xbf16, #tpu.memory_space<vmem>>, %arg5: memref<1x4xf32, #tpu.memory_space<vmem>>, %arg6: memref<1x8xf32, #tpu.memory_space<vmem>>, %arg7: memref<2x8x256xbf16, #tpu.memory_space<vmem>>, %arg8: memref<18x18x4xf32, #tpu.memory_space<vmem>>, %arg9: memref<2x256x4xbf16, #tpu.memory_space<vmem>>) attributes {dimension_semantics = [#tpu.dimension_semantics<parallel>], iteration_bounds = array<i64: 2>, scalar_prefetch = 0 : i64, scratch_operands = 2 : i64, tpu.core_type = #tpu.core_type<tc>, window_params = [{transform_indices = @transform_0, window_bounds = array<i64: 2, 16, 16, 4>}, {pipeline_mode = #tpu.pipeline_mode<synchronous>, transform_indices = @transform_1, window_bounds = array<i64: 3, 12, 4>}, {pipeline_mode = #tpu.pipeline_mode<synchronous>, transform_indices = @transform_2, window_bounds = array<i64: 4, 8>}, {pipeline_mode = #tpu.pipeline_mode<synchronous>, transform_indices = @transform_3, window_bounds = array<i64: 4, 8>}, {pipeline_mode = #tpu.pipeline_mode<synchronous>, transform_indices = @transform_4, window_bounds = array<i64: 1, 4>}, {pipeline_mode = #tpu.pipeline_mode<synchronous>, transform_indices = @transform_5, window_bounds = array<i64: 1, 8>}, {transform_indices = @transform_6, window_bounds = array<i64: 2, 8, 256>}]} {
    %cst = arith.constant 0.000000e+00 : f32
    %0 = vector.broadcast %cst : f32 to vector<18x18x4xf32>
    %c0 = arith.constant 0 : index
    %c0_0 = arith.constant 0 : index
    %c0_1 = arith.constant 0 : index
    %1 = vector.load %arg8[%c0, %c0_0, %c0_1] : memref<18x18x4xf32, #tpu.memory_space<vmem>>, vector<18x18x4xf32>
    tpu.vector_store %arg8[%c0, %c0_0, %c0_1], %0 {strides = array<i32>} : memref<18x18x4xf32, #tpu.memory_space<vmem>>, vector<18x18x4xf32>,
    %c0_2 = arith.constant 0 : index
    %c0_3 = arith.constant 0 : index
    %c0_4 = arith.constant 0 : index
    %c0_5 = arith.constant 0 : index
    %2 = vector.load %arg1[%c0_2, %c0_3, %c0_4, %c0_5] : memref<2x16x16x4xbf16, #tpu.memory_space<vmem>>, vector<1x16x16x4xbf16>
    %3 = vector.shape_cast %2 : vector<1x16x16x4xbf16> to vector<16x16x4xbf16>
    %4 = arith.extf %3 : vector<16x16x4xbf16> to vector<16x16x4xf32>
    %c1 = arith.constant 1 : index
    %c1_6 = arith.constant 1 : index
    %c0_7 = arith.constant 0 : index
    %5 = vector.load %arg8[%c1, %c1_6, %c0_7] : memref<18x18x4xf32, #tpu.memory_space<vmem>>, vector<16x16x4xf32>
    tpu.vector_store %arg8[%c1, %c1_6, %c0_7], %4 {strides = array<i32>} : memref<18x18x4xf32, #tpu.memory_space<vmem>>, vector<16x16x4xf32>,
    %c0_8 = arith.constant 0 : index
    %c0_9 = arith.constant 0 : index
    %c0_10 = arith.constant 0 : index
    %6 = vector.load %arg8[%c0_8, %c0_9, %c0_10] : memref<18x18x4xf32, #tpu.memory_space<vmem>>, vector<18x16x4xf32>
    %7 = vector.shape_cast %6 : vector<18x16x4xf32> to vector<288x4xf32>
    %8 = vector.extract_strided_slice %7 {offsets = [0, 0], sizes = [256, 4], strides = [1, 1]} : vector<288x4xf32> to vector<256x4xf32>
    %9 = vector.extract_strided_slice %7 {offsets = [16, 0], sizes = [256, 4], strides = [1, 1]} : vector<288x4xf32> to vector<256x4xf32>
    %10 = vector.extract_strided_slice %7 {offsets = [32, 0], sizes = [256, 4], strides = [1, 1]} : vector<288x4xf32> to vector<256x4xf32>
    %11 = tpu.concatenate %8, %9, %10 in 1 : vector<256x4xf32>, vector<256x4xf32>, vector<256x4xf32> -> vector<256x12xf32>
    %12 = arith.truncf %11 : vector<256x12xf32> to vector<256x12xbf16>
    %c0_11 = arith.constant 0 : index
    %c0_12 = arith.constant 0 : index
    %c0_13 = arith.constant 0 : index
    %13 = vector.load %arg2[%c0_11, %c0_12, %c0_13] : memref<3x12x4xbf16, #tpu.memory_space<vmem>>, vector<1x12x4xbf16>
    %14 = vector.shape_cast %13 : vector<1x12x4xbf16> to vector<12x4xbf16>
    %cst_14 = arith.constant dense<0.000000e+00> : vector<256x4xf32>
    %15 = tpu.matmul %12, %14, %cst_14 {dimension_numbers = #tpu.dot_dimension_numbers<[1], [0], [0], [1], [0, 0, 1, 1], [], []>} : vector<256x12xbf16>, vector<12x4xbf16>, vector<256x4xf32> -> vector<256x4xf32>
    %c0_15 = arith.constant 0 : index
    %c1_16 = arith.constant 1 : index
    %c0_17 = arith.constant 0 : index
    %16 = vector.load %arg8[%c0_15, %c1_16, %c0_17] : memref<18x18x4xf32, #tpu.memory_space<vmem>>, vector<18x16x4xf32>
    %17 = vector.shape_cast %16 : vector<18x16x4xf32> to vector<288x4xf32>
    %18 = vector.extract_strided_slice %17 {offsets = [0, 0], sizes = [256, 4], strides = [1, 1]} : vector<288x4xf32> to vector<256x4xf32>
    %19 = vector.extract_strided_slice %17 {offsets = [16, 0], sizes = [256, 4], strides = [1, 1]} : vector<288x4xf32> to vector<256x4xf32>
    %20 = vector.extract_strided_slice %17 {offsets = [32, 0], sizes = [256, 4], strides = [1, 1]} : vector<288x4xf32> to vector<256x4xf32>
    %21 = tpu.concatenate %18, %19, %20 in 1 : vector<256x4xf32>, vector<256x4xf32>, vector<256x4xf32> -> vector<256x12xf32>
    %22 = arith.truncf %21 : vector<256x12xf32> to vector<256x12xbf16>
    %c1_18 = arith.constant 1 : index
    %c0_19 = arith.constant 0 : index
    %c0_20 = arith.constant 0 : index
    %23 = vector.load %arg2[%c1_18, %c0_19, %c0_20] : memref<3x12x4xbf16, #tpu.memory_space<vmem>>, vector<1x12x4xbf16>
    %24 = vector.shape_cast %23 : vector<1x12x4xbf16> to vector<12x4xbf16>
    %cst_21 = arith.constant dense<0.000000e+00> : vector<256x4xf32>
    %25 = tpu.matmul %22, %24, %cst_21 {dimension_numbers = #tpu.dot_dimension_numbers<[1], [0], [0], [1], [0, 0, 1, 1], [], []>} : vector<256x12xbf16>, vector<12x4xbf16>, vector<256x4xf32> -> vector<256x4xf32>
    %26 = arith.addf %15, %25 : vector<256x4xf32>
    %c0_22 = arith.constant 0 : index
    %c2 = arith.constant 2 : index
    %c0_23 = arith.constant 0 : index
    %27 = vector.load %arg8[%c0_22, %c2, %c0_23] : memref<18x18x4xf32, #tpu.memory_space<vmem>>, vector<18x16x4xf32>
    %28 = vector.shape_cast %27 : vector<18x16x4xf32> to vector<288x4xf32>
    %29 = vector.extract_strided_slice %28 {offsets = [0, 0], sizes = [256, 4], strides = [1, 1]} : vector<288x4xf32> to vector<256x4xf32>
    %30 = vector.extract_strided_slice %28 {offsets = [16, 0], sizes = [256, 4], strides = [1, 1]} : vector<288x4xf32> to vector<256x4xf32>
    %31 = vector.extract_strided_slice %28 {offsets = [32, 0], sizes = [256, 4], strides = [1, 1]} : vector<288x4xf32> to vector<256x4xf32>
    %32 = tpu.concatenate %29, %30, %31 in 1 : vector<256x4xf32>, vector<256x4xf32>, vector<256x4xf32> -> vector<256x12xf32>
    %33 = arith.truncf %32 : vector<256x12xf32> to vector<256x12xbf16>
    %c2_24 = arith.constant 2 : index
    %c0_25 = arith.constant 0 : index
    %c0_26 = arith.constant 0 : index
    %34 = vector.load %arg2[%c2_24, %c0_25, %c0_26] : memref<3x12x4xbf16, #tpu.memory_space<vmem>>, vector<1x12x4xbf16>
    %35 = vector.shape_cast %34 : vector<1x12x4xbf16> to vector<12x4xbf16>
    %cst_27 = arith.constant dense<0.000000e+00> : vector<256x4xf32>
    %36 = tpu.matmul %33, %35, %cst_27 {dimension_numbers = #tpu.dot_dimension_numbers<[1], [0], [0], [1], [0, 0, 1, 1], [], []>} : vector<256x12xbf16>, vector<12x4xbf16>, vector<256x4xf32> -> vector<256x4xf32>
    %37 = arith.addf %26, %36 : vector<256x4xf32>
    %c0_28 = arith.constant 0 : index
    %c0_29 = arith.constant 0 : index
    %38 = vector.load %arg5[%c0_28, %c0_29] : memref<1x4xf32, #tpu.memory_space<vmem>>, vector<1x4xf32>
    %39 = vector.broadcast %38 : vector<1x4xf32> to vector<256x4xf32>
    %40 = arith.addf %37, %39 : vector<256x4xf32>
    %cst_30 = arith.constant 0.000000e+00 : f32
    %41 = vector.broadcast %cst_30 : f32 to vector<256x4xf32>
    %42 = arith.maximumf %40, %41 : vector<256x4xf32>
    %43 = arith.truncf %42 : vector<256x4xf32> to vector<256x4xbf16>
    %c0_31 = arith.constant 0 : index
    %c0_32 = arith.constant 0 : index
    %c0_33 = arith.constant 0 : index
    %44 = vector.load %arg9[%c0_31, %c0_32, %c0_33] : memref<2x256x4xbf16, #tpu.memory_space<vmem>>, vector<1x256x4xbf16>
    %45 = vector.shape_cast %44 : vector<1x256x4xbf16> to vector<256x4xbf16>
    %46 = vector.shape_cast %43 : vector<256x4xbf16> to vector<1x256x4xbf16>
    tpu.vector_store %arg9[%c0_31, %c0_32, %c0_33], %46 {strides = array<i32>} : memref<2x256x4xbf16, #tpu.memory_space<vmem>>, vector<1x256x4xbf16>,
    %c1_34 = arith.constant 1 : index
    %c0_35 = arith.constant 0 : index
    %c0_36 = arith.constant 0 : index
    %c0_37 = arith.constant 0 : index
    %47 = vector.load %arg1[%c1_34, %c0_35, %c0_36, %c0_37] : memref<2x16x16x4xbf16, #tpu.memory_space<vmem>>, vector<1x16x16x4xbf16>
    %48 = vector.shape_cast %47 : vector<1x16x16x4xbf16> to vector<16x16x4xbf16>
    %49 = arith.extf %48 : vector<16x16x4xbf16> to vector<16x16x4xf32>
    %c1_38 = arith.constant 1 : index
    %c1_39 = arith.constant 1 : index
    %c0_40 = arith.constant 0 : index
    %50 = vector.load %arg8[%c1_38, %c1_39, %c0_40] : memref<18x18x4xf32, #tpu.memory_space<vmem>>, vector<16x16x4xf32>
    tpu.vector_store %arg8[%c1_38, %c1_39, %c0_40], %49 {strides = array<i32>} : memref<18x18x4xf32, #tpu.memory_space<vmem>>, vector<16x16x4xf32>,
    %c0_41 = arith.constant 0 : index
    %c0_42 = arith.constant 0 : index
    %c0_43 = arith.constant 0 : index
    %51 = vector.load %arg8[%c0_41, %c0_42, %c0_43] : memref<18x18x4xf32, #tpu.memory_space<vmem>>, vector<18x16x4xf32>
    %52 = vector.shape_cast %51 : vector<18x16x4xf32> to vector<288x4xf32>
    %53 = vector.extract_strided_slice %52 {offsets = [0, 0], sizes = [256, 4], strides = [1, 1]} : vector<288x4xf32> to vector<256x4xf32>
    %54 = vector.extract_strided_slice %52 {offsets = [16, 0], sizes = [256, 4], strides = [1, 1]} : vector<288x4xf32> to vector<256x4xf32>
    %55 = vector.extract_strided_slice %52 {offsets = [32, 0], sizes = [256, 4], strides = [1, 1]} : vector<288x4xf32> to vector<256x4xf32>
    %56 = tpu.concatenate %53, %54, %55 in 1 : vector<256x4xf32>, vector<256x4xf32>, vector<256x4xf32> -> vector<256x12xf32>
    %57 = arith.truncf %56 : vector<256x12xf32> to vector<256x12xbf16>
    %c0_44 = arith.constant 0 : index
    %c0_45 = arith.constant 0 : index
    %c0_46 = arith.constant 0 : index
    %58 = vector.load %arg2[%c0_44, %c0_45, %c0_46] : memref<3x12x4xbf16, #tpu.memory_space<vmem>>, vector<1x12x4xbf16>
    %59 = vector.shape_cast %58 : vector<1x12x4xbf16> to vector<12x4xbf16>
    %cst_47 = arith.constant dense<0.000000e+00> : vector<256x4xf32>
    %60 = tpu.matmul %57, %59, %cst_47 {dimension_numbers = #tpu.dot_dimension_numbers<[1], [0], [0], [1], [0, 0, 1, 1], [], []>} : vector<256x12xbf16>, vector<12x4xbf16>, vector<256x4xf32> -> vector<256x4xf32>
    %c0_48 = arith.constant 0 : index
    %c1_49 = arith.constant 1 : index
    %c0_50 = arith.constant 0 : index
    %61 = vector.load %arg8[%c0_48, %c1_49, %c0_50] : memref<18x18x4xf32, #tpu.memory_space<vmem>>, vector<18x16x4xf32>
    %62 = vector.shape_cast %61 : vector<18x16x4xf32> to vector<288x4xf32>
    %63 = vector.extract_strided_slice %62 {offsets = [0, 0], sizes = [256, 4], strides = [1, 1]} : vector<288x4xf32> to vector<256x4xf32>
    %64 = vector.extract_strided_slice %62 {offsets = [16, 0], sizes = [256, 4], strides = [1, 1]} : vector<288x4xf32> to vector<256x4xf32>
    %65 = vector.extract_strided_slice %62 {offsets = [32, 0], sizes = [256, 4], strides = [1, 1]} : vector<288x4xf32> to vector<256x4xf32>
    %66 = tpu.concatenate %63, %64, %65 in 1 : vector<256x4xf32>, vector<256x4xf32>, vector<256x4xf32> -> vector<256x12xf32>
    %67 = arith.truncf %66 : vector<256x12xf32> to vector<256x12xbf16>
    %c1_51 = arith.constant 1 : index
    %c0_52 = arith.constant 0 : index
    %c0_53 = arith.constant 0 : index
    %68 = vector.load %arg2[%c1_51, %c0_52, %c0_53] : memref<3x12x4xbf16, #tpu.memory_space<vmem>>, vector<1x12x4xbf16>
    %69 = vector.shape_cast %68 : vector<1x12x4xbf16> to vector<12x4xbf16>
    %cst_54 = arith.constant dense<0.000000e+00> : vector<256x4xf32>
    %70 = tpu.matmul %67, %69, %cst_54 {dimension_numbers = #tpu.dot_dimension_numbers<[1], [0], [0], [1], [0, 0, 1, 1], [], []>} : vector<256x12xbf16>, vector<12x4xbf16>, vector<256x4xf32> -> vector<256x4xf32>
    %71 = arith.addf %60, %70 : vector<256x4xf32>
    %c0_55 = arith.constant 0 : index
    %c2_56 = arith.constant 2 : index
    %c0_57 = arith.constant 0 : index
    %72 = vector.load %arg8[%c0_55, %c2_56, %c0_57] : memref<18x18x4xf32, #tpu.memory_space<vmem>>, vector<18x16x4xf32>
    %73 = vector.shape_cast %72 : vector<18x16x4xf32> to vector<288x4xf32>
    %74 = vector.extract_strided_slice %73 {offsets = [0, 0], sizes = [256, 4], strides = [1, 1]} : vector<288x4xf32> to vector<256x4xf32>
    %75 = vector.extract_strided_slice %73 {offsets = [16, 0], sizes = [256, 4], strides = [1, 1]} : vector<288x4xf32> to vector<256x4xf32>
    %76 = vector.extract_strided_slice %73 {offsets = [32, 0], sizes = [256, 4], strides = [1, 1]} : vector<288x4xf32> to vector<256x4xf32>
    %77 = tpu.concatenate %74, %75, %76 in 1 : vector<256x4xf32>, vector<256x4xf32>, vector<256x4xf32> -> vector<256x12xf32>
    %78 = arith.truncf %77 : vector<256x12xf32> to vector<256x12xbf16>
    %c2_58 = arith.constant 2 : index
    %c0_59 = arith.constant 0 : index
    %c0_60 = arith.constant 0 : index
    %79 = vector.load %arg2[%c2_58, %c0_59, %c0_60] : memref<3x12x4xbf16, #tpu.memory_space<vmem>>, vector<1x12x4xbf16>
    %80 = vector.shape_cast %79 : vector<1x12x4xbf16> to vector<12x4xbf16>
    %cst_61 = arith.constant dense<0.000000e+00> : vector<256x4xf32>
    %81 = tpu.matmul %78, %80, %cst_61 {dimension_numbers = #tpu.dot_dimension_numbers<[1], [0], [0], [1], [0, 0, 1, 1], [], []>} : vector<256x12xbf16>, vector<12x4xbf16>, vector<256x4xf32> -> vector<256x4xf32>
    %82 = arith.addf %71, %81 : vector<256x4xf32>
    %c0_62 = arith.constant 0 : index
    %c0_63 = arith.constant 0 : index
    %83 = vector.load %arg5[%c0_62, %c0_63] : memref<1x4xf32, #tpu.memory_space<vmem>>, vector<1x4xf32>
    %84 = vector.broadcast %83 : vector<1x4xf32> to vector<256x4xf32>
    %85 = arith.addf %82, %84 : vector<256x4xf32>
    %cst_64 = arith.constant 0.000000e+00 : f32
    %86 = vector.broadcast %cst_64 : f32 to vector<256x4xf32>
    %87 = arith.maximumf %85, %86 : vector<256x4xf32>
    %88 = arith.truncf %87 : vector<256x4xf32> to vector<256x4xbf16>
    %c1_65 = arith.constant 1 : index
    %c0_66 = arith.constant 0 : index
    %c0_67 = arith.constant 0 : index
    %89 = vector.load %arg9[%c1_65, %c0_66, %c0_67] : memref<2x256x4xbf16, #tpu.memory_space<vmem>>, vector<1x256x4xbf16>
    %90 = vector.shape_cast %89 : vector<1x256x4xbf16> to vector<256x4xbf16>
    %91 = vector.shape_cast %88 : vector<256x4xbf16> to vector<1x256x4xbf16>
    tpu.vector_store %arg9[%c1_65, %c0_66, %c0_67], %91 {strides = array<i32>} : memref<2x256x4xbf16, #tpu.memory_space<vmem>>, vector<1x256x4xbf16>,
    %c0_68 = arith.constant 0 : index
    %c0_69 = arith.constant 0 : index
    %c0_70 = arith.constant 0 : index
    %c0_71 = arith.constant 0 : index
    %92 = vector.load %arg1[%c0_68, %c0_69, %c0_70, %c0_71] : memref<2x16x16x4xbf16, #tpu.memory_space<vmem>>, vector<2x16x16x4xbf16>
    %93 = vector.shape_cast %92 : vector<2x16x16x4xbf16> to vector<512x4xbf16>
    %c0_72 = arith.constant 0 : index
    %c0_73 = arith.constant 0 : index
    %c0_74 = arith.constant 0 : index
    %94 = vector.load %arg9[%c0_72, %c0_73, %c0_74] : memref<2x256x4xbf16, #tpu.memory_space<vmem>>, vector<2x256x4xbf16>
    %95 = vector.shape_cast %94 : vector<2x256x4xbf16> to vector<512x4xbf16>
    %c0_75 = arith.constant 0 : index
    %c0_76 = arith.constant 0 : index
    %96 = vector.load %arg3[%c0_75, %c0_76] : memref<4x8xbf16, #tpu.memory_space<vmem>>, vector<4x8xbf16>
    %cst_77 = arith.constant dense<0.000000e+00> : vector<512x8xf32>
    %97 = tpu.matmul %95, %96, %cst_77 {dimension_numbers = #tpu.dot_dimension_numbers<[1], [0], [0], [1], [0, 0, 1, 1], [], []>} : vector<512x4xbf16>, vector<4x8xbf16>, vector<512x8xf32> -> vector<512x8xf32>
    %c0_78 = arith.constant 0 : index
    %c0_79 = arith.constant 0 : index
    %98 = vector.load %arg4[%c0_78, %c0_79] : memref<4x8xbf16, #tpu.memory_space<vmem>>, vector<4x8xbf16>
    %cst_80 = arith.constant dense<0.000000e+00> : vector<512x8xf32>
    %99 = tpu.matmul %93, %98, %cst_80 {dimension_numbers = #tpu.dot_dimension_numbers<[1], [0], [0], [1], [0, 0, 1, 1], [], []>} : vector<512x4xbf16>, vector<4x8xbf16>, vector<512x8xf32> -> vector<512x8xf32>
    %100 = arith.addf %97, %99 : vector<512x8xf32>
    %c0_81 = arith.constant 0 : index
    %c0_82 = arith.constant 0 : index
    %101 = vector.load %arg6[%c0_81, %c0_82] : memref<1x8xf32, #tpu.memory_space<vmem>>, vector<1x8xf32>
    %102 = vector.broadcast %101 : vector<1x8xf32> to vector<512x8xf32>
    %103 = arith.addf %100, %102 : vector<512x8xf32>
    %cst_83 = arith.constant 0.000000e+00 : f32
    %104 = vector.broadcast %cst_83 : f32 to vector<512x8xf32>
    %105 = arith.maximumf %103, %104 : vector<512x8xf32>
    %106 = vector.shape_cast %105 : vector<512x8xf32> to vector<2x256x8xf32>
    %107 = vector.extract_strided_slice %106 {offsets = [0, 0, 0], sizes = [1, 256, 8], strides = [1, 1, 1]} : vector<2x256x8xf32> to vector<1x256x8xf32>
    %108 = vector.shape_cast %107 : vector<1x256x8xf32> to vector<256x8xf32>
    %109 = tpu.transpose %108, [1, 0] : vector<256x8xf32> -> vector<8x256xf32>
    %110 = arith.truncf %109 : vector<8x256xf32> to vector<8x256xbf16>
    %c0_84 = arith.constant 0 : index
    %c0_85 = arith.constant 0 : index
    %c0_86 = arith.constant 0 : index
    %111 = vector.load %arg7[%c0_84, %c0_85, %c0_86] : memref<2x8x256xbf16, #tpu.memory_space<vmem>>, vector<1x8x256xbf16>
    %112 = vector.shape_cast %111 : vector<1x8x256xbf16> to vector<8x256xbf16>
    %113 = vector.shape_cast %110 : vector<8x256xbf16> to vector<1x8x256xbf16>
    tpu.vector_store %arg7[%c0_84, %c0_85, %c0_86], %113 {strides = array<i32>} : memref<2x8x256xbf16, #tpu.memory_space<vmem>>, vector<1x8x256xbf16>,
    %114 = vector.extract_strided_slice %106 {offsets = [1, 0, 0], sizes = [1, 256, 8], strides = [1, 1, 1]} : vector<2x256x8xf32> to vector<1x256x8xf32>
    %115 = vector.shape_cast %114 : vector<1x256x8xf32> to vector<256x8xf32>
    %116 = tpu.transpose %115, [1, 0] : vector<256x8xf32> -> vector<8x256xf32>
    %117 = arith.truncf %116 : vector<8x256xf32> to vector<8x256xbf16>
    %c1_87 = arith.constant 1 : index
    %c0_88 = arith.constant 0 : index
    %c0_89 = arith.constant 0 : index
    %118 = vector.load %arg7[%c1_87, %c0_88, %c0_89] : memref<2x8x256xbf16, #tpu.memory_space<vmem>>, vector<1x8x256xbf16>
    %119 = vector.shape_cast %118 : vector<1x8x256xbf16> to vector<8x256xbf16>
    %120 = vector.shape_cast %117 : vector<8x256xbf16> to vector<1x8x256xbf16>
    tpu.vector_store %arg7[%c1_87, %c0_88, %c0_89], %120 {strides = array<i32>} : memref<2x8x256xbf16, #tpu.memory_space<vmem>>, vector<1x8x256xbf16>,
    return
  }
  func.func @transform_0(%arg0: i32) -> (i32, i32, i32, i32) {
    %c0_i32 = arith.constant 0 : i32
    %c0_i32_0 = arith.constant 0 : i32
    %c0_i32_1 = arith.constant 0 : i32
    %c0_i32_2 = arith.constant 0 : i32
    return %arg0, %c0_i32, %c0_i32_0, %c0_i32_1 : i32, i32, i32, i32
  }
  func.func @transform_1(%arg0: i32) -> (i32, i32, i32) {
    %c0_i32 = arith.constant 0 : i32
    %c0_i32_0 = arith.constant 0 : i32
    %c0_i32_1 = arith.constant 0 : i32
    %c0_i32_2 = arith.constant 0 : i32
    return %c0_i32, %c0_i32_0, %c0_i32_1 : i32, i32, i32
  }
  func.func @transform_2(%arg0: i32) -> (i32, i32) {
    %c0_i32 = arith.constant 0 : i32
    %c0_i32_0 = arith.constant 0 : i32
    %c0_i32_1 = arith.constant 0 : i32
    return %c0_i32, %c0_i32_0 : i32, i32
  }
  func.func @transform_3(%arg0: i32) -> (i32, i32) {
    %c0_i32 = arith.constant 0 : i32
    %c0_i32_0 = arith.constant 0 : i32
    %c0_i32_1 = arith.constant 0 : i32
    return %c0_i32, %c0_i32_0 : i32, i32
  }
  func.func @transform_4(%arg0: i32) -> (i32, i32) {
    %c0_i32 = arith.constant 0 : i32
    %c0_i32_0 = arith.constant 0 : i32
    %c0_i32_1 = arith.constant 0 : i32
    return %c0_i32, %c0_i32_0 : i32, i32
  }
  func.func @transform_5(%arg0: i32) -> (i32, i32) {
    %c0_i32 = arith.constant 0 : i32
    %c0_i32_0 = arith.constant 0 : i32
    %c0_i32_1 = arith.constant 0 : i32
    return %c0_i32, %c0_i32_0 : i32, i32
  }
  func.func @transform_6(%arg0: i32) -> (i32, i32, i32) {
    %c0_i32 = arith.constant 0 : i32
    %c0_i32_0 = arith.constant 0 : i32
    %c0_i32_1 = arith.constant 0 : i32
    return %arg0, %c0_i32, %c0_i32_0 : i32, i32, i32
  }
}

</mosaic_0001>

<llo_original>
// kernel: tpu_custom_call.1
$region0: #{tpu_custom_call.1}
  #allocation0 [shape = 'u32[]', space=smem, size = 0x4, offset = 0x4, fixed_abs, tag = 'smem constant byte address 0x4 - core index']
  #allocation1 [shape = 'u32[144,128]{1,0:T(1,128)}', space=vmem, size = 0x12000, scoped, tag = 'internal scratch']
  #allocation2 [shape = 'f32[18,18,4]{2,1,0:T(8,128)}', space=vmem, size = 0x36000, scoped, tag = 'scratch operand']
  #allocation3 [shape = 'bf16[2,256,4]{2,1,0:T(16,128)(2,1)}', space=vmem, size = 0x20000, scoped, tag = 'scratch operand']
  %s0 = inlined_call_operand.vmem [shape: bf16[4,16,16,4], index: 0, kind: input, shape index: {}]
  %s1 = inlined_call_operand.vmem [shape: bf16[3,12,4], index: 1, kind: input, shape index: {}]
  %s2 = inlined_call_operand.vmem [shape: bf16[4,8], index: 2, kind: input, shape index: {}]
  %s3 = inlined_call_operand.vmem [shape: bf16[4,8], index: 3, kind: input, shape index: {}]
  %s4 = inlined_call_operand.vmem [shape: f32[1,4], index: 4, kind: input, shape index: {}]
  %s5 = inlined_call_operand.vmem [shape: f32[1,8], index: 5, kind: input, shape index: {}]
  %s6 = inlined_call_operand.hbm [shape: bf16[4,8,256], index: 6, kind: output, shape index: {}]
  %s7 = sld [smem:[#allocation0]]
  $region57: #{tpu_custom_call.1} parent=0
    _
  %s9 = ssub.s32 1, %s7
  %s10 = scalar_select 0, %s9, %s7
  $region1: #{tpu_custom_call.1} parent=0
    #allocation4 [shape = 'u8[16384]{0}', space=vmem, size = 0x4000, scoped, tag = 'output window, operand 0']
    #allocation5 [shape = 's32[2]{0}', space=sflag, size = 0x8, scoped, tag = 'scoped memory for tpu_custom_call.1']
    %11 = vsyncpa [#allocation5], 0
    %s12 = scalar_lea.sflag [#allocation5], 1
    %13 = vsyncpa %s12, 0
    loop: start=0, step=1, limit=4
    $region2: #{tpu_custom_call.1} parent=1 // loop_pre_header
      _
    $region3: #{tpu_custom_call.1} parent=1 // loop_header
      %s15 = sphi 0, %s19
      %p16 = scmp.ge.s32.totalorder %s15, 4
      %s25 = sphi 0, %s27
      %s28 = sphi 0, %s25
      %s29 = sphi 0, %s28
      %s45 = sphi 0, %s29
      %s49 = sphi 0, %s49
      %s51 = sphi 0, %s49
      %s52 = sphi 0, %s51
      %s66 = sphi 0, %s52
      %s70 = sphi 0, %s70
      %s72 = sphi 0, %s70
      %s73 = sphi 0, %s72
      %s87 = sphi 0, %s73
      %s91 = sphi 0, %s91
      %s93 = sphi 0, %s91
      %s94 = sphi 0, %s93
      %s108 = sphi 0, %s94
      %s112 = sphi 0, %s112
      %s114 = sphi 0, %s112
      %s115 = sphi 0, %s114
      %s129 = sphi 0, %s115
      %s133 = sphi 0, %s133
      %s135 = sphi 0, %s133
      %s136 = sphi 0, %s135
      %s150 = sphi 0, %s136
      %s156 = sphi 0, %s158
      %s159 = sphi 0, %s156
      %s160 = sphi 0, %s159
      %s176 = sphi 0, %s160
    $region4: #{tpu_custom_call.1} parent=1 // loop_header_branch
      %18 = sbr.rel (%p16) target = $region8
    $region5: #{tpu_custom_call.1} parent=1 // loop_body
      %s20 = ssub.s32 %s15, 1
      %s21 = ssub.s32 %s15, 2
      %s22 = sadd.s32 %s15, 1
      %s23 = ssub.s32 %s15, %s22
      %p24 = scmp.eq.s32.totalorder %s23, 0
      %s26 = sadd.s32 %s25, 1
      %s27 = scalar_select %p24, %s25, %s26
      %p30 = pneg %p24
      %p31 = scmp.eq.s32.totalorder %s15, 1
      %p32 = por %p30, %p31
      %p33 = scmp.ne.s32.totalorder %s25, %s28
      %p34 = scmp.eq.s32.totalorder %s15, 0
      %p35 = por %p33, %p34
      %p36 = scmp.ne.s32.totalorder %s25, %s28
      %p37 = scmp.eq.s32.totalorder %s20, 1
      %p38 = por %p36, %p37
      %p39 = scmp.ne.s32.totalorder %s28, %s29
      %p40 = scmp.eq.s32.totalorder %s20, 0
      %p41 = por %p39, %p40
      %p42 = scmp.ne.s32.totalorder %s28, %s29
      %p43 = scmp.eq.s32.totalorder %s21, 1
      %p44 = por %p42, %p43
      %p46 = scmp.ne.s32.totalorder %s29, %s45
      %p47 = scmp.eq.s32.totalorder %s21, 0
      %p48 = por %p46, %p47
      %s50 = sadd.s32 %s49, 1
      %p53 = scmp.eq.s32.totalorder %s15, 1
      %p54 = scmp.ne.s32.totalorder %s49, %s51
      %p55 = scmp.eq.s32.totalorder %s15, 0
      %p56 = por %p54, %p55
      %p57 = scmp.ne.s32.totalorder %s49, %s51
      %p58 = scmp.eq.s32.totalorder %s20, 1
      %p59 = por %p57, %p58
      %p60 = scmp.ne.s32.totalorder %s51, %s52
      %p61 = scmp.eq.s32.totalorder %s20, 0
      %p62 = por %p60, %p61
      %p63 = scmp.ne.s32.totalorder %s51, %s52
      %p64 = scmp.eq.s32.totalorder %s21, 1
      %p65 = por %p63, %p64
      %p67 = scmp.ne.s32.totalorder %s52, %s66
      %p68 = scmp.eq.s32.totalorder %s21, 0
      %p69 = por %p67, %p68
      %s71 = sadd.s32 %s70, 1
      %p74 = scmp.eq.s32.totalorder %s15, 1
      %p75 = scmp.ne.s32.totalorder %s70, %s72
      %p76 = scmp.eq.s32.totalorder %s15, 0
      %p77 = por %p75, %p76
      %p78 = scmp.ne.s32.totalorder %s70, %s72
      %p79 = scmp.eq.s32.totalorder %s20, 1
      %p80 = por %p78, %p79
      %p81 = scmp.ne.s32.totalorder %s72, %s73
      %p82 = scmp.eq.s32.totalorder %s20, 0
      %p83 = por %p81, %p82
      %p84 = scmp.ne.s32.totalorder %s72, %s73
      %p85 = scmp.eq.s32.totalorder %s21, 1
      %p86 = por %p84, %p85
      %p88 = scmp.ne.s32.totalorder %s73, %s87
      %p89 = scmp.eq.s32.totalorder %s21, 0
      %p90 = por %p88, %p89
      %s92 = sadd.s32 %s91, 1
      %p95 = scmp.eq.s32.totalorder %s15, 1
      %p96 = scmp.ne.s32.totalorder %s91, %s93
      %p97 = scmp.eq.s32.totalorder %s15, 0
      %p98 = por %p96, %p97
      %p99 = scmp.ne.s32.totalorder %s91, %s93
      %p100 = scmp.eq.s32.totalorder %s20, 1
      %p101 = por %p99, %p100
      %p102 = scmp.ne.s32.totalorder %s93, %s94
      %p103 = scmp.eq.s32.totalorder %s20, 0
      %p104 = por %p102, %p103
      %p105 = scmp.ne.s32.totalorder %s93, %s94
      %p106 = scmp.eq.s32.totalorder %s21, 1
      %p107 = por %p105, %p106
      %p109 = scmp.ne.s32.totalorder %s94, %s108
      %p110 = scmp.eq.s32.totalorder %s21, 0
      %p111 = por %p109, %p110
      %s113 = sadd.s32 %s112, 1
      %p116 = scmp.eq.s32.totalorder %s15, 1
      %p117 = scmp.ne.s32.totalorder %s112, %s114
      %p118 = scmp.eq.s32.totalorder %s15, 0
      %p119 = por %p117, %p118
      %p120 = scmp.ne.s32.totalorder %s112, %s114
      %p121 = scmp.eq.s32.totalorder %s20, 1
      %p122 = por %p120, %p121
      %p123 = scmp.ne.s32.totalorder %s114, %s115
      %p124 = scmp.eq.s32.totalorder %s20, 0
      %p125 = por %p123, %p124
      %p126 = scmp.ne.s32.totalorder %s114, %s115
      %p127 = scmp.eq.s32.totalorder %s21, 1
      %p128 = por %p126, %p127
      %p130 = scmp.ne.s32.totalorder %s115, %s129
      %p131 = scmp.eq.s32.totalorder %s21, 0
      %p132 = por %p130, %p131
      %s134 = sadd.s32 %s133, 1
      %p137 = scmp.eq.s32.totalorder %s15, 1
      %p138 = scmp.ne.s32.totalorder %s133, %s135
      %p139 = scmp.eq.s32.totalorder %s15, 0
      %p140 = por %p138, %p139
      %p141 = scmp.ne.s32.totalorder %s133, %s135
      %p142 = scmp.eq.s32.totalorder %s20, 1
      %p143 = por %p141, %p142
      %p144 = scmp.ne.s32.totalorder %s135, %s136
      %p145 = scmp.eq.s32.totalorder %s20, 0
      %p146 = por %p144, %p145
      %p147 = scmp.ne.s32.totalorder %s135, %s136
      %p148 = scmp.eq.s32.totalorder %s21, 1
      %p149 = por %p147, %p148
      %p151 = scmp.ne.s32.totalorder %s136, %s150
      %p152 = scmp.eq.s32.totalorder %s21, 0
      %p153 = por %p151, %p152
      %s154 = ssub.s32 %s15, %s22
      %p155 = scmp.eq.s32.totalorder %s154, 0
      %s157 = sadd.s32 %s156, 1
      %s158 = scalar_select %p155, %s156, %s157
      %p161 = pneg %p155
      %p162 = scmp.eq.s32.totalorder %s15, 1
      %p163 = por %p161, %p162
      %p164 = scmp.ne.s32.totalorder %s156, %s159
      %p165 = scmp.eq.s32.totalorder %s15, 0
      %p166 = por %p164, %p165
      %p167 = scmp.ne.s32.totalorder %s156, %s159
      %p168 = scmp.eq.s32.totalorder %s20, 1
      %p169 = por %p167, %p168
      %p170 = scmp.ne.s32.totalorder %s159, %s160
      %p171 = scmp.eq.s32.totalorder %s20, 0
      %p172 = por %p170, %p171
      %p173 = scmp.ne.s32.totalorder %s159, %s160
      %p174 = scmp.eq.s32.totalorder %s21, 1
      %p175 = por %p173, %p174
      %p177 = scmp.ne.s32.totalorder %s160, %s176
      %p178 = scmp.eq.s32.totalorder %s21, 0
      %p179 = por %p177, %p178
      %p180 = scmp.le.s32.totalorder 1, %s15
      %p181 = scmp.lt.s32.totalorder %s15, 3
      %p182 = pnand %p180, %p181
      %p183 = pneg %p182
      // Predicated region
      $region9: #{tpu_custom_call.1} parent=5 // pred_check
        _
      $region10: #{tpu_custom_call.1} parent=5 // pred_check_branch
        %185 = sbr.rel (%p182) target = $region12
      $region11: #{tpu_custom_call.1} parent=5 // pred_region
        %s186 = ssub.s32 %s15, 1
        // Predicated region
        $region13: #{tpu_custom_call.1} parent=11 // pred_check
          %p187 = pneg %p62
        $region14: #{tpu_custom_call.1} parent=11 // pred_check_branch
          %189 = sbr.rel (%p187) target = $region16
        $region15: #{tpu_custom_call.1} parent=11 // pred_region
          _
        $region16: #{tpu_custom_call.1} parent=11 // pred_fallthru
          _
        // Predicated region
        $region17: #{tpu_custom_call.1} parent=11 // pred_check
          %p190 = pneg %p83
        $region18: #{tpu_custom_call.1} parent=11 // pred_check_branch
          %192 = sbr.rel (%p190) target = $region20
        $region19: #{tpu_custom_call.1} parent=11 // pred_region
          _
        $region20: #{tpu_custom_call.1} parent=11 // pred_fallthru
          _
        // Predicated region
        $region21: #{tpu_custom_call.1} parent=11 // pred_check
          %p193 = pneg %p104
        $region22: #{tpu_custom_call.1} parent=11 // pred_check_branch
          %195 = sbr.rel (%p193) target = $region24
        $region23: #{tpu_custom_call.1} parent=11 // pred_region
          _
        $region24: #{tpu_custom_call.1} parent=11 // pred_fallthru
          _
        // Predicated region
        $region25: #{tpu_custom_call.1} parent=11 // pred_check
          %p196 = pneg %p125
        $region26: #{tpu_custom_call.1} parent=11 // pred_check_branch
          %198 = sbr.rel (%p196) target = $region28
        $region27: #{tpu_custom_call.1} parent=11 // pred_region
          _
        $region28: #{tpu_custom_call.1} parent=11 // pred_fallthru
          _
        // Predicated region
        $region29: #{tpu_custom_call.1} parent=11 // pred_check
          %p199 = pneg %p146
        $region30: #{tpu_custom_call.1} parent=11 // pred_check_branch
          %201 = sbr.rel (%p199) target = $region32
        $region31: #{tpu_custom_call.1} parent=11 // pred_region
          _
        $region32: #{tpu_custom_call.1} parent=11 // pred_fallthru
          _
      $region12: #{tpu_custom_call.1} parent=5 // pred_fallthru
        _
      %p202 = scmp.lt.s32.totalorder %s15, 2
      // Predicated region
      $region33: #{tpu_custom_call.1} parent=5 // pred_check
        %p203 = pneg %p202
      $region34: #{tpu_custom_call.1} parent=5 // pred_check_branch
        %205 = sbr.rel (%p203) target = $region36
      $region35: #{tpu_custom_call.1} parent=5 // pred_region
        // Predicated region
        $region37: #{tpu_custom_call.1} parent=35 // pred_check
          %p206 = pneg %p35
        $region38: #{tpu_custom_call.1} parent=35 // pred_check_branch
          %208 = sbr.rel (%p206) target = $region40
        $region39: #{tpu_custom_call.1} parent=35 // pred_region
          %s209 = smul.u32 2, %s15
          %p210 = scmp.lt.s32.totalorder %s209, 3
          %s211 = scalar_select %p210, %s209, 3
          %s212 = smul.addr %s211, 32
          %s213 = smul.addr %s212, 4
          %s214 = scalar_lea.vmem %s0, %s213
          %s215 = smul.u32 2, %s15
        $region40: #{tpu_custom_call.1} parent=35 // pred_fallthru
          _
      $region36: #{tpu_custom_call.1} parent=5 // pred_fallthru
        _
      %p216 = scmp.le.s32.totalorder 1, %s15
      %p217 = scmp.lt.s32.totalorder %s15, 3
      %p218 = pnand %p216, %p217
      %p219 = pneg %p218
      // Predicated region
      $region41: #{tpu_custom_call.1} parent=5 // pred_check
        _
      $region42: #{tpu_custom_call.1} parent=5 // pred_check_branch
        %221 = sbr.rel (%p218) target = $region44
      $region43: #{tpu_custom_call.1} parent=5 // pred_region
        %s222 = ssub.s32 %s15, 1
        %s223 = smul.u32 2, %s20
        %p224 = scmp.lt.s32.totalorder %s223, 3
        %s225 = scalar_select %p224, %s223, 3
        %s226 = smul.addr %s225, 32
        %s227 = smul.addr %s226, 4
        %s228 = scalar_lea.vmem %s0, %s227
        %p229 = pneg %p41
        %p230 = pneg %p38
        %p231 = pneg %p62
        %p232 = pneg %p59
        %p233 = pneg %p83
        %p234 = pneg %p80
        %p235 = pneg %p104
        %p236 = pneg %p101
        %p237 = pneg %p125
        %p238 = pneg %p122
        %p239 = pneg %p146
        %p240 = pneg %p143
        %p241 = pneg %p172
        %p242 = pneg %p169
        %s243 = sand.u32 %s159, 1
        %s244 = scalar_lea.sflag [#allocation5], %s243
        %s245 = sand.u32 %s159, 1
        %s246 = smul.addr %s245, 16
        %s247 = scalar_lea.vmem [#allocation4], %s246
        %s248 = smul.u32 2, %s20
        %p249 = scmp.lt.s32.totalorder %s248, 3
        %s250 = scalar_select %p249, %s248, 3
        %s251 = smul.addr %s250, 32
        %s252 = smul.addr %s251, 4
        %s253 = scalar_lea.vmem %s0, %s252
        %s254 = smul.u32 2, %s20
        %s255 = smul.u32 2, %s20
        %vm257 = vcmask 31744
        %258 = vst.msk [vmem:[#allocation2] sm:$0xff] %vm257, 0.0
        %259 = vst.msk [vmem:[#allocation2 + $0x8] sm:$0xff] %vm257, 0.0
        %vm260 = vcmask 25600
        %261 = vst.msk [vmem:[#allocation2 + $0x10] sm:$0x3] %vm260, 0.0
        %262 = vst.msk [vmem:[#allocation2 + $0x18] sm:$0xff] %vm257, 0.0
        %263 = vst.msk [vmem:[#allocation2 + $0x20] sm:$0xff] %vm257, 0.0
        %264 = vst.msk [vmem:[#allocation2 + $0x28] sm:$0x3] %vm260, 0.0
        %265 = vst.msk [vmem:[#allocation2 + $0x30] sm:$0xff] %vm257, 0.0
        %266 = vst.msk [vmem:[#allocation2 + $0x38] sm:$0xff] %vm257, 0.0
        %267 = vst.msk [vmem:[#allocation2 + $0x40] sm:$0x3] %vm260, 0.0
        %268 = vst.msk [vmem:[#allocation2 + $0x48] sm:$0xff] %vm257, 0.0
        %269 = vst.msk [vmem:[#allocation2 + $0x50] sm:$0xff] %vm257, 0.0
        %270 = vst.msk [vmem:[#allocation2 + $0x58] sm:$0x3] %vm260, 0.0
        %271 = vst.msk [vmem:[#allocation2 + $0x60] sm:$0xff] %vm257, 0.0
        %272 = vst.msk [vmem:[#allocation2 + $0x68] sm:$0xff] %vm257, 0.0
        %273 = vst.msk [vmem:[#allocation2 + $0x70] sm:$0x3] %vm260, 0.0
        %274 = vst.msk [vmem:[#allocation2 + $0x78] sm:$0xff] %vm257, 0.0
        %275 = vst.msk [vmem:[#allocation2 + $0x80] sm:$0xff] %vm257, 0.0
        %276 = vst.msk [vmem:[#allocation2 + $0x88] sm:$0x3] %vm260, 0.0
        %277 = vst.msk [vmem:[#allocation2 + $0x90] sm:$0xff] %vm257, 0.0
        %278 = vst.msk [vmem:[#allocation2 + $0x98] sm:$0xff] %vm257, 0.0
        %279 = vst.msk [vmem:[#allocation2 + $0xa0] sm:$0x3] %vm260, 0.0
        %280 = vst.msk [vmem:[#allocation2 + $0xa8] sm:$0xff] %vm257, 0.0
        %281 = vst.msk [vmem:[#allocation2 + $0xb0] sm:$0xff] %vm257, 0.0
        %282 = vst.msk [vmem:[#allocation2 + $0xb8] sm:$0x3] %vm260, 0.0
        %283 = vst.msk [vmem:[#allocation2 + $0xc0] sm:$0xff] %vm257, 0.0
        %284 = vst.msk [vmem:[#allocation2 + $0xc8] sm:$0xff] %vm257, 0.0
        %285 = vst.msk [vmem:[#allocation2 + $0xd0] sm:$0x3] %vm260, 0.0
        %286 = vst.msk [vmem:[#allocation2 + $0xd8] sm:$0xff] %vm257, 0.0
        %287 = vst.msk [vmem:[#allocation2 + $0xe0] sm:$0xff] %vm257, 0.0
        %288 = vst.msk [vmem:[#allocation2 + $0xe8] sm:$0x3] %vm260, 0.0
        %289 = vst.msk [vmem:[#allocation2 + $0xf0] sm:$0xff] %vm257, 0.0
        %290 = vst.msk [vmem:[#allocation2 + $0xf8] sm:$0xff] %vm257, 0.0
        %291 = vst.msk [vmem:[#allocation2 + $0x100] sm:$0x3] %vm260, 0.0
        %292 = vst.msk [vmem:[#allocation2 + $0x108] sm:$0xff] %vm257, 0.0
        %293 = vst.msk [vmem:[#allocation2 + $0x110] sm:$0xff] %vm257, 0.0
        %294 = vst.msk [vmem:[#allocation2 + $0x118] sm:$0x3] %vm260, 0.0
        %295 = vst.msk [vmem:[#allocation2 + $0x120] sm:$0xff] %vm257, 0.0
        %296 = vst.msk [vmem:[#allocation2 + $0x128] sm:$0xff] %vm257, 0.0
        %297 = vst.msk [vmem:[#allocation2 + $0x130] sm:$0x3] %vm260, 0.0
        %298 = vst.msk [vmem:[#allocation2 + $0x138] sm:$0xff] %vm257, 0.0
        %299 = vst.msk [vmem:[#allocation2 + $0x140] sm:$0xff] %vm257, 0.0
        %300 = vst.msk [vmem:[#allocation2 + $0x148] sm:$0x3] %vm260, 0.0
        %301 = vst.msk [vmem:[#allocation2 + $0x150] sm:$0xff] %vm257, 0.0
        %302 = vst.msk [vmem:[#allocation2 + $0x158] sm:$0xff] %vm257, 0.0
        %303 = vst.msk [vmem:[#allocation2 + $0x160] sm:$0x3] %vm260, 0.0
        %304 = vst.msk [vmem:[#allocation2 + $0x168] sm:$0xff] %vm257, 0.0
        %305 = vst.msk [vmem:[#allocation2 + $0x170] sm:$0xff] %vm257, 0.0
        %306 = vst.msk [vmem:[#allocation2 + $0x178] sm:$0x3] %vm260, 0.0
        %307 = vst.msk [vmem:[#allocation2 + $0x180] sm:$0xff] %vm257, 0.0
        %308 = vst.msk [vmem:[#allocation2 + $0x188] sm:$0xff] %vm257, 0.0
        %309 = vst.msk [vmem:[#allocation2 + $0x190] sm:$0x3] %vm260, 0.0
        %310 = vst.msk [vmem:[#allocation2 + $0x198] sm:$0xff] %vm257, 0.0
        %311 = vst.msk [vmem:[#allocation2 + $0x1a0] sm:$0xff] %vm257, 0.0
        %312 = vst.msk [vmem:[#allocation2 + $0x1a8] sm:$0x3] %vm260, 0.0
        %v313 = vld [vmem:[%s253] sm:$0xf]
        %v314 = vld [vmem:[%s253 + $0x4] sm:$0xf]
        %v315 = vld [vmem:[%s253 + $0x8] sm:$0xf]
        %v316 = vld [vmem:[%s253 + $0xc] sm:$0xf]
        %v317 = vld [vmem:[%s253 + $0x10] sm:$0xf]
        %v318 = vld [vmem:[%s253 + $0x14] sm:$0xf]
        %v319 = vld [vmem:[%s253 + $0x18] sm:$0xf]
        %v320 = vld [vmem:[%s253 + $0x1c] sm:$0xf]
        %v321 = vld [vmem:[%s253 + $0x20] sm:$0xf]
        %v322 = vld [vmem:[%s253 + $0x24] sm:$0xf]
        %v323 = vld [vmem:[%s253 + $0x28] sm:$0xf]
        %v324 = vld [vmem:[%s253 + $0x2c] sm:$0xf]
        %v325 = vld [vmem:[%s253 + $0x30] sm:$0xf]
        %v326 = vld [vmem:[%s253 + $0x34] sm:$0xf]
        %v327 = vld [vmem:[%s253 + $0x38] sm:$0xf]
        %v328 = vld [vmem:[%s253 + $0x3c] sm:$0xf]
        %v329 = vld [vmem:[%s253 + $0x40] sm:$0xf]
        %v330 = vld [vmem:[%s253 + $0x44] sm:$0xf]
        %v331 = vld [vmem:[%s253 + $0x48] sm:$0xf]
        %v332 = vld [vmem:[%s253 + $0x4c] sm:$0xf]
        %v333 = vld [vmem:[%s253 + $0x50] sm:$0xf]
        %v334 = vld [vmem:[%s253 + $0x54] sm:$0xf]
        %v335 = vld [vmem:[%s253 + $0x58] sm:$0xf]
        %v336 = vld [vmem:[%s253 + $0x5c] sm:$0xf]
        %v337 = vld [vmem:[%s253 + $0x60] sm:$0xf]
        %v338 = vld [vmem:[%s253 + $0x64] sm:$0xf]
        %v339 = vld [vmem:[%s253 + $0x68] sm:$0xf]
        %v340 = vld [vmem:[%s253 + $0x6c] sm:$0xf]
        %v341 = vld [vmem:[%s253 + $0x70] sm:$0xf]
        %v342 = vld [vmem:[%s253 + $0x74] sm:$0xf]
        %v343 = vld [vmem:[%s253 + $0x78] sm:$0xf]
        %v344 = vld [vmem:[%s253 + $0x7c] sm:$0xf]
        %v345 = vunpack.c.l.bf16 %v313
        %v346 = vunpack.c.l.bf16 %v314
        %v347 = vunpack.c.l.bf16 %v315
        %v348 = vunpack.c.l.bf16 %v316
        %v349 = vunpack.c.l.bf16 %v317
        %v350 = vunpack.c.l.bf16 %v318
        %v351 = vunpack.c.l.bf16 %v319
        %v352 = vunpack.c.l.bf16 %v320
        %v353 = vunpack.c.l.bf16 %v321
        %v354 = vunpack.c.l.bf16 %v322
        %v355 = vunpack.c.l.bf16 %v323
        %v356 = vunpack.c.l.bf16 %v324
        %v357 = vunpack.c.l.bf16 %v325
        %v358 = vunpack.c.l.bf16 %v326
        %v359 = vunpack.c.l.bf16 %v327
        %v360 = vunpack.c.l.bf16 %v328
        %v361 = vunpack.c.l.bf16 %v329
        %v362 = vunpack.c.l.bf16 %v330
        %v363 = vunpack.c.l.bf16 %v331
        %v364 = vunpack.c.l.bf16 %v332
        %v365 = vunpack.c.l.bf16 %v333
        %v366 = vunpack.c.l.bf16 %v334
        %v367 = vunpack.c.l.bf16 %v335
        %v368 = vunpack.c.l.bf16 %v336
        %v369 = vunpack.c.l.bf16 %v337
        %v370 = vunpack.c.l.bf16 %v338
        %v371 = vunpack.c.l.bf16 %v339
        %v372 = vunpack.c.l.bf16 %v340
        %v373 = vunpack.c.l.bf16 %v341
        %v374 = vunpack.c.l.bf16 %v342
        %v375 = vunpack.c.l.bf16 %v343
        %v376 = vunpack.c.l.bf16 %v344
        %s377 = scalar_lea.vmem [#allocation2], 24
        %378 = vst.msk [vmem:[%s377 + $0x1] sm:$0xff] %vm257, %v345
        %379 = vst.msk [vmem:[%s377 + $0x9] sm:$0xff] %vm257, %v346
        %380 = vst.msk [vmem:[%s377 + $0x19] sm:$0xff] %vm257, %v347
        %381 = vst.msk [vmem:[%s377 + $0x21] sm:$0xff] %vm257, %v348
        %382 = vst.msk [vmem:[%s377 + $0x31] sm:$0xff] %vm257, %v349
        %383 = vst.msk [vmem:[%s377 + $0x39] sm:$0xff] %vm257, %v350
        %384 = vst.msk [vmem:[%s377 + $0x49] sm:$0xff] %vm257, %v351
        %385 = vst.msk [vmem:[%s377 + $0x51] sm:$0xff] %vm257, %v352
        %386 = vst.msk [vmem:[%s377 + $0x61] sm:$0xff] %vm257, %v353
        %387 = vst.msk [vmem:[%s377 + $0x69] sm:$0xff] %vm257, %v354
        %388 = vst.msk [vmem:[%s377 + $0x79] sm:$0xff] %vm257, %v355
        %389 = vst.msk [vmem:[%s377 + $0x81] sm:$0xff] %vm257, %v356
        %390 = vst.msk [vmem:[%s377 + $0x91] sm:$0xff] %vm257, %v357
        %391 = vst.msk [vmem:[%s377 + $0x99] sm:$0xff] %vm257, %v358
        %392 = vst.msk [vmem:[%s377 + $0xa9] sm:$0xff] %vm257, %v359
        %393 = vst.msk [vmem:[%s377 + $0xb1] sm:$0xff] %vm257, %v360
        %394 = vst.msk [vmem:[%s377 + $0xc1] sm:$0xff] %vm257, %v361
        %395 = vst.msk [vmem:[%s377 + $0xc9] sm:$0xff] %vm257, %v362
        %396 = vst.msk [vmem:[%s377 + $0xd9] sm:$0xff] %vm257, %v363
        %397 = vst.msk [vmem:[%s377 + $0xe1] sm:$0xff] %vm257, %v364
        %398 = vst.msk [vmem:[%s377 + $0xf1] sm:$0xff] %vm257, %v365
        %399 = vst.msk [vmem:[%s377 + $0xf9] sm:$0xff] %vm257, %v366
        %400 = vst.msk [vmem:[%s377 + $0x109] sm:$0xff] %vm257, %v367
        %401 = vst.msk [vmem:[%s377 + $0x111] sm:$0xff] %vm257, %v368
        %402 = vst.msk [vmem:[%s377 + $0x121] sm:$0xff] %vm257, %v369
        %403 = vst.msk [vmem:[%s377 + $0x129] sm:$0xff] %vm257, %v370
        %404 = vst.msk [vmem:[%s377 + $0x139] sm:$0xff] %vm257, %v371
        %405 = vst.msk [vmem:[%s377 + $0x141] sm:$0xff] %vm257, %v372
        %406 = vst.msk [vmem:[%s377 + $0x151] sm:$0xff] %vm257, %v373
        %407 = vst.msk [vmem:[%s377 + $0x159] sm:$0xff] %vm257, %v374
        %408 = vst.msk [vmem:[%s377 + $0x169] sm:$0xff] %vm257, %v375
        %409 = vst.msk [vmem:[%s377 + $0x171] sm:$0xff] %vm257, %v376
        %v410 = vld [vmem:[#allocation2] sm:$0xff]
        %v411 = vld [vmem:[#allocation2 + $0x8] sm:$0xff]
        %v412 = vld [vmem:[#allocation2 + $0x18] sm:$0xff]
        %v413 = vld [vmem:[#allocation2 + $0x20] sm:$0xff]
        %v414 = vld [vmem:[#allocation2 + $0x30] sm:$0xff]
        %v415 = vld [vmem:[#allocation2 + $0x38] sm:$0xff]
        %v416 = vld [vmem:[#allocation2 + $0x48] sm:$0xff]
        %v417 = vld [vmem:[#allocation2 + $0x50] sm:$0xff]
        %v418 = vld [vmem:[#allocation2 + $0x60] sm:$0xff]
        %v419 = vld [vmem:[#allocation2 + $0x68] sm:$0xff]
        %v420 = vld [vmem:[#allocation2 + $0x78] sm:$0xff]
        %v421 = vld [vmem:[#allocation2 + $0x80] sm:$0xff]
        %v422 = vld [vmem:[#allocation2 + $0x90] sm:$0xff]
        %v423 = vld [vmem:[#allocation2 + $0x98] sm:$0xff]
        %v424 = vld [vmem:[#allocation2 + $0xa8] sm:$0xff]
        %v425 = vld [vmem:[#allocation2 + $0xb0] sm:$0xff]
        %v426 = vld [vmem:[#allocation2 + $0xc0] sm:$0xff]
        %v427 = vld [vmem:[#allocation2 + $0xc8] sm:$0xff]
        %v428 = vld [vmem:[#allocation2 + $0xd8] sm:$0xff]
        %v429 = vld [vmem:[#allocation2 + $0xe0] sm:$0xff]
        %v430 = vld [vmem:[#allocation2 + $0xf0] sm:$0xff]
        %v431 = vld [vmem:[#allocation2 + $0xf8] sm:$0xff]
        %v432 = vld [vmem:[#allocation2 + $0x108] sm:$0xff]
        %v433 = vld [vmem:[#allocation2 + $0x110] sm:$0xff]
        %v434 = vld [vmem:[#allocation2 + $0x120] sm:$0xff]
        %v435 = vld [vmem:[#allocation2 + $0x128] sm:$0xff]
        %v436 = vld [vmem:[#allocation2 + $0x138] sm:$0xff]
        %v437 = vld [vmem:[#allocation2 + $0x140] sm:$0xff]
        %v438 = vld [vmem:[#allocation2 + $0x150] sm:$0xff]
        %v439 = vld [vmem:[#allocation2 + $0x158] sm:$0xff]
        %v440 = vld [vmem:[#allocation2 + $0x168] sm:$0xff]
        %v441 = vld [vmem:[#allocation2 + $0x170] sm:$0xff]
        %v442 = vld [vmem:[#allocation2 + $0x180] sm:$0xff]
        %v443 = vld [vmem:[#allocation2 + $0x188] sm:$0xff]
        %v444 = vld [vmem:[#allocation2 + $0x198] sm:$0xff]
        %v445 = vld [vmem:[#allocation2 + $0x1a0] sm:$0xff]
        %478 = vrot.lane.b32.xlu0 %v412, 4
        %v479 = vpop.permute.xlu0 %478
        %480 = vrot.lane.b32.xlu0 %v413, 4
        %v481 = vpop.permute.xlu0 %480
        %482 = vrot.lane.b32.xlu0 %v414, 4
        %v483 = vpop.permute.xlu0 %482
        %484 = vrot.lane.b32.xlu0 %v415, 4
        %v485 = vpop.permute.xlu0 %484
        %486 = vrot.lane.b32.xlu0 %v416, 4
        %v487 = vpop.permute.xlu0 %486
        %488 = vrot.lane.b32.xlu0 %v417, 4
        %v489 = vpop.permute.xlu0 %488
        %490 = vrot.lane.b32.xlu0 %v418, 4
        %v491 = vpop.permute.xlu0 %490
        %492 = vrot.lane.b32.xlu0 %v419, 4
        %v493 = vpop.permute.xlu0 %492
        %494 = vrot.lane.b32.xlu0 %v420, 4
        %v495 = vpop.permute.xlu0 %494
        %496 = vrot.lane.b32.xlu0 %v421, 4
        %v497 = vpop.permute.xlu0 %496
        %498 = vrot.lane.b32.xlu0 %v422, 4
        %v499 = vpop.permute.xlu0 %498
        %500 = vrot.lane.b32.xlu0 %v423, 4
        %v501 = vpop.permute.xlu0 %500
        %502 = vrot.lane.b32.xlu0 %v424, 4
        %v503 = vpop.permute.xlu0 %502
        %504 = vrot.lane.b32.xlu0 %v425, 4
        %v505 = vpop.permute.xlu0 %504
        %506 = vrot.lane.b32.xlu0 %v426, 4
        %v507 = vpop.permute.xlu0 %506
        %508 = vrot.lane.b32.xlu0 %v427, 4
        %v509 = vpop.permute.xlu0 %508
        %510 = vrot.lane.b32.xlu0 %v428, 4
        %v511 = vpop.permute.xlu0 %510
        %512 = vrot.lane.b32.xlu0 %v429, 4
        %v513 = vpop.permute.xlu0 %512
        %514 = vrot.lane.b32.xlu0 %v430, 4
        %v515 = vpop.permute.xlu0 %514
        %516 = vrot.lane.b32.xlu0 %v431, 4
        %v517 = vpop.permute.xlu0 %516
        %518 = vrot.lane.b32.xlu0 %v432, 4
        %v519 = vpop.permute.xlu0 %518
        %520 = vrot.lane.b32.xlu0 %v433, 4
        %v521 = vpop.permute.xlu0 %520
        %522 = vrot.lane.b32.xlu0 %v434, 4
        %v523 = vpop.permute.xlu0 %522
        %524 = vrot.lane.b32.xlu0 %v435, 4
        %v525 = vpop.permute.xlu0 %524
        %526 = vrot.lane.b32.xlu0 %v436, 4
        %v527 = vpop.permute.xlu0 %526
        %528 = vrot.lane.b32.xlu0 %v437, 4
        %v529 = vpop.permute.xlu0 %528
        %530 = vrot.lane.b32.xlu0 %v438, 4
        %v531 = vpop.permute.xlu0 %530
        %532 = vrot.lane.b32.xlu0 %v439, 4
        %v533 = vpop.permute.xlu0 %532
        %534 = vrot.lane.b32.xlu0 %v440, 4
        %v535 = vpop.permute.xlu0 %534
        %536 = vrot.lane.b32.xlu0 %v441, 4
        %v537 = vpop.permute.xlu0 %536
        %538 = vrot.lane.b32.xlu0 %v442, 4
        %v539 = vpop.permute.xlu0 %538
        %540 = vrot.lane.b32.xlu0 %v443, 4
        %v541 = vpop.permute.xlu0 %540
        %576 = vrot.lane.b32.xlu0 %v414, 8
        %v577 = vpop.permute.xlu0 %576
        %578 = vrot.lane.b32.xlu0 %v415, 8
        %v579 = vpop.permute.xlu0 %578
        %580 = vrot.lane.b32.xlu0 %v416, 8
        %v581 = vpop.permute.xlu0 %580
        %582 = vrot.lane.b32.xlu0 %v417, 8
        %v583 = vpop.permute.xlu0 %582
        %584 = vrot.lane.b32.xlu0 %v418, 8
        %v585 = vpop.permute.xlu0 %584
        %586 = vrot.lane.b32.xlu0 %v419, 8
        %v587 = vpop.permute.xlu0 %586
        %588 = vrot.lane.b32.xlu0 %v420, 8
        %v589 = vpop.permute.xlu0 %588
        %590 = vrot.lane.b32.xlu0 %v421, 8
        %v591 = vpop.permute.xlu0 %590
        %592 = vrot.lane.b32.xlu0 %v422, 8
        %v593 = vpop.permute.xlu0 %592
        %594 = vrot.lane.b32.xlu0 %v423, 8
        %v595 = vpop.permute.xlu0 %594
        %596 = vrot.lane.b32.xlu0 %v424, 8
        %v597 = vpop.permute.xlu0 %596
        %598 = vrot.lane.b32.xlu0 %v425, 8
        %v599 = vpop.permute.xlu0 %598
        %600 = vrot.lane.b32.xlu0 %v426, 8
        %v601 = vpop.permute.xlu0 %600
        %602 = vrot.lane.b32.xlu0 %v427, 8
        %v603 = vpop.permute.xlu0 %602
        %604 = vrot.lane.b32.xlu0 %v428, 8
        %v605 = vpop.permute.xlu0 %604
        %606 = vrot.lane.b32.xlu0 %v429, 8
        %v607 = vpop.permute.xlu0 %606
        %608 = vrot.lane.b32.xlu0 %v430, 8
        %v609 = vpop.permute.xlu0 %608
        %610 = vrot.lane.b32.xlu0 %v431, 8
        %v611 = vpop.permute.xlu0 %610
        %612 = vrot.lane.b32.xlu0 %v432, 8
        %v613 = vpop.permute.xlu0 %612
        %614 = vrot.lane.b32.xlu0 %v433, 8
        %v615 = vpop.permute.xlu0 %614
        %616 = vrot.lane.b32.xlu0 %v434, 8
        %v617 = vpop.permute.xlu0 %616
        %618 = vrot.lane.b32.xlu0 %v435, 8
        %v619 = vpop.permute.xlu0 %618
        %620 = vrot.lane.b32.xlu0 %v436, 8
        %v621 = vpop.permute.xlu0 %620
        %622 = vrot.lane.b32.xlu0 %v437, 8
        %v623 = vpop.permute.xlu0 %622
        %624 = vrot.lane.b32.xlu0 %v438, 8
        %v625 = vpop.permute.xlu0 %624
        %626 = vrot.lane.b32.xlu0 %v439, 8
        %v627 = vpop.permute.xlu0 %626
        %628 = vrot.lane.b32.xlu0 %v440, 8
        %v629 = vpop.permute.xlu0 %628
        %630 = vrot.lane.b32.xlu0 %v441, 8
        %v631 = vpop.permute.xlu0 %630
        %632 = vrot.lane.b32.xlu0 %v442, 8
        %v633 = vpop.permute.xlu0 %632
        %634 = vrot.lane.b32.xlu0 %v443, 8
        %v635 = vpop.permute.xlu0 %634
        %636 = vrot.lane.b32.xlu0 %v444, 8
        %v637 = vpop.permute.xlu0 %636
        %638 = vrot.lane.b32.xlu0 %v445, 8
        %v639 = vpop.permute.xlu0 %638
        %v672 = vsel %vm257, %v410, %v479
        %v673 = vsel %vm257, %v411, %v481
        %v674 = vsel %vm257, %v412, %v483
        %v675 = vsel %vm257, %v413, %v485
        %v676 = vsel %vm257, %v414, %v487
        %v677 = vsel %vm257, %v415, %v489
        %v678 = vsel %vm257, %v416, %v491
        %v679 = vsel %vm257, %v417, %v493
        %v680 = vsel %vm257, %v418, %v495
        %v681 = vsel %vm257, %v419, %v497
        %v682 = vsel %vm257, %v420, %v499
        %v683 = vsel %vm257, %v421, %v501
        %v684 = vsel %vm257, %v422, %v503
        %v685 = vsel %vm257, %v423, %v505
        %v686 = vsel %vm257, %v424, %v507
        %v687 = vsel %vm257, %v425, %v509
        %v688 = vsel %vm257, %v426, %v511
        %v689 = vsel %vm257, %v427, %v513
        %v690 = vsel %vm257, %v428, %v515
        %v691 = vsel %vm257, %v429, %v517
        %v692 = vsel %vm257, %v430, %v519
        %v693 = vsel %vm257, %v431, %v521
        %v694 = vsel %vm257, %v432, %v523
        %v695 = vsel %vm257, %v433, %v525
        %v696 = vsel %vm257, %v434, %v527
        %v697 = vsel %vm257, %v435, %v529
        %v698 = vsel %vm257, %v436, %v531
        %v699 = vsel %vm257, %v437, %v533
        %v700 = vsel %vm257, %v438, %v535
        %v701 = vsel %vm257, %v439, %v537
        %v702 = vsel %vm257, %v440, %v539
        %v703 = vsel %vm257, %v441, %v541
        %vm704 = vcmask 64512
        %v705 = vsel %vm704, %v672, %v577
        %v706 = vsel %vm704, %v673, %v579
        %v707 = vsel %vm704, %v674, %v581
        %v708 = vsel %vm704, %v675, %v583
        %v709 = vsel %vm704, %v676, %v585
        %v710 = vsel %vm704, %v677, %v587
        %v711 = vsel %vm704, %v678, %v589
        %v712 = vsel %vm704, %v679, %v591
        %v713 = vsel %vm704, %v680, %v593
        %v714 = vsel %vm704, %v681, %v595
        %v715 = vsel %vm704, %v682, %v597
        %v716 = vsel %vm704, %v683, %v599
        %v717 = vsel %vm704, %v684, %v601
        %v718 = vsel %vm704, %v685, %v603
        %v719 = vsel %vm704, %v686, %v605
        %v720 = vsel %vm704, %v687, %v607
        %v721 = vsel %vm704, %v688, %v609
        %v722 = vsel %vm704, %v689, %v611
        %v723 = vsel %vm704, %v690, %v613
        %v724 = vsel %vm704, %v691, %v615
        %v725 = vsel %vm704, %v692, %v617
        %v726 = vsel %vm704, %v693, %v619
        %v727 = vsel %vm704, %v694, %v621
        %v728 = vsel %vm704, %v695, %v623
        %v729 = vsel %vm704, %v696, %v625
        %v730 = vsel %vm704, %v697, %v627
        %v731 = vsel %vm704, %v698, %v629
        %v732 = vsel %vm704, %v699, %v631
        %v733 = vsel %vm704, %v700, %v633
        %v734 = vsel %vm704, %v701, %v635
        %v735 = vsel %vm704, %v702, %v637
        %v736 = vsel %vm704, %v703, %v639
        %v737 = vpack.c.bf16 %v706, %v705
        %v738 = vpack.c.bf16 %v708, %v707
        %v739 = vpack.c.bf16 %v710, %v709
        %v740 = vpack.c.bf16 %v712, %v711
        %v741 = vpack.c.bf16 %v714, %v713
        %v742 = vpack.c.bf16 %v716, %v715
        %v743 = vpack.c.bf16 %v718, %v717
        %v744 = vpack.c.bf16 %v720, %v719
        %v745 = vpack.c.bf16 %v722, %v721
        %v746 = vpack.c.bf16 %v724, %v723
        %v747 = vpack.c.bf16 %v726, %v725
        %v748 = vpack.c.bf16 %v728, %v727
        %v749 = vpack.c.bf16 %v730, %v729
        %v750 = vpack.c.bf16 %v732, %v731
        %v751 = vpack.c.bf16 %v734, %v733
        %v752 = vpack.c.bf16 %v736, %v735
        %v753 = vld [vmem:[%s1] sm:$0xf]
        %v754 = vld [vmem:[%s1 + $0x4] sm:$0x3]
        %v755 = vld [vmem:[#allocation2 + $0x1] sm:$0xff]
        %v756 = vld [vmem:[#allocation2 + $0x9] sm:$0xff]
        %v757 = vld [vmem:[#allocation2 + $0x19] sm:$0xff]
        %v758 = vld [vmem:[#allocation2 + $0x21] sm:$0xff]
        %v759 = vld [vmem:[#allocation2 + $0x31] sm:$0xff]
        %v760 = vld [vmem:[#allocation2 + $0x39] sm:$0xff]
        %v761 = vld [vmem:[#allocation2 + $0x49] sm:$0xff]
        %v762 = vld [vmem:[#allocation2 + $0x51] sm:$0xff]
        %v763 = vld [vmem:[#allocation2 + $0x61] sm:$0xff]
        %v764 = vld [vmem:[#allocation2 + $0x69] sm:$0xff]
        %v765 = vld [vmem:[#allocation2 + $0x79] sm:$0xff]
        %v766 = vld [vmem:[#allocation2 + $0x81] sm:$0xff]
        %v767 = vld [vmem:[#allocation2 + $0x91] sm:$0xff]
        %v768 = vld [vmem:[#allocation2 + $0x99] sm:$0xff]
        %v769 = vld [vmem:[#allocation2 + $0xa9] sm:$0xff]
        %v770 = vld [vmem:[#allocation2 + $0xb1] sm:$0xff]
        %v771 = vld [vmem:[#allocation2 + $0xc1] sm:$0xff]
        %v772 = vld [vmem:[#allocation2 + $0xc9] sm:$0xff]
        %v773 = vld [vmem:[#allocation2 + $0xd9] sm:$0xff]
        %v774 = vld [vmem:[#allocation2 + $0xe1] sm:$0xff]
        %v775 = vld [vmem:[#allocation2 + $0xf1] sm:$0xff]
        %v776 = vld [vmem:[#allocation2 + $0xf9] sm:$0xff]
        %v777 = vld [vmem:[#allocation2 + $0x109] sm:$0xff]
        %v778 = vld [vmem:[#allocation2 + $0x111] sm:$0xff]
        %v779 = vld [vmem:[#allocation2 + $0x121] sm:$0xff]
        %v780 = vld [vmem:[#allocation2 + $0x129] sm:$0xff]
        %v781 = vld [vmem:[#allocation2 + $0x139] sm:$0xff]
        %v782 = vld [vmem:[#allocation2 + $0x141] sm:$0xff]
        %v783 = vld [vmem:[#allocation2 + $0x151] sm:$0xff]
        %v784 = vld [vmem:[#allocation2 + $0x159] sm:$0xff]
        %v785 = vld [vmem:[#allocation2 + $0x169] sm:$0xff]
        %v786 = vld [vmem:[#allocation2 + $0x171] sm:$0xff]
        %v787 = vld [vmem:[#allocation2 + $0x181] sm:$0xff]
        %v788 = vld [vmem:[#allocation2 + $0x189] sm:$0xff]
        %v789 = vld [vmem:[#allocation2 + $0x199] sm:$0xff]
        %v790 = vld [vmem:[#allocation2 + $0x1a1] sm:$0xff]
        %823 = vrot.lane.b32.xlu0 %v757, 4
        %v824 = vpop.permute.xlu0 %823
        %825 = vrot.lane.b32.xlu0 %v758, 4
        %v826 = vpop.permute.xlu0 %825
        %827 = vrot.lane.b32.xlu0 %v759, 4
        %v828 = vpop.permute.xlu0 %827
        %829 = vrot.lane.b32.xlu0 %v760, 4
        %v830 = vpop.permute.xlu0 %829
        %831 = vrot.lane.b32.xlu0 %v761, 4
        %v832 = vpop.permute.xlu0 %831
        %833 = vrot.lane.b32.xlu0 %v762, 4
        %v834 = vpop.permute.xlu0 %833
        %835 = vrot.lane.b32.xlu0 %v763, 4
        %v836 = vpop.permute.xlu0 %835
        %837 = vrot.lane.b32.xlu0 %v764, 4
        %v838 = vpop.permute.xlu0 %837
        %839 = vrot.lane.b32.xlu0 %v765, 4
        %v840 = vpop.permute.xlu0 %839
        %841 = vrot.lane.b32.xlu0 %v766, 4
        %v842 = vpop.permute.xlu0 %841
        %843 = vrot.lane.b32.xlu0 %v767, 4
        %v844 = vpop.permute.xlu0 %843
        %845 = vrot.lane.b32.xlu0 %v768, 4
        %v846 = vpop.permute.xlu0 %845
        %847 = vrot.lane.b32.xlu0 %v769, 4
        %v848 = vpop.permute.xlu0 %847
        %849 = vrot.lane.b32.xlu0 %v770, 4
        %v850 = vpop.permute.xlu0 %849
        %851 = vrot.lane.b32.xlu0 %v771, 4
        %v852 = vpop.permute.xlu0 %851
        %853 = vrot.lane.b32.xlu0 %v772, 4
        %v854 = vpop.permute.xlu0 %853
        %855 = vrot.lane.b32.xlu0 %v773, 4
        %v856 = vpop.permute.xlu0 %855
        %857 = vrot.lane.b32.xlu0 %v774, 4
        %v858 = vpop.permute.xlu0 %857
        %859 = vrot.lane.b32.xlu0 %v775, 4
        %v860 = vpop.permute.xlu0 %859
        %861 = vrot.lane.b32.xlu0 %v776, 4
        %v862 = vpop.permute.xlu0 %861
        %863 = vrot.lane.b32.xlu0 %v777, 4
        %v864 = vpop.permute.xlu0 %863
        %865 = vrot.lane.b32.xlu0 %v778, 4
        %v866 = vpop.permute.xlu0 %865
        %867 = vrot.lane.b32.xlu0 %v779, 4
        %v868 = vpop.permute.xlu0 %867
        %869 = vrot.lane.b32.xlu0 %v780, 4
        %v870 = vpop.permute.xlu0 %869
        %871 = vrot.lane.b32.xlu0 %v781, 4
        %v872 = vpop.permute.xlu0 %871
        %873 = vrot.lane.b32.xlu0 %v782, 4
        %v874 = vpop.permute.xlu0 %873
        %875 = vrot.lane.b32.xlu0 %v783, 4
        %v876 = vpop.permute.xlu0 %875
        %877 = vrot.lane.b32.xlu0 %v784, 4
        %v878 = vpop.permute.xlu0 %877
        %879 = vrot.lane.b32.xlu0 %v785, 4
        %v880 = vpop.permute.xlu0 %879
        %881 = vrot.lane.b32.xlu0 %v786, 4
        %v882 = vpop.permute.xlu0 %881
        %883 = vrot.lane.b32.xlu0 %v787, 4
        %v884 = vpop.permute.xlu0 %883
        %885 = vrot.lane.b32.xlu0 %v788, 4
        %v886 = vpop.permute.xlu0 %885
        %921 = vrot.lane.b32.xlu0 %v759, 8
        %v922 = vpop.permute.xlu0 %921
        %923 = vrot.lane.b32.xlu0 %v760, 8
        %v924 = vpop.permute.xlu0 %923
        %925 = vrot.lane.b32.xlu0 %v761, 8
        %v926 = vpop.permute.xlu0 %925
        %927 = vrot.lane.b32.xlu0 %v762, 8
        %v928 = vpop.permute.xlu0 %927
        %929 = vrot.lane.b32.xlu0 %v763, 8
        %v930 = vpop.permute.xlu0 %929
        %931 = vrot.lane.b32.xlu0 %v764, 8
        %v932 = vpop.permute.xlu0 %931
        %933 = vrot.lane.b32.xlu0 %v765, 8
        %v934 = vpop.permute.xlu0 %933
        %935 = vrot.lane.b32.xlu0 %v766, 8
        %v936 = vpop.permute.xlu0 %935
        %937 = vrot.lane.b32.xlu0 %v767, 8
        %v938 = vpop.permute.xlu0 %937
        %939 = vrot.lane.b32.xlu0 %v768, 8
        %v940 = vpop.permute.xlu0 %939
        %941 = vrot.lane.b32.xlu0 %v769, 8
        %v942 = vpop.permute.xlu0 %941
        %943 = vrot.lane.b32.xlu0 %v770, 8
        %v944 = vpop.permute.xlu0 %943
        %945 = vrot.lane.b32.xlu0 %v771, 8
        %v946 = vpop.permute.xlu0 %945
        %947 = vrot.lane.b32.xlu0 %v772, 8
        %v948 = vpop.permute.xlu0 %947
        %949 = vrot.lane.b32.xlu0 %v773, 8
        %v950 = vpop.permute.xlu0 %949
        %951 = vrot.lane.b32.xlu0 %v774, 8
        %v952 = vpop.permute.xlu0 %951
        %953 = vrot.lane.b32.xlu0 %v775, 8
        %v954 = vpop.permute.xlu0 %953
        %955 = vrot.lane.b32.xlu0 %v776, 8
        %v956 = vpop.permute.xlu0 %955
        %957 = vrot.lane.b32.xlu0 %v777, 8
        %v958 = vpop.permute.xlu0 %957
        %959 = vrot.lane.b32.xlu0 %v778, 8
        %v960 = vpop.permute.xlu0 %959
        %961 = vrot.lane.b32.xlu0 %v779, 8
        %v962 = vpop.permute.xlu0 %961
        %963 = vrot.lane.b32.xlu0 %v780, 8
        %v964 = vpop.permute.xlu0 %963
        %965 = vrot.lane.b32.xlu0 %v781, 8
        %v966 = vpop.permute.xlu0 %965
        %967 = vrot.lane.b32.xlu0 %v782, 8
        %v968 = vpop.permute.xlu0 %967
        %969 = vrot.lane.b32.xlu0 %v783, 8
        %v970 = vpop.permute.xlu0 %969
        %971 = vrot.lane.b32.xlu0 %v784, 8
        %v972 = vpop.permute.xlu0 %971
        %973 = vrot.lane.b32.xlu0 %v785, 8
        %v974 = vpop.permute.xlu0 %973
        %975 = vrot.lane.b32.xlu0 %v786, 8
        %v976 = vpop.permute.xlu0 %975
        %977 = vrot.lane.b32.xlu0 %v787, 8
        %v978 = vpop.permute.xlu0 %977
        %979 = vrot.lane.b32.xlu0 %v788, 8
        %v980 = vpop.permute.xlu0 %979
        %981 = vrot.lane.b32.xlu0 %v789, 8
        %v982 = vpop.permute.xlu0 %981
        %983 = vrot.lane.b32.xlu0 %v790, 8
        %v984 = vpop.permute.xlu0 %983
        %v1017 = vsel %vm257, %v755, %v824
        %v1018 = vsel %vm257, %v756, %v826
        %v1019 = vsel %vm257, %v757, %v828
        %v1020 = vsel %vm257, %v758, %v830
        %v1021 = vsel %vm257, %v759, %v832
        %v1022 = vsel %vm257, %v760, %v834
        %v1023 = vsel %vm257, %v761, %v836
        %v1024 = vsel %vm257, %v762, %v838
        %v1025 = vsel %vm257, %v763, %v840
        %v1026 = vsel %vm257, %v764, %v842
        %v1027 = vsel %vm257, %v765, %v844
        %v1028 = vsel %vm257, %v766, %v846
        %v1029 = vsel %vm257, %v767, %v848
        %v1030 = vsel %vm257, %v768, %v850
        %v1031 = vsel %vm257, %v769, %v852
        %v1032 = vsel %vm257, %v770, %v854
        %v1033 = vsel %vm257, %v771, %v856
        %v1034 = vsel %vm257, %v772, %v858
        %v1035 = vsel %vm257, %v773, %v860
        %v1036 = vsel %vm257, %v774, %v862
        %v1037 = vsel %vm257, %v775, %v864
        %v1038 = vsel %vm257, %v776, %v866
        %v1039 = vsel %vm257, %v777, %v868
        %v1040 = vsel %vm257, %v778, %v870
        %v1041 = vsel %vm257, %v779, %v872
        %v1042 = vsel %vm257, %v780, %v874
        %v1043 = vsel %vm257, %v781, %v876
        %v1044 = vsel %vm257, %v782, %v878
        %v1045 = vsel %vm257, %v783, %v880
        %v1046 = vsel %vm257, %v784, %v882
        %v1047 = vsel %vm257, %v785, %v884
        %v1048 = vsel %vm257, %v786, %v886
        %v1049 = vsel %vm704, %v1017, %v922
        %v1050 = vsel %vm704, %v1018, %v924
        %v1051 = vsel %vm704, %v1019, %v926
        %v1052 = vsel %vm704, %v1020, %v928
        %v1053 = vsel %vm704, %v1021, %v930
        %v1054 = vsel %vm704, %v1022, %v932
        %v1055 = vsel %vm704, %v1023, %v934
        %v1056 = vsel %vm704, %v1024, %v936
        %v1057 = vsel %vm704, %v1025, %v938
        %v1058 = vsel %vm704, %v1026, %v940
        %v1059 = vsel %vm704, %v1027, %v942
        %v1060 = vsel %vm704, %v1028, %v944
        %v1061 = vsel %vm704, %v1029, %v946
        %v1062 = vsel %vm704, %v1030, %v948
        %v1063 = vsel %vm704, %v1031, %v950
        %v1064 = vsel %vm704, %v1032, %v952
        %v1065 = vsel %vm704, %v1033, %v954
        %v1066 = vsel %vm704, %v1034, %v956
        %v1067 = vsel %vm704, %v1035, %v958
        %v1068 = vsel %vm704, %v1036, %v960
        %v1069 = vsel %vm704, %v1037, %v962
        %v1070 = vsel %vm704, %v1038, %v964
        %v1071 = vsel %vm704, %v1039, %v966
        %v1072 = vsel %vm704, %v1040, %v968
        %v1073 = vsel %vm704, %v1041, %v970
        %v1074 = vsel %vm704, %v1042, %v972
        %v1075 = vsel %vm704, %v1043, %v974
        %v1076 = vsel %vm704, %v1044, %v976
        %v1077 = vsel %vm704, %v1045, %v978
        %v1078 = vsel %vm704, %v1046, %v980
        %v1079 = vsel %vm704, %v1047, %v982
        %v1080 = vsel %vm704, %v1048, %v984
        %v1081 = vpack.c.bf16 %v1050, %v1049
        %v1082 = vpack.c.bf16 %v1052, %v1051
        %v1083 = vpack.c.bf16 %v1054, %v1053
        %v1084 = vpack.c.bf16 %v1056, %v1055
        %v1085 = vpack.c.bf16 %v1058, %v1057
        %v1086 = vpack.c.bf16 %v1060, %v1059
        %v1087 = vpack.c.bf16 %v1062, %v1061
        %v1088 = vpack.c.bf16 %v1064, %v1063
        %v1089 = vpack.c.bf16 %v1066, %v1065
        %v1090 = vpack.c.bf16 %v1068, %v1067
        %v1091 = vpack.c.bf16 %v1070, %v1069
        %v1092 = vpack.c.bf16 %v1072, %v1071
        %v1093 = vpack.c.bf16 %v1074, %v1073
        %v1094 = vpack.c.bf16 %v1076, %v1075
        %v1095 = vpack.c.bf16 %v1078, %v1077
        %v1096 = vpack.c.bf16 %v1080, %v1079
        %s1097 = scalar_lea.vmem %s1, 8
        %v1098 = vld [vmem:[%s1097] sm:$0xf]
        %v1099 = vld [vmem:[%s1097 + $0x4] sm:$0x3]
        %v1102 = vunpack.c.l.b16 %v1098
        %v1103 = vunpack.c.l.b16 %v1099
        %v1104 = vpack.c.b16 %v1103, %v1102
        %vm1105 = vcmask 97280
        %v1107 = vsel %vm1105, %v1081, 0
        %v1110 = vsel %vm1105, %v1082, 0
        %v1113 = vsel %vm1105, %v1083, 0
        %v1116 = vsel %vm1105, %v1084, 0
        %v1119 = vsel %vm1105, %v1085, 0
        %v1122 = vsel %vm1105, %v1086, 0
        %v1125 = vsel %vm1105, %v1087, 0
        %v1128 = vsel %vm1105, %v1088, 0
        %v1131 = vsel %vm1105, %v1089, 0
        %v1134 = vsel %vm1105, %v1090, 0
        %v1137 = vsel %vm1105, %v1091, 0
        %v1140 = vsel %vm1105, %v1092, 0
        %v1143 = vsel %vm1105, %v1093, 0
        %v1146 = vsel %vm1105, %v1094, 0
        %v1149 = vsel %vm1105, %v1095, 0
        %v1152 = vsel %vm1105, %v1096, 0
        %vm1154 = vcmask 1045504
        %v1156 = vsel %vm1154, %v1104, 0
        %1158 = vmatprep.subr.bf16.mxu0 0
        %1159 = vmatpush1.bf16.msra.mxu0 %v1156
        %1160 = vmatprep.subr.bf16.mxu0 0
        %1161 = vmatpush1.bf16.msra.mxu0 0
        %1162 = vmatprep.subr.bf16.mxu0 0
        %1163 = vmatpush1.bf16.msra.mxu0 0
        %1164 = vmatprep.subr.bf16.mxu0 0
        %1165 = vmatpush1.bf16.msra.mxu0 0
        %1166 = vmatprep.subr.bf16.mxu0 0
        %1167 = vmatpush1.bf16.msra.mxu0 0
        %1168 = vmatprep.subr.bf16.mxu0 0
        %1169 = vmatpush1.bf16.msra.mxu0 0
        %1170 = vmatprep.subr.bf16.mxu0 0
        %1171 = vmatpush1.bf16.msra.mxu0 0
        %1172 = vmatprep.subr.bf16.mxu0 0
        %1173 = vmatpush1.bf16.msra.mxu0 0
        %1174 = vmatprep.subr.bf16.mxu0 0
        %1175 = vmatpush1.bf16.msra.mxu0 0
        %1176 = vmatprep.subr.bf16.mxu0 0
        %1177 = vmatpush1.bf16.msra.mxu0 0
        %1178 = vmatprep.subr.bf16.mxu0 0
        %1179 = vmatpush1.bf16.msra.mxu0 0
        %1180 = vmatprep.subr.bf16.mxu0 0
        %1181 = vmatpush1.bf16.msra.mxu0 0
        %1182 = vmatprep.subr.bf16.mxu0 0
        %1183 = vmatpush1.bf16.msra.mxu0 0
        %1184 = vmatprep.subr.bf16.mxu0 0
        %1185 = vmatpush1.bf16.msra.mxu0 0
        %1186 = vmatprep.subr.bf16.mxu0 0
        %1187 = vmatpush1.bf16.msra.mxu0 0
        %1188 = vmatprep.subr.bf16.mxu0 0
        %1189 = vmatpush1.bf16.msra.mxu0 0
        %1190 = vmatprep.mubr.bf16.mxu0 0
        %1191 = vmatmul.mubr.bf16.gmra.mrb[0].mxu0 %v1107
        %v1192 = vpop.f32.mrb[0].mxu0
        %v1193 = vadd.f32 0.0, %v1192
        %v1194 = vpop.f32.mrb[0].mxu0
        %v1195 = vpop.f32.mrb[0].mxu0
        %v1196 = vadd.f32 0.0, %v1195
        %v1197 = vpop.f32.mrb[0].mxu0
        %1198 = vmatprep.mubr.bf16.mxu0 0
        %1199 = vmatmul.mubr.bf16.gmra.mrb[0].mxu0 %v1110
        %v1200 = vpop.f32.mrb[0].mxu0
        %v1201 = vadd.f32 0.0, %v1200
        %v1202 = vpop.f32.mrb[0].mxu0
        %v1203 = vpop.f32.mrb[0].mxu0
        %v1204 = vadd.f32 0.0, %v1203
        %v1205 = vpop.f32.mrb[0].mxu0
        %1206 = vmatprep.mubr.bf16.mxu0 0
        %1207 = vmatmul.mubr.bf16.gmra.mrb[0].mxu0 %v1113
        %v1208 = vpop.f32.mrb[0].mxu0
        %v1209 = vadd.f32 0.0, %v1208
        %v1210 = vpop.f32.mrb[0].mxu0
        %v1211 = vpop.f32.mrb[0].mxu0
        %v1212 = vadd.f32 0.0, %v1211
        %v1213 = vpop.f32.mrb[0].mxu0
        %1214 = vmatprep.mubr.bf16.mxu0 0
        %1215 = vmatmul.mubr.bf16.gmra.mrb[0].mxu0 %v1116
        %v1216 = vpop.f32.mrb[0].mxu0
        %v1217 = vadd.f32 0.0, %v1216
        %v1218 = vpop.f32.mrb[0].mxu0
        %v1219 = vpop.f32.mrb[0].mxu0
        %v1220 = vadd.f32 0.0, %v1219
        %v1221 = vpop.f32.mrb[0].mxu0
        %1222 = vmatprep.mubr.bf16.mxu0 0
        %1223 = vmatmul.mubr.bf16.gmra.mrb[0].mxu0 %v1119
        %v1224 = vpop.f32.mrb[0].mxu0
        %v1225 = vadd.f32 0.0, %v1224
        %v1226 = vpop.f32.mrb[0].mxu0
        %v1227 = vpop.f32.mrb[0].mxu0
        %v1228 = vadd.f32 0.0, %v1227
        %v1229 = vpop.f32.mrb[0].mxu0
        %1230 = vmatprep.mubr.bf16.mxu0 0
        %1231 = vmatmul.mubr.bf16.gmra.mrb[0].mxu0 %v1122
        %v1232 = vpop.f32.mrb[0].mxu0
        %v1233 = vadd.f32 0.0, %v1232
        %v1234 = vpop.f32.mrb[0].mxu0
        %v1235 = vpop.f32.mrb[0].mxu0
        %v1236 = vadd.f32 0.0, %v1235
        %v1237 = vpop.f32.mrb[0].mxu0
        %1238 = vmatprep.mubr.bf16.mxu0 0
        %1239 = vmatmul.mubr.bf16.gmra.mrb[0].mxu0 %v1125
        %v1240 = vpop.f32.mrb[0].mxu0
        %v1241 = vadd.f32 0.0, %v1240
        %v1242 = vpop.f32.mrb[0].mxu0
        %v1243 = vpop.f32.mrb[0].mxu0
        %v1244 = vadd.f32 0.0, %v1243
        %v1245 = vpop.f32.mrb[0].mxu0
        %1246 = vmatprep.mubr.bf16.mxu0 0
        %1247 = vmatmul.mubr.bf16.gmra.mrb[0].mxu0 %v1128
        %v1248 = vpop.f32.mrb[0].mxu0
        %v1249 = vadd.f32 0.0, %v1248
        %v1250 = vpop.f32.mrb[0].mxu0
        %v1251 = vpop.f32.mrb[0].mxu0
        %v1252 = vadd.f32 0.0, %v1251
        %v1253 = vpop.f32.mrb[0].mxu0
        %1254 = vmatprep.mubr.bf16.mxu0 0
        %1255 = vmatmul.mubr.bf16.gmra.mrb[0].mxu0 %v1131
        %v1256 = vpop.f32.mrb[0].mxu0
        %v1257 = vadd.f32 0.0, %v1256
        %v1258 = vpop.f32.mrb[0].mxu0
        %v1259 = vpop.f32.mrb[0].mxu0
        %v1260 = vadd.f32 0.0, %v1259
        %v1261 = vpop.f32.mrb[0].mxu0
        %1262 = vmatprep.mubr.bf16.mxu0 0
        %1263 = vmatmul.mubr.bf16.gmra.mrb[0].mxu0 %v1134
        %v1264 = vpop.f32.mrb[0].mxu0
        %v1265 = vadd.f32 0.0, %v1264
        %v1266 = vpop.f32.mrb[0].mxu0
        %v1267 = vpop.f32.mrb[0].mxu0
        %v1268 = vadd.f32 0.0, %v1267
        %v1269 = vpop.f32.mrb[0].mxu0
        %1270 = vmatprep.mubr.bf16.mxu0 0
        %1271 = vmatmul.mubr.bf16.gmra.mrb[0].mxu0 %v1137
        %v1272 = vpop.f32.mrb[0].mxu0
        %v1273 = vadd.f32 0.0, %v1272
        %v1274 = vpop.f32.mrb[0].mxu0
        %v1275 = vpop.f32.mrb[0].mxu0
        %v1276 = vadd.f32 0.0, %v1275
        %v1277 = vpop.f32.mrb[0].mxu0
        %1278 = vmatprep.mubr.bf16.mxu0 0
        %1279 = vmatmul.mubr.bf16.gmra.mrb[0].mxu0 %v1140
        %v1280 = vpop.f32.mrb[0].mxu0
        %v1281 = vadd.f32 0.0, %v1280
        %v1282 = vpop.f32.mrb[0].mxu0
        %v1283 = vpop.f32.mrb[0].mxu0
        %v1284 = vadd.f32 0.0, %v1283
        %v1285 = vpop.f32.mrb[0].mxu0
        %1286 = vmatprep.mubr.bf16.mxu0 0
        %1287 = vmatmul.mubr.bf16.gmra.mrb[0].mxu0 %v1143
        %v1288 = vpop.f32.mrb[0].mxu0
        %v1289 = vadd.f32 0.0, %v1288
        %v1290 = vpop.f32.mrb[0].mxu0
        %v1291 = vpop.f32.mrb[0].mxu0
        %v1292 = vadd.f32 0.0, %v1291
        %v1293 = vpop.f32.mrb[0].mxu0
        %1294 = vmatprep.mubr.bf16.mxu0 0
        %1295 = vmatmul.mubr.bf16.gmra.mrb[0].mxu0 %v1146
        %v1296 = vpop.f32.mrb[0].mxu0
        %v1297 = vadd.f32 0.0, %v1296
        %v1298 = vpop.f32.mrb[0].mxu0
        %v1299 = vpop.f32.mrb[0].mxu0
        %v1300 = vadd.f32 0.0, %v1299
        %v1301 = vpop.f32.mrb[0].mxu0
        %1302 = vmatprep.mubr.bf16.mxu0 0
        %1303 = vmatmul.mubr.bf16.gmra.mrb[0].mxu0 %v1149
        %v1304 = vpop.f32.mrb[0].mxu0
        %v1305 = vadd.f32 0.0, %v1304
        %v1306 = vpop.f32.mrb[0].mxu0
        %v1307 = vpop.f32.mrb[0].mxu0
        %v1308 = vadd.f32 0.0, %v1307
        %v1309 = vpop.f32.mrb[0].mxu0
        %1310 = vmatprep.mubr.bf16.mxu0 0
        %1311 = vmatmul.mubr.bf16.gmra.mrb[0].mxu0 %v1152
        %v1312 = vpop.f32.mrb[0].mxu0
        %v1313 = vadd.f32 0.0, %v1312
        %v1314 = vpop.f32.mrb[0].mxu0
        %v1315 = vpop.f32.mrb[0].mxu0
        %v1316 = vadd.f32 0.0, %v1315
        %v1317 = vpop.f32.mrb[0].mxu0
        %1318 = vdwg.mxu0
        %v1321 = vunpack.c.l.b16 %v753
        %v1322 = vunpack.c.l.b16 %v754
        %v1323 = vpack.c.b16 %v1322, %v1321
        %v1325 = vsel %vm1105, %v737, 0
        %v1328 = vsel %vm1105, %v738, 0
        %v1331 = vsel %vm1105, %v739, 0
        %v1334 = vsel %vm1105, %v740, 0
        %v1337 = vsel %vm1105, %v741, 0
        %v1340 = vsel %vm1105, %v742, 0
        %v1343 = vsel %vm1105, %v743, 0
        %v1346 = vsel %vm1105, %v744, 0
        %v1349 = vsel %vm1105, %v745, 0
        %v1352 = vsel %vm1105, %v746, 0
        %v1355 = vsel %vm1105, %v747, 0
        %v1358 = vsel %vm1105, %v748, 0
        %v1361 = vsel %vm1105, %v749, 0
        %v1364 = vsel %vm1105, %v750, 0
        %v1367 = vsel %vm1105, %v751, 0
        %v1370 = vsel %vm1105, %v752, 0
        %v1373 = vsel %vm1154, %v1323, 0
        %1375 = vmatprep.subr.bf16.mxu0 0
        %1376 = vmatpush1.bf16.msra.mxu0 %v1373
        %1377 = vmatprep.subr.bf16.mxu0 0
        %1378 = vmatpush1.bf16.msra.mxu0 0
        %1379 = vmatprep.subr.bf16.mxu0 0
        %1380 = vmatpush1.bf16.msra.mxu0 0
        %1381 = vmatprep.subr.bf16.mxu0 0
        %1382 = vmatpush1.bf16.msra.mxu0 0
        %1383 = vmatprep.subr.bf16.mxu0 0
        %1384 = vmatpush1.bf16.msra.mxu0 0
        %1385 = vmatprep.subr.bf16.mxu0 0
        %1386 = vmatpush1.bf16.msra.mxu0 0
        %1387 = vmatprep.subr.bf16.mxu0 0
        %1388 = vmatpush1.bf16.msra.mxu0 0
        %1389 = vmatprep.subr.bf16.mxu0 0
        %1390 = vmatpush1.bf16.msra.mxu0 0
        %1391 = vmatprep.subr.bf16.mxu0 0
        %1392 = vmatpush1.bf16.msra.mxu0 0
        %1393 = vmatprep.subr.bf16.mxu0 0
        %1394 = vmatpush1.bf16.msra.mxu0 0
        %1395 = vmatprep.subr.bf16.mxu0 0
        %1396 = vmatpush1.bf16.msra.mxu0 0
        %1397 = vmatprep.subr.bf16.mxu0 0
        %1398 = vmatpush1.bf16.msra.mxu0 0
        %1399 = vmatprep.subr.bf16.mxu0 0
        %1400 = vmatpush1.bf16.msra.mxu0 0
        %1401 = vmatprep.subr.bf16.mxu0 0
        %1402 = vmatpush1.bf16.msra.mxu0 0
        %1403 = vmatprep.subr.bf16.mxu0 0
        %1404 = vmatpush1.bf16.msra.mxu0 0
        %1405 = vmatprep.subr.bf16.mxu0 0
        %1406 = vmatpush1.bf16.msra.mxu0 0
        %1407 = vmatprep.mubr.bf16.mxu0 0
        %1408 = vmatmul.mubr.bf16.gmra.mrb[0].mxu0 %v1325
        %v1409 = vpop.f32.mrb[0].mxu0
        %v1410 = vadd.f32 %v1193, %v1409
        %v1411 = vpop.f32.mrb[0].mxu0
        %v1412 = vpop.f32.mrb[0].mxu0
        %v1413 = vadd.f32 %v1196, %v1412
        %v1414 = vpop.f32.mrb[0].mxu0
        %1415 = vmatprep.mubr.bf16.mxu0 0
        %1416 = vmatmul.mubr.bf16.gmra.mrb[0].mxu0 %v1328
        %v1417 = vpop.f32.mrb[0].mxu0
        %v1418 = vadd.f32 %v1201, %v1417
        %v1419 = vpop.f32.mrb[0].mxu0
        %v1420 = vpop.f32.mrb[0].mxu0
        %v1421 = vadd.f32 %v1204, %v1420
        %v1422 = vpop.f32.mrb[0].mxu0
        %1423 = vmatprep.mubr.bf16.mxu0 0
        %1424 = vmatmul.mubr.bf16.gmra.mrb[0].mxu0 %v1331
        %v1425 = vpop.f32.mrb[0].mxu0
        %v1426 = vadd.f32 %v1209, %v1425
        %v1427 = vpop.f32.mrb[0].mxu0
        %v1428 = vpop.f32.mrb[0].mxu0
        %v1429 = vadd.f32 %v1212, %v1428
        %v1430 = vpop.f32.mrb[0].mxu0
        %1431 = vmatprep.mubr.bf16.mxu0 0
        %1432 = vmatmul.mubr.bf16.gmra.mrb[0].mxu0 %v1334
        %v1433 = vpop.f32.mrb[0].mxu0
        %v1434 = vadd.f32 %v1217, %v1433
        %v1435 = vpop.f32.mrb[0].mxu0
        %v1436 = vpop.f32.mrb[0].mxu0
        %v1437 = vadd.f32 %v1220, %v1436
        %v1438 = vpop.f32.mrb[0].mxu0
        %1439 = vmatprep.mubr.bf16.mxu0 0
        %1440 = vmatmul.mubr.bf16.gmra.mrb[0].mxu0 %v1337
        %v1441 = vpop.f32.mrb[0].mxu0
        %v1442 = vadd.f32 %v1225, %v1441
        %v1443 = vpop.f32.mrb[0].mxu0
        %v1444 = vpop.f32.mrb[0].mxu0
        %v1445 = vadd.f32 %v1228, %v1444
        %v1446 = vpop.f32.mrb[0].mxu0
        %1447 = vmatprep.mubr.bf16.mxu0 0
        %1448 = vmatmul.mubr.bf16.gmra.mrb[0].mxu0 %v1340
        %v1449 = vpop.f32.mrb[0].mxu0
        %v1450 = vadd.f32 %v1233, %v1449
        %v1451 = vpop.f32.mrb[0].mxu0
        %v1452 = vpop.f32.mrb[0].mxu0
        %v1453 = vadd.f32 %v1236, %v1452
        %v1454 = vpop.f32.mrb[0].mxu0
        %1455 = vmatprep.mubr.bf16.mxu0 0
        %1456 = vmatmul.mubr.bf16.gmra.mrb[0].mxu0 %v1343
        %v1457 = vpop.f32.mrb[0].mxu0
        %v1458 = vadd.f32 %v1241, %v1457
        %v1459 = vpop.f32.mrb[0].mxu0
        %v1460 = vpop.f32.mrb[0].mxu0
        %v1461 = vadd.f32 %v1244, %v1460
        %v1462 = vpop.f32.mrb[0].mxu0
        %1463 = vmatprep.mubr.bf16.mxu0 0
        %1464 = vmatmul.mubr.bf16.gmra.mrb[0].mxu0 %v1346
        %v1465 = vpop.f32.mrb[0].mxu0
        %v1466 = vadd.f32 %v1249, %v1465
        %v1467 = vpop.f32.mrb[0].mxu0
        %v1468 = vpop.f32.mrb[0].mxu0
        %v1469 = vadd.f32 %v1252, %v1468
        %v1470 = vpop.f32.mrb[0].mxu0
        %1471 = vmatprep.mubr.bf16.mxu0 0
        %1472 = vmatmul.mubr.bf16.gmra.mrb[0].mxu0 %v1349
        %v1473 = vpop.f32.mrb[0].mxu0
        %v1474 = vadd.f32 %v1257, %v1473
        %v1475 = vpop.f32.mrb[0].mxu0
        %v1476 = vpop.f32.mrb[0].mxu0
        %v1477 = vadd.f32 %v1260, %v1476
        %v1478 = vpop.f32.mrb[0].mxu0
        %1479 = vmatprep.mubr.bf16.mxu0 0
        %1480 = vmatmul.mubr.bf16.gmra.mrb[0].mxu0 %v1352
        %v1481 = vpop.f32.mrb[0].mxu0
        %v1482 = vadd.f32 %v1265, %v1481
        %v1483 = vpop.f32.mrb[0].mxu0
        %v1484 = vpop.f32.mrb[0].mxu0
        %v1485 = vadd.f32 %v1268, %v1484
        %v1486 = vpop.f32.mrb[0].mxu0
        %1487 = vmatprep.mubr.bf16.mxu0 0
        %1488 = vmatmul.mubr.bf16.gmra.mrb[0].mxu0 %v1355
        %v1489 = vpop.f32.mrb[0].mxu0
        %v1490 = vadd.f32 %v1273, %v1489
        %v1491 = vpop.f32.mrb[0].mxu0
        %v1492 = vpop.f32.mrb[0].mxu0
        %v1493 = vadd.f32 %v1276, %v1492
        %v1494 = vpop.f32.mrb[0].mxu0
        %1495 = vmatprep.mubr.bf16.mxu0 0
        %1496 = vmatmul.mubr.bf16.gmra.mrb[0].mxu0 %v1358
        %v1497 = vpop.f32.mrb[0].mxu0
        %v1498 = vadd.f32 %v1281, %v1497
        %v1499 = vpop.f32.mrb[0].mxu0
        %v1500 = vpop.f32.mrb[0].mxu0
        %v1501 = vadd.f32 %v1284, %v1500
        %v1502 = vpop.f32.mrb[0].mxu0
        %1503 = vmatprep.mubr.bf16.mxu0 0
        %1504 = vmatmul.mubr.bf16.gmra.mrb[0].mxu0 %v1361
        %v1505 = vpop.f32.mrb[0].mxu0
        %v1506 = vadd.f32 %v1289, %v1505
        %v1507 = vpop.f32.mrb[0].mxu0
        %v1508 = vpop.f32.mrb[0].mxu0
        %v1509 = vadd.f32 %v1292, %v1508
        %v1510 = vpop.f32.mrb[0].mxu0
        %1511 = vmatprep.mubr.bf16.mxu0 0
        %1512 = vmatmul.mubr.bf16.gmra.mrb[0].mxu0 %v1364
        %v1513 = vpop.f32.mrb[0].mxu0
        %v1514 = vadd.f32 %v1297, %v1513
        %v1515 = vpop.f32.mrb[0].mxu0
        %v1516 = vpop.f32.mrb[0].mxu0
        %v1517 = vadd.f32 %v1300, %v1516
        %v1518 = vpop.f32.mrb[0].mxu0
        %1519 = vmatprep.mubr.bf16.mxu0 0
        %1520 = vmatmul.mubr.bf16.gmra.mrb[0].mxu0 %v1367
        %v1521 = vpop.f32.mrb[0].mxu0
        %v1522 = vadd.f32 %v1305, %v1521
        %v1523 = vpop.f32.mrb[0].mxu0
        %v1524 = vpop.f32.mrb[0].mxu0
        %v1525 = vadd.f32 %v1308, %v1524
        %v1526 = vpop.f32.mrb[0].mxu0
        %1527 = vmatprep.mubr.bf16.mxu0 0
        %1528 = vmatmul.mubr.bf16.gmra.mrb[0].mxu0 %v1370
        %v1529 = vpop.f32.mrb[0].mxu0
        %v1530 = vadd.f32 %v1313, %v1529
        %v1531 = vpop.f32.mrb[0].mxu0
        %v1532 = vpop.f32.mrb[0].mxu0
        %v1533 = vadd.f32 %v1316, %v1532
        %v1534 = vpop.f32.mrb[0].mxu0
        %1535 = vdwg.mxu0
        %v1536 = vld [vmem:[#allocation2 + $0x2] sm:$0xff]
        %v1537 = vld [vmem:[#allocation2 + $0xa] sm:$0xff]
        %v1538 = vld [vmem:[#allocation2 + $0x1a] sm:$0xff]
        %v1539 = vld [vmem:[#allocation2 + $0x22] sm:$0xff]
        %v1540 = vld [vmem:[#allocation2 + $0x32] sm:$0xff]
        %v1541 = vld [vmem:[#allocation2 + $0x3a] sm:$0xff]
        %v1542 = vld [vmem:[#allocation2 + $0x4a] sm:$0xff]
        %v1543 = vld [vmem:[#allocation2 + $0x52] sm:$0xff]
        %v1544 = vld [vmem:[#allocation2 + $0x62] sm:$0xff]
        %v1545 = vld [vmem:[#allocation2 + $0x6a] sm:$0xff]
        %v1546 = vld [vmem:[#allocation2 + $0x7a] sm:$0xff]
        %v1547 = vld [vmem:[#allocation2 + $0x82] sm:$0xff]
        %v1548 = vld [vmem:[#allocation2 + $0x92] sm:$0xff]
        %v1549 = vld [vmem:[#allocation2 + $0x9a] sm:$0xff]
        %v1550 = vld [vmem:[#allocation2 + $0xaa] sm:$0xff]
        %v1551 = vld [vmem:[#allocation2 + $0xb2] sm:$0xff]
        %v1552 = vld [vmem:[#allocation2 + $0xc2] sm:$0xff]
        %v1553 = vld [vmem:[#allocation2 + $0xca] sm:$0xff]
        %v1554 = vld [vmem:[#allocation2 + $0xda] sm:$0xff]
        %v1555 = vld [vmem:[#allocation2 + $0xe2] sm:$0xff]
        %v1556 = vld [vmem:[#allocation2 + $0xf2] sm:$0xff]
        %v1557 = vld [vmem:[#allocation2 + $0xfa] sm:$0xff]
        %v1558 = vld [vmem:[#allocation2 + $0x10a] sm:$0xff]
        %v1559 = vld [vmem:[#allocation2 + $0x112] sm:$0xff]
        %v1560 = vld [vmem:[#allocation2 + $0x122] sm:$0xff]
        %v1561 = vld [vmem:[#allocation2 + $0x12a] sm:$0xff]
        %v1562 = vld [vmem:[#allocation2 + $0x13a] sm:$0xff]
        %v1563 = vld [vmem:[#allocation2 + $0x142] sm:$0xff]
        %v1564 = vld [vmem:[#allocation2 + $0x152] sm:$0xff]
        %v1565 = vld [vmem:[#allocation2 + $0x15a] sm:$0xff]
        %v1566 = vld [vmem:[#allocation2 + $0x16a] sm:$0xff]
        %v1567 = vld [vmem:[#allocation2 + $0x172] sm:$0xff]
        %v1568 = vld [vmem:[#allocation2 + $0x182] sm:$0xff]
        %v1569 = vld [vmem:[#allocation2 + $0x18a] sm:$0xff]
        %v1570 = vld [vmem:[#allocation2 + $0x19a] sm:$0xff]
        %v1571 = vld [vmem:[#allocation2 + $0x1a2] sm:$0xff]
        %1604 = vrot.lane.b32.xlu0 %v1538, 4
        %v1605 = vpop.permute.xlu0 %1604
        %1606 = vrot.lane.b32.xlu0 %v1539, 4
        %v1607 = vpop.permute.xlu0 %1606
        %1608 = vrot.lane.b32.xlu0 %v1540, 4
        %v1609 = vpop.permute.xlu0 %1608
        %1610 = vrot.lane.b32.xlu0 %v1541, 4
        %v1611 = vpop.permute.xlu0 %1610
        %1612 = vrot.lane.b32.xlu0 %v1542, 4
        %v1613 = vpop.permute.xlu0 %1612
        %1614 = vrot.lane.b32.xlu0 %v1543, 4
        %v1615 = vpop.permute.xlu0 %1614
        %1616 = vrot.lane.b32.xlu0 %v1544, 4
        %v1617 = vpop.permute.xlu0 %1616
        %1618 = vrot.lane.b32.xlu0 %v1545, 4
        %v1619 = vpop.permute.xlu0 %1618
        %1620 = vrot.lane.b32.xlu0 %v1546, 4
        %v1621 = vpop.permute.xlu0 %1620
        %1622 = vrot.lane.b32.xlu0 %v1547, 4
        %v1623 = vpop.permute.xlu0 %1622
        %1624 = vrot.lane.b32.xlu0 %v1548, 4
        %v1625 = vpop.permute.xlu0 %1624
        %1626 = vrot.lane.b32.xlu0 %v1549, 4
        %v1627 = vpop.permute.xlu0 %1626
        %1628 = vrot.lane.b32.xlu0 %v1550, 4
        %v1629 = vpop.permute.xlu0 %1628
        %1630 = vrot.lane.b32.xlu0 %v1551, 4
        %v1631 = vpop.permute.xlu0 %1630
        %1632 = vrot.lane.b32.xlu0 %v1552, 4
        %v1633 = vpop.permute.xlu0 %1632
        %1634 = vrot.lane.b32.xlu0 %v1553, 4
        %v1635 = vpop.permute.xlu0 %1634
        %1636 = vrot.lane.b32.xlu0 %v1554, 4
        %v1637 = vpop.permute.xlu0 %1636
        %1638 = vrot.lane.b32.xlu0 %v1555, 4
        %v1639 = vpop.permute.xlu0 %1638
        %1640 = vrot.lane.b32.xlu0 %v1556, 4
        %v1641 = vpop.permute.xlu0 %1640
        %1642 = vrot.lane.b32.xlu0 %v1557, 4
        %v1643 = vpop.permute.xlu0 %1642
        %1644 = vrot.lane.b32.xlu0 %v1558, 4
        %v1645 = vpop.permute.xlu0 %1644
        %1646 = vrot.lane.b32.xlu0 %v1559, 4
        %v1647 = vpop.permute.xlu0 %1646
        %1648 = vrot.lane.b32.xlu0 %v1560, 4
        %v1649 = vpop.permute.xlu0 %1648
        %1650 = vrot.lane.b32.xlu0 %v1561, 4
        %v1651 = vpop.permute.xlu0 %1650
        %1652 = vrot.lane.b32.xlu0 %v1562, 4
        %v1653 = vpop.permute.xlu0 %1652
        %1654 = vrot.lane.b32.xlu0 %v1563, 4
        %v1655 = vpop.permute.xlu0 %1654
        %1656 = vrot.lane.b32.xlu0 %v1564, 4
        %v1657 = vpop.permute.xlu0 %1656
        %1658 = vrot.lane.b32.xlu0 %v1565, 4
        %v1659 = vpop.permute.xlu0 %1658
        %1660 = vrot.lane.b32.xlu0 %v1566, 4
        %v1661 = vpop.permute.xlu0 %1660
        %1662 = vrot.lane.b32.xlu0 %v1567, 4
        %v1663 = vpop.permute.xlu0 %1662
        %1664 = vrot.lane.b32.xlu0 %v1568, 4
        %v1665 = vpop.permute.xlu0 %1664
        %1666 = vrot.lane.b32.xlu0 %v1569, 4
        %v1667 = vpop.permute.xlu0 %1666
        %1702 = vrot.lane.b32.xlu0 %v1540, 8
        %v1703 = vpop.permute.xlu0 %1702
        %1704 = vrot.lane.b32.xlu0 %v1541, 8
        %v1705 = vpop.permute.xlu0 %1704
        %1706 = vrot.lane.b32.xlu0 %v1542, 8
        %v1707 = vpop.permute.xlu0 %1706
        %1708 = vrot.lane.b32.xlu0 %v1543, 8
        %v1709 = vpop.permute.xlu0 %1708
        %1710 = vrot.lane.b32.xlu0 %v1544, 8
        %v1711 = vpop.permute.xlu0 %1710
        %1712 = vrot.lane.b32.xlu0 %v1545, 8
        %v1713 = vpop.permute.xlu0 %1712
        %1714 = vrot.lane.b32.xlu0 %v1546, 8
        %v1715 = vpop.permute.xlu0 %1714
        %1716 = vrot.lane.b32.xlu0 %v1547, 8
        %v1717 = vpop.permute.xlu0 %1716
        %1718 = vrot.lane.b32.xlu0 %v1548, 8
        %v1719 = vpop.permute.xlu0 %1718
        %1720 = vrot.lane.b32.xlu0 %v1549, 8
        %v1721 = vpop.permute.xlu0 %1720
        %1722 = vrot.lane.b32.xlu0 %v1550, 8
        %v1723 = vpop.permute.xlu0 %1722
        %1724 = vrot.lane.b32.xlu0 %v1551, 8
        %v1725 = vpop.permute.xlu0 %1724
        %1726 = vrot.lane.b32.xlu0 %v1552, 8
        %v1727 = vpop.permute.xlu0 %1726
        %1728 = vrot.lane.b32.xlu0 %v1553, 8
        %v1729 = vpop.permute.xlu0 %1728
        %1730 = vrot.lane.b32.xlu0 %v1554, 8
        %v1731 = vpop.permute.xlu0 %1730
        %1732 = vrot.lane.b32.xlu0 %v1555, 8
        %v1733 = vpop.permute.xlu0 %1732
        %1734 = vrot.lane.b32.xlu0 %v1556, 8
        %v1735 = vpop.permute.xlu0 %1734
        %1736 = vrot.lane.b32.xlu0 %v1557, 8
        %v1737 = vpop.permute.xlu0 %1736
        %1738 = vrot.lane.b32.xlu0 %v1558, 8
        %v1739 = vpop.permute.xlu0 %1738
        %1740 = vrot.lane.b32.xlu0 %v1559, 8
        %v1741 = vpop.permute.xlu0 %1740
        %1742 = vrot.lane.b32.xlu0 %v1560, 8
        %v1743 = vpop.permute.xlu0 %1742
        %1744 = vrot.lane.b32.xlu0 %v1561, 8
        %v1745 = vpop.permute.xlu0 %1744
        %1746 = vrot.lane.b32.xlu0 %v1562, 8
        %v1747 = vpop.permute.xlu0 %1746
        %1748 = vrot.lane.b32.xlu0 %v1563, 8
        %v1749 = vpop.permute.xlu0 %1748
        %1750 = vrot.lane.b32.xlu0 %v1564, 8
        %v1751 = vpop.permute.xlu0 %1750
        %1752 = vrot.lane.b32.xlu0 %v1565, 8
        %v1753 = vpop.permute.xlu0 %1752
        %1754 = vrot.lane.b32.xlu0 %v1566, 8
        %v1755 = vpop.permute.xlu0 %1754
        %1756 = vrot.lane.b32.xlu0 %v1567, 8
        %v1757 = vpop.permute.xlu0 %1756
        %1758 = vrot.lane.b32.xlu0 %v1568, 8
        %v1759 = vpop.permute.xlu0 %1758
        %1760 = vrot.lane.b32.xlu0 %v1569, 8
        %v1761 = vpop.permute.xlu0 %1760
        %1762 = vrot.lane.b32.xlu0 %v1570, 8
        %v1763 = vpop.permute.xlu0 %1762
        %1764 = vrot.lane.b32.xlu0 %v1571, 8
        %v1765 = vpop.permute.xlu0 %1764
        %v1798 = vsel %vm257, %v1536, %v1605
        %v1799 = vsel %vm257, %v1537, %v1607
        %v1800 = vsel %vm257, %v1538, %v1609
        %v1801 = vsel %vm257, %v1539, %v1611
        %v1802 = vsel %vm257, %v1540, %v1613
        %v1803 = vsel %vm257, %v1541, %v1615
        %v1804 = vsel %vm257, %v1542, %v1617
        %v1805 = vsel %vm257, %v1543, %v1619
        %v1806 = vsel %vm257, %v1544, %v1621
        %v1807 = vsel %vm257, %v1545, %v1623
        %v1808 = vsel %vm257, %v1546, %v1625
        %v1809 = vsel %vm257, %v1547, %v1627
        %v1810 = vsel %vm257, %v1548, %v1629
        %v1811 = vsel %vm257, %v1549, %v1631
        %v1812 = vsel %vm257, %v1550, %v1633
        %v1813 = vsel %vm257, %v1551, %v1635
        %v1814 = vsel %vm257, %v1552, %v1637
        %v1815 = vsel %vm257, %v1553, %v1639
        %v1816 = vsel %vm257, %v1554, %v1641
        %v1817 = vsel %vm257, %v1555, %v1643
        %v1818 = vsel %vm257, %v1556, %v1645
        %v1819 = vsel %vm257, %v1557, %v1647
        %v1820 = vsel %vm257, %v1558, %v1649
        %v1821 = vsel %vm257, %v1559, %v1651
        %v1822 = vsel %vm257, %v1560, %v1653
        %v1823 = vsel %vm257, %v1561, %v1655
        %v1824 = vsel %vm257, %v1562, %v1657
        %v1825 = vsel %vm257, %v1563, %v1659
        %v1826 = vsel %vm257, %v1564, %v1661
        %v1827 = vsel %vm257, %v1565, %v1663
        %v1828 = vsel %vm257, %v1566, %v1665
        %v1829 = vsel %vm257, %v1567, %v1667
        %v1830 = vsel %vm704, %v1798, %v1703
        %v1831 = vsel %vm704, %v1799, %v1705
        %v1832 = vsel %vm704, %v1800, %v1707
        %v1833 = vsel %vm704, %v1801, %v1709
        %v1834 = vsel %vm704, %v1802, %v1711
        %v1835 = vsel %vm704, %v1803, %v1713
        %v1836 = vsel %vm704, %v1804, %v1715
        %v1837 = vsel %vm704, %v1805, %v1717
        %v1838 = vsel %vm704, %v1806, %v1719
        %v1839 = vsel %vm704, %v1807, %v1721
        %v1840 = vsel %vm704, %v1808, %v1723
        %v1841 = vsel %vm704, %v1809, %v1725
        %v1842 = vsel %vm704, %v1810, %v1727
        %v1843 = vsel %vm704, %v1811, %v1729
        %v1844 = vsel %vm704, %v1812, %v1731
        %v1845 = vsel %vm704, %v1813, %v1733
        %v1846 = vsel %vm704, %v1814, %v1735
        %v1847 = vsel %vm704, %v1815, %v1737
        %v1848 = vsel %vm704, %v1816, %v1739
        %v1849 = vsel %vm704, %v1817, %v1741
        %v1850 = vsel %vm704, %v1818, %v1743
        %v1851 = vsel %vm704, %v1819, %v1745
        %v1852 = vsel %vm704, %v1820, %v1747
        %v1853 = vsel %vm704, %v1821, %v1749
        %v1854 = vsel %vm704, %v1822, %v1751
        %v1855 = vsel %vm704, %v1823, %v1753
        %v1856 = vsel %vm704, %v1824, %v1755
        %v1857 = vsel %vm704, %v1825, %v1757
        %v1858 = vsel %vm704, %v1826, %v1759
        %v1859 = vsel %vm704, %v1827, %v1761
        %v1860 = vsel %vm704, %v1828, %v1763
        %v1861 = vsel %vm704, %v1829, %v1765
        %v1862 = vpack.c.bf16 %v1831, %v1830
        %v1863 = vpack.c.bf16 %v1833, %v1832
        %v1864 = vpack.c.bf16 %v1835, %v1834
        %v1865 = vpack.c.bf16 %v1837, %v1836
        %v1866 = vpack.c.bf16 %v1839, %v1838
        %v1867 = vpack.c.bf16 %v1841, %v1840
        %v1868 = vpack.c.bf16 %v1843, %v1842
        %v1869 = vpack.c.bf16 %v1845, %v1844
        %v1870 = vpack.c.bf16 %v1847, %v1846
        %v1871 = vpack.c.bf16 %v1849, %v1848
        %v1872 = vpack.c.bf16 %v1851, %v1850
        %v1873 = vpack.c.bf16 %v1853, %v1852
        %v1874 = vpack.c.bf16 %v1855, %v1854
        %v1875 = vpack.c.bf16 %v1857, %v1856
        %v1876 = vpack.c.bf16 %v1859, %v1858
        %v1877 = vpack.c.bf16 %v1861, %v1860
        %s1878 = scalar_lea.vmem %s1, 16
        %v1879 = vld [vmem:[%s1878] sm:$0xf]
        %v1880 = vld [vmem:[%s1878 + $0x4] sm:$0x3]
        %v1883 = vunpack.c.l.b16 %v1879
        %v1884 = vunpack.c.l.b16 %v1880
        %v1885 = vpack.c.b16 %v1884, %v1883
        %v1887 = vsel %vm1105, %v1862, 0
        %v1890 = vsel %vm1105, %v1863, 0
        %v1893 = vsel %vm1105, %v1864, 0
        %v1896 = vsel %vm1105, %v1865, 0
        %v1899 = vsel %vm1105, %v1866, 0
        %v1902 = vsel %vm1105, %v1867, 0
        %v1905 = vsel %vm1105, %v1868, 0
        %v1908 = vsel %vm1105, %v1869, 0
        %v1911 = vsel %vm1105, %v1870, 0
        %v1914 = vsel %vm1105, %v1871, 0
        %v1917 = vsel %vm1105, %v1872, 0
        %v1920 = vsel %vm1105, %v1873, 0
        %v1923 = vsel %vm1105, %v1874, 0
        %v1926 = vsel %vm1105, %v1875, 0
        %v1929 = vsel %vm1105, %v1876, 0
        %v1932 = vsel %vm1105, %v1877, 0
        %v1935 = vsel %vm1154, %v1885, 0
        %1937 = vmatprep.subr.bf16.mxu0 0
        %1938 = vmatpush1.bf16.msra.mxu0 %v1935
        %1939 = vmatprep.subr.bf16.mxu0 0
        %1940 = vmatpush1.bf16.msra.mxu0 0
        %1941 = vmatprep.subr.bf16.mxu0 0
        %1942 = vmatpush1.bf16.msra.mxu0 0
        %1943 = vmatprep.subr.bf16.mxu0 0
        %1944 = vmatpush1.bf16.msra.mxu0 0
        %1945 = vmatprep.subr.bf16.mxu0 0
        %1946 = vmatpush1.bf16.msra.mxu0 0
        %1947 = vmatprep.subr.bf16.mxu0 0
        %1948 = vmatpush1.bf16.msra.mxu0 0
        %1949 = vmatprep.subr.bf16.mxu0 0
        %1950 = vmatpush1.bf16.msra.mxu0 0
        %1951 = vmatprep.subr.bf16.mxu0 0
        %1952 = vmatpush1.bf16.msra.mxu0 0
        %1953 = vmatprep.subr.bf16.mxu0 0
        %1954 = vmatpush1.bf16.msra.mxu0 0
        %1955 = vmatprep.subr.bf16.mxu0 0
        %1956 = vmatpush1.bf16.msra.mxu0 0
        %1957 = vmatprep.subr.bf16.mxu0 0
        %1958 = vmatpush1.bf16.msra.mxu0 0
        %1959 = vmatprep.subr.bf16.mxu0 0
        %1960 = vmatpush1.bf16.msra.mxu0 0
        %1961 = vmatprep.subr.bf16.mxu0 0
        %1962 = vmatpush1.bf16.msra.mxu0 0
        %1963 = vmatprep.subr.bf16.mxu0 0
        %1964 = vmatpush1.bf16.msra.mxu0 0
        %1965 = vmatprep.subr.bf16.mxu0 0
        %1966 = vmatpush1.bf16.msra.mxu0 0
        %1967 = vmatprep.subr.bf16.mxu0 0
        %1968 = vmatpush1.bf16.msra.mxu0 0
        %1969 = vmatprep.mubr.bf16.mxu0 0
        %1970 = vmatmul.mubr.bf16.gmra.mrb[0].mxu0 %v1887
        %v1971 = vpop.f32.mrb[0].mxu0
        %v1972 = vadd.f32 0.0, %v1971
        %v1973 = vpop.f32.mrb[0].mxu0
        %v1974 = vpop.f32.mrb[0].mxu0
        %v1975 = vadd.f32 0.0, %v1974
        %v1976 = vpop.f32.mrb[0].mxu0
        %1977 = vmatprep.mubr.bf16.mxu0 0
        %1978 = vmatmul.mubr.bf16.gmra.mrb[0].mxu0 %v1890
        %v1979 = vpop.f32.mrb[0].mxu0
        %v1980 = vadd.f32 0.0, %v1979
        %v1981 = vpop.f32.mrb[0].mxu0
        %v1982 = vpop.f32.mrb[0].mxu0
        %v1983 = vadd.f32 0.0, %v1982
        %v1984 = vpop.f32.mrb[0].mxu0
        %1985 = vmatprep.mubr.bf16.mxu0 0
        %1986 = vmatmul.mubr.bf16.gmra.mrb[0].mxu0 %v1893
        %v1987 = vpop.f32.mrb[0].mxu0
        %v1988 = vadd.f32 0.0, %v1987
        %v1989 = vpop.f32.mrb[0].mxu0
        %v1990 = vpop.f32.mrb[0].mxu0
        %v1991 = vadd.f32 0.0, %v1990
        %v1992 = vpop.f32.mrb[0].mxu0
        %1993 = vmatprep.mubr.bf16.mxu0 0
        %1994 = vmatmul.mubr.bf16.gmra.mrb[0].mxu0 %v1896
        %v1995 = vpop.f32.mrb[0].mxu0
        %v1996 = vadd.f32 0.0, %v1995
        %v1997 = vpop.f32.mrb[0].mxu0
        %v1998 = vpop.f32.mrb[0].mxu0
        %v1999 = vadd.f32 0.0, %v1998
        %v2000 = vpop.f32.mrb[0].mxu0
        %2001 = vmatprep.mubr.bf16.mxu0 0
        %2002 = vmatmul.mubr.bf16.gmra.mrb[0].mxu0 %v1899
        %v2003 = vpop.f32.mrb[0].mxu0
        %v2004 = vadd.f32 0.0, %v2003
        %v2005 = vpop.f32.mrb[0].mxu0
        %v2006 = vpop.f32.mrb[0].mxu0
        %v2007 = vadd.f32 0.0, %v2006
        %v2008 = vpop.f32.mrb[0].mxu0
        %2009 = vmatprep.mubr.bf16.mxu0 0
        %2010 = vmatmul.mubr.bf16.gmra.mrb[0].mxu0 %v1902
        %v2011 = vpop.f32.mrb[0].mxu0
        %v2012 = vadd.f32 0.0, %v2011
        %v2013 = vpop.f32.mrb[0].mxu0
        %v2014 = vpop.f32.mrb[0].mxu0
        %v2015 = vadd.f32 0.0, %v2014
        %v2016 = vpop.f32.mrb[0].mxu0
        %2017 = vmatprep.mubr.bf16.mxu0 0
        %2018 = vmatmul.mubr.bf16.gmra.mrb[0].mxu0 %v1905
        %v2019 = vpop.f32.mrb[0].mxu0
        %v2020 = vadd.f32 0.0, %v2019
        %v2021 = vpop.f32.mrb[0].mxu0
        %v2022 = vpop.f32.mrb[0].mxu0
        %v2023 = vadd.f32 0.0, %v2022
        %v2024 = vpop.f32.mrb[0].mxu0
        %2025 = vmatprep.mubr.bf16.mxu0 0
        %2026 = vmatmul.mubr.bf16.gmra.mrb[0].mxu0 %v1908
        %v2027 = vpop.f32.mrb[0].mxu0
        %v2028 = vadd.f32 0.0, %v2027
        %v2029 = vpop.f32.mrb[0].mxu0
        %v2030 = vpop.f32.mrb[0].mxu0
        %v2031 = vadd.f32 0.0, %v2030
        %v2032 = vpop.f32.mrb[0].mxu0
        %2033 = vmatprep.mubr.bf16.mxu0 0
        %2034 = vmatmul.mubr.bf16.gmra.mrb[0].mxu0 %v1911
        %v2035 = vpop.f32.mrb[0].mxu0
        %v2036 = vadd.f32 0.0, %v2035
        %v2037 = vpop.f32.mrb[0].mxu0
        %v2038 = vpop.f32.mrb[0].mxu0
        %v2039 = vadd.f32 0.0, %v2038
        %v2040 = vpop.f32.mrb[0].mxu0
        %2041 = vmatprep.mubr.bf16.mxu0 0
        %2042 = vmatmul.mubr.bf16.gmra.mrb[0].mxu0 %v1914
        %v2043 = vpop.f32.mrb[0].mxu0
        %v2044 = vadd.f32 0.0, %v2043
        %v2045 = vpop.f32.mrb[0].mxu0
        %v2046 = vpop.f32.mrb[0].mxu0
        %v2047 = vadd.f32 0.0, %v2046
        %v2048 = vpop.f32.mrb[0].mxu0
        %2049 = vmatprep.mubr.bf16.mxu0 0
        %2050 = vmatmul.mubr.bf16.gmra.mrb[0].mxu0 %v1917
        %v2051 = vpop.f32.mrb[0].mxu0
        %v2052 = vadd.f32 0.0, %v2051
        %v2053 = vpop.f32.mrb[0].mxu0
        %v2054 = vpop.f32.mrb[0].mxu0
        %v2055 = vadd.f32 0.0, %v2054
        %v2056 = vpop.f32.mrb[0].mxu0
        %2057 = vmatprep.mubr.bf16.mxu0 0
        %2058 = vmatmul.mubr.bf16.gmra.mrb[0].mxu0 %v1920
        %v2059 = vpop.f32.mrb[0].mxu0
        %v2060 = vadd.f32 0.0, %v2059
        %v2061 = vpop.f32.mrb[0].mxu0
        %v2062 = vpop.f32.mrb[0].mxu0
        %v2063 = vadd.f32 0.0, %v2062
        %v2064 = vpop.f32.mrb[0].mxu0
        %2065 = vmatprep.mubr.bf16.mxu0 0
        %2066 = vmatmul.mubr.bf16.gmra.mrb[0].mxu0 %v1923
        %v2067 = vpop.f32.mrb[0].mxu0
        %v2068 = vadd.f32 0.0, %v2067
        %v2069 = vpop.f32.mrb[0].mxu0
        %v2070 = vpop.f32.mrb[0].mxu0
        %v2071 = vadd.f32 0.0, %v2070
        %v2072 = vpop.f32.mrb[0].mxu0
        %2073 = vmatprep.mubr.bf16.mxu0 0
        %2074 = vmatmul.mubr.bf16.gmra.mrb[0].mxu0 %v1926
        %v2075 = vpop.f32.mrb[0].mxu0
        %v2076 = vadd.f32 0.0, %v2075
        %v2077 = vpop.f32.mrb[0].mxu0
        %v2078 = vpop.f32.mrb[0].mxu0
        %v2079 = vadd.f32 0.0, %v2078
        %v2080 = vpop.f32.mrb[0].mxu0
        %2081 = vmatprep.mubr.bf16.mxu0 0
        %2082 = vmatmul.mubr.bf16.gmra.mrb[0].mxu0 %v1929
        %v2083 = vpop.f32.mrb[0].mxu0
        %v2084 = vadd.f32 0.0, %v2083
        %v2085 = vpop.f32.mrb[0].mxu0
        %v2086 = vpop.f32.mrb[0].mxu0
        %v2087 = vadd.f32 0.0, %v2086
        %v2088 = vpop.f32.mrb[0].mxu0
        %2089 = vmatprep.mubr.bf16.mxu0 0
        %2090 = vmatmul.mubr.bf16.gmra.mrb[0].mxu0 %v1932
        %v2091 = vpop.f32.mrb[0].mxu0
        %v2092 = vadd.f32 0.0, %v2091
        %v2093 = vpop.f32.mrb[0].mxu0
        %v2094 = vpop.f32.mrb[0].mxu0
        %v2095 = vadd.f32 0.0, %v2094
        %v2096 = vpop.f32.mrb[0].mxu0
        %2097 = vdwg.mxu0
        %v2098 = vadd.f32 %v1410, %v1972
        %v2099 = vadd.f32 %v1413, %v1975
        %v2100 = vadd.f32 %v1418, %v1980
        %v2101 = vadd.f32 %v1421, %v1983
        %v2102 = vadd.f32 %v1426, %v1988
        %v2103 = vadd.f32 %v1429, %v1991
        %v2104 = vadd.f32 %v1434, %v1996
        %v2105 = vadd.f32 %v1437, %v1999
        %v2106 = vadd.f32 %v1442, %v2004
        %v2107 = vadd.f32 %v1445, %v2007
        %v2108 = vadd.f32 %v1450, %v2012
        %v2109 = vadd.f32 %v1453, %v2015
        %v2110 = vadd.f32 %v1458, %v2020
        %v2111 = vadd.f32 %v1461, %v2023
        %v2112 = vadd.f32 %v1466, %v2028
        %v2113 = vadd.f32 %v1469, %v2031
        %v2114 = vadd.f32 %v1474, %v2036
        %v2115 = vadd.f32 %v1477, %v2039
        %v2116 = vadd.f32 %v1482, %v2044
        %v2117 = vadd.f32 %v1485, %v2047
        %v2118 = vadd.f32 %v1490, %v2052
        %v2119 = vadd.f32 %v1493, %v2055
        %v2120 = vadd.f32 %v1498, %v2060
        %v2121 = vadd.f32 %v1501, %v2063
        %v2122 = vadd.f32 %v1506, %v2068
        %v2123 = vadd.f32 %v1509, %v2071
        %v2124 = vadd.f32 %v1514, %v2076
        %v2125 = vadd.f32 %v1517, %v2079
        %v2126 = vadd.f32 %v1522, %v2084
        %v2127 = vadd.f32 %v1525, %v2087
        %v2128 = vadd.f32 %v1530, %v2092
        %v2129 = vadd.f32 %v1533, %v2095
        %v2130 = vld [vmem:[%s4] sm:$0x1]
        %v2132 = vlaneseq
        %v2133 = vshrl.u32 %v2132, 7
        %v2134 = vsub.s32 0, %v2133
        %v2135 = vrot.slane %v2130, %v2134
        %v2137 = vadd.f32 %v2098, %v2135
        %v2138 = vadd.f32 %v2099, %v2135
        %v2139 = vadd.f32 %v2100, %v2135
        %v2140 = vadd.f32 %v2101, %v2135
        %v2141 = vadd.f32 %v2102, %v2135
        %v2142 = vadd.f32 %v2103, %v2135
        %v2143 = vadd.f32 %v2104, %v2135
        %v2144 = vadd.f32 %v2105, %v2135
        %v2145 = vadd.f32 %v2106, %v2135
        %v2146 = vadd.f32 %v2107, %v2135
        %v2147 = vadd.f32 %v2108, %v2135
        %v2148 = vadd.f32 %v2109, %v2135
        %v2149 = vadd.f32 %v2110, %v2135
        %v2150 = vadd.f32 %v2111, %v2135
        %v2151 = vadd.f32 %v2112, %v2135
        %v2152 = vadd.f32 %v2113, %v2135
        %v2153 = vadd.f32 %v2114, %v2135
        %v2154 = vadd.f32 %v2115, %v2135
        %v2155 = vadd.f32 %v2116, %v2135
        %v2156 = vadd.f32 %v2117, %v2135
        %v2157 = vadd.f32 %v2118, %v2135
        %v2158 = vadd.f32 %v2119, %v2135
        %v2159 = vadd.f32 %v2120, %v2135
        %v2160 = vadd.f32 %v2121, %v2135
        %v2161 = vadd.f32 %v2122, %v2135
        %v2162 = vadd.f32 %v2123, %v2135
        %v2163 = vadd.f32 %v2124, %v2135
        %v2164 = vadd.f32 %v2125, %v2135
        %v2165 = vadd.f32 %v2126, %v2135
        %v2166 = vadd.f32 %v2127, %v2135
        %v2167 = vadd.f32 %v2128, %v2135
        %v2168 = vadd.f32 %v2129, %v2135
        %v2169 = vmax.f32 %v2137, 0.0
        %v2170 = vmax.f32 %v2138, 0.0
        %v2171 = vmax.f32 %v2139, 0.0
        %v2172 = vmax.f32 %v2140, 0.0
        %v2173 = vmax.f32 %v2141, 0.0
        %v2174 = vmax.f32 %v2142, 0.0
        %v2175 = vmax.f32 %v2143, 0.0
        %v2176 = vmax.f32 %v2144, 0.0
        %v2177 = vmax.f32 %v2145, 0.0
        %v2178 = vmax.f32 %v2146, 0.0
        %v2179 = vmax.f32 %v2147, 0.0
        %v2180 = vmax.f32 %v2148, 0.0
        %v2181 = vmax.f32 %v2149, 0.0
        %v2182 = vmax.f32 %v2150, 0.0
        %v2183 = vmax.f32 %v2151, 0.0
        %v2184 = vmax.f32 %v2152, 0.0
        %v2185 = vmax.f32 %v2153, 0.0
        %v2186 = vmax.f32 %v2154, 0.0
        %v2187 = vmax.f32 %v2155, 0.0
        %v2188 = vmax.f32 %v2156, 0.0
        %v2189 = vmax.f32 %v2157, 0.0
        %v2190 = vmax.f32 %v2158, 0.0
        %v2191 = vmax.f32 %v2159, 0.0
        %v2192 = vmax.f32 %v2160, 0.0
        %v2193 = vmax.f32 %v2161, 0.0
        %v2194 = vmax.f32 %v2162, 0.0
        %v2195 = vmax.f32 %v2163, 0.0
        %v2196 = vmax.f32 %v2164, 0.0
        %v2197 = vmax.f32 %v2165, 0.0
        %v2198 = vmax.f32 %v2166, 0.0
        %v2199 = vmax.f32 %v2167, 0.0
        %v2200 = vmax.f32 %v2168, 0.0
        %v2201 = vpack.c.bf16 %v2170, %v2169
        %v2202 = vpack.c.bf16 %v2172, %v2171
        %v2203 = vpack.c.bf16 %v2174, %v2173
        %v2204 = vpack.c.bf16 %v2176, %v2175
        %v2205 = vpack.c.bf16 %v2178, %v2177
        %v2206 = vpack.c.bf16 %v2180, %v2179
        %v2207 = vpack.c.bf16 %v2182, %v2181
        %v2208 = vpack.c.bf16 %v2184, %v2183
        %v2209 = vpack.c.bf16 %v2186, %v2185
        %v2210 = vpack.c.bf16 %v2188, %v2187
        %v2211 = vpack.c.bf16 %v2190, %v2189
        %v2212 = vpack.c.bf16 %v2192, %v2191
        %v2213 = vpack.c.bf16 %v2194, %v2193
        %v2214 = vpack.c.bf16 %v2196, %v2195
        %v2215 = vpack.c.bf16 %v2198, %v2197
        %v2216 = vpack.c.bf16 %v2200, %v2199
        %2217 = vst.msk [vmem:[#allocation3] sm:$0xff] %vm257, %v2201
        %2218 = vst.msk [vmem:[#allocation3 + $0x8] sm:$0xff] %vm257, %v2202
        %2219 = vst.msk [vmem:[#allocation3 + $0x10] sm:$0xff] %vm257, %v2203
        %2220 = vst.msk [vmem:[#allocation3 + $0x18] sm:$0xff] %vm257, %v2204
        %2221 = vst.msk [vmem:[#allocation3 + $0x20] sm:$0xff] %vm257, %v2205
        %2222 = vst.msk [vmem:[#allocation3 + $0x28] sm:$0xff] %vm257, %v2206
        %2223 = vst.msk [vmem:[#allocation3 + $0x30] sm:$0xff] %vm257, %v2207
        %2224 = vst.msk [vmem:[#allocation3 + $0x38] sm:$0xff] %vm257, %v2208
        %2225 = vst.msk [vmem:[#allocation3 + $0x40] sm:$0xff] %vm257, %v2209
        %2226 = vst.msk [vmem:[#allocation3 + $0x48] sm:$0xff] %vm257, %v2210
        %2227 = vst.msk [vmem:[#allocation3 + $0x50] sm:$0xff] %vm257, %v2211
        %2228 = vst.msk [vmem:[#allocation3 + $0x58] sm:$0xff] %vm257, %v2212
        %2229 = vst.msk [vmem:[#allocation3 + $0x60] sm:$0xff] %vm257, %v2213
        %2230 = vst.msk [vmem:[#allocation3 + $0x68] sm:$0xff] %vm257, %v2214
        %2231 = vst.msk [vmem:[#allocation3 + $0x70] sm:$0xff] %vm257, %v2215
        %2232 = vst.msk [vmem:[#allocation3 + $0x78] sm:$0xff] %vm257, %v2216
        %s2233 = scalar_lea.vmem %s253, 128
        %v2234 = vld [vmem:[%s2233] sm:$0xf]
        %v2235 = vld [vmem:[%s2233 + $0x4] sm:$0xf]
        %v2236 = vld [vmem:[%s2233 + $0x8] sm:$0xf]
        %v2237 = vld [vmem:[%s2233 + $0xc] sm:$0xf]
        %v2238 = vld [vmem:[%s2233 + $0x10] sm:$0xf]
        %v2239 = vld [vmem:[%s2233 + $0x14] sm:$0xf]
        %v2240 = vld [vmem:[%s2233 + $0x18] sm:$0xf]
        %v2241 = vld [vmem:[%s2233 + $0x1c] sm:$0xf]
        %v2242 = vld [vmem:[%s2233 + $0x20] sm:$0xf]
        %v2243 = vld [vmem:[%s2233 + $0x24] sm:$0xf]
        %v2244 = vld [vmem:[%s2233 + $0x28] sm:$0xf]
        %v2245 = vld [vmem:[%s2233 + $0x2c] sm:$0xf]
        %v2246 = vld [vmem:[%s2233 + $0x30] sm:$0xf]
        %v2247 = vld [vmem:[%s2233 + $0x34] sm:$0xf]
        %v2248 = vld [vmem:[%s2233 + $0x38] sm:$0xf]
        %v2249 = vld [vmem:[%s2233 + $0x3c] sm:$0xf]
        %v2250 = vld [vmem:[%s2233 + $0x40] sm:$0xf]
        %v2251 = vld [vmem:[%s2233 + $0x44] sm:$0xf]
        %v2252 = vld [vmem:[%s2233 + $0x48] sm:$0xf]
        %v2253 = vld [vmem:[%s2233 + $0x4c] sm:$0xf]
        %v2254 = vld [vmem:[%s2233 + $0x50] sm:$0xf]
        %v2255 = vld [vmem:[%s2233 + $0x54] sm:$0xf]
        %v2256 = vld [vmem:[%s2233 + $0x58] sm:$0xf]
        %v2257 = vld [vmem:[%s2233 + $0x5c] sm:$0xf]
        %v2258 = vld [vmem:[%s2233 + $0x60] sm:$0xf]
        %v2259 = vld [vmem:[%s2233 + $0x64] sm:$0xf]
        %v2260 = vld [vmem:[%s2233 + $0x68] sm:$0xf]
        %v2261 = vld [vmem:[%s2233 + $0x6c] sm:$0xf]
        %v2262 = vld [vmem:[%s2233 + $0x70] sm:$0xf]
        %v2263 = vld [vmem:[%s2233 + $0x74] sm:$0xf]
        %v2264 = vld [vmem:[%s2233 + $0x78] sm:$0xf]
        %v2265 = vld [vmem:[%s2233 + $0x7c] sm:$0xf]
        %v2266 = vunpack.c.l.bf16 %v2234
        %v2267 = vunpack.c.l.bf16 %v2235
        %v2268 = vunpack.c.l.bf16 %v2236
        %v2269 = vunpack.c.l.bf16 %v2237
        %v2270 = vunpack.c.l.bf16 %v2238
        %v2271 = vunpack.c.l.bf16 %v2239
        %v2272 = vunpack.c.l.bf16 %v2240
        %v2273 = vunpack.c.l.bf16 %v2241
        %v2274 = vunpack.c.l.bf16 %v2242
        %v2275 = vunpack.c.l.bf16 %v2243
        %v2276 = vunpack.c.l.bf16 %v2244
        %v2277 = vunpack.c.l.bf16 %v2245
        %v2278 = vunpack.c.l.bf16 %v2246
        %v2279 = vunpack.c.l.bf16 %v2247
        %v2280 = vunpack.c.l.bf16 %v2248
        %v2281 = vunpack.c.l.bf16 %v2249
        %v2282 = vunpack.c.l.bf16 %v2250
        %v2283 = vunpack.c.l.bf16 %v2251
        %v2284 = vunpack.c.l.bf16 %v2252
        %v2285 = vunpack.c.l.bf16 %v2253
        %v2286 = vunpack.c.l.bf16 %v2254
        %v2287 = vunpack.c.l.bf16 %v2255
        %v2288 = vunpack.c.l.bf16 %v2256
        %v2289 = vunpack.c.l.bf16 %v2257
        %v2290 = vunpack.c.l.bf16 %v2258
        %v2291 = vunpack.c.l.bf16 %v2259
        %v2292 = vunpack.c.l.bf16 %v2260
        %v2293 = vunpack.c.l.bf16 %v2261
        %v2294 = vunpack.c.l.bf16 %v2262
        %v2295 = vunpack.c.l.bf16 %v2263
        %v2296 = vunpack.c.l.bf16 %v2264
        %v2297 = vunpack.c.l.bf16 %v2265
        %2298 = vst.msk [vmem:[%s377 + $0x1] sm:$0xff] %vm257, %v2266
        %2299 = vst.msk [vmem:[%s377 + $0x9] sm:$0xff] %vm257, %v2267
        %2300 = vst.msk [vmem:[%s377 + $0x19] sm:$0xff] %vm257, %v2268
        %2301 = vst.msk [vmem:[%s377 + $0x21] sm:$0xff] %vm257, %v2269
        %2302 = vst.msk [vmem:[%s377 + $0x31] sm:$0xff] %vm257, %v2270
        %2303 = vst.msk [vmem:[%s377 + $0x39] sm:$0xff] %vm257, %v2271
        %2304 = vst.msk [vmem:[%s377 + $0x49] sm:$0xff] %vm257, %v2272
        %2305 = vst.msk [vmem:[%s377 + $0x51] sm:$0xff] %vm257, %v2273
        %2306 = vst.msk [vmem:[%s377 + $0x61] sm:$0xff] %vm257, %v2274
        %2307 = vst.msk [vmem:[%s377 + $0x69] sm:$0xff] %vm257, %v2275
        %2308 = vst.msk [vmem:[%s377 + $0x79] sm:$0xff] %vm257, %v2276
        %2309 = vst.msk [vmem:[%s377 + $0x81] sm:$0xff] %vm257, %v2277
        %2310 = vst.msk [vmem:[%s377 + $0x91] sm:$0xff] %vm257, %v2278
        %2311 = vst.msk [vmem:[%s377 + $0x99] sm:$0xff] %vm257, %v2279
        %2312 = vst.msk [vmem:[%s377 + $0xa9] sm:$0xff] %vm257, %v2280
        %2313 = vst.msk [vmem:[%s377 + $0xb1] sm:$0xff] %vm257, %v2281
        %2314 = vst.msk [vmem:[%s377 + $0xc1] sm:$0xff] %vm257, %v2282
        %2315 = vst.msk [vmem:[%s377 + $0xc9] sm:$0xff] %vm257, %v2283
        %2316 = vst.msk [vmem:[%s377 + $0xd9] sm:$0xff] %vm257, %v2284
        %2317 = vst.msk [vmem:[%s377 + $0xe1] sm:$0xff] %vm257, %v2285
        %2318 = vst.msk [vmem:[%s377 + $0xf1] sm:$0xff] %vm257, %v2286
        %2319 = vst.msk [vmem:[%s377 + $0xf9] sm:$0xff] %vm257, %v2287
        %2320 = vst.msk [vmem:[%s377 + $0x109] sm:$0xff] %vm257, %v2288
        %2321 = vst.msk [vmem:[%s377 + $0x111] sm:$0xff] %vm257, %v2289
        %2322 = vst.msk [vmem:[%s377 + $0x121] sm:$0xff] %vm257, %v2290
        %2323 = vst.msk [vmem:[%s377 + $0x129] sm:$0xff] %vm257, %v2291
        %2324 = vst.msk [vmem:[%s377 + $0x139] sm:$0xff] %vm257, %v2292
        %2325 = vst.msk [vmem:[%s377 + $0x141] sm:$0xff] %vm257, %v2293
        %2326 = vst.msk [vmem:[%s377 + $0x151] sm:$0xff] %vm257, %v2294
        %2327 = vst.msk [vmem:[%s377 + $0x159] sm:$0xff] %vm257, %v2295
        %2328 = vst.msk [vmem:[%s377 + $0x169] sm:$0xff] %vm257, %v2296
        %2329 = vst.msk [vmem:[%s377 + $0x171] sm:$0xff] %vm257, %v2297
        %v2330 = vld [vmem:[#allocation2] sm:$0xff]
        %v2331 = vld [vmem:[#allocation2 + $0x8] sm:$0xff]
        %v2332 = vld [vmem:[#allocation2 + $0x18] sm:$0xff]
        %v2333 = vld [vmem:[#allocation2 + $0x20] sm:$0xff]
        %v2334 = vld [vmem:[#allocation2 + $0x30] sm:$0xff]
        %v2335 = vld [vmem:[#allocation2 + $0x38] sm:$0xff]
        %v2336 = vld [vmem:[#allocation2 + $0x48] sm:$0xff]
        %v2337 = vld [vmem:[#allocation2 + $0x50] sm:$0xff]
        %v2338 = vld [vmem:[#allocation2 + $0x60] sm:$0xff]
        %v2339 = vld [vmem:[#allocation2 + $0x68] sm:$0xff]
        %v2340 = vld [vmem:[#allocation2 + $0x78] sm:$0xff]
        %v2341 = vld [vmem:[#allocation2 + $0x80] sm:$0xff]
        %v2342 = vld [vmem:[#allocation2 + $0x90] sm:$0xff]
        %v2343 = vld [vmem:[#allocation2 + $0x98] sm:$0xff]
        %v2344 = vld [vmem:[#allocation2 + $0xa8] sm:$0xff]
        %v2345 = vld [vmem:[#allocation2 + $0xb0] sm:$0xff]
        %v2346 = vld [vmem:[#allocation2 + $0xc0] sm:$0xff]
        %v2347 = vld [vmem:[#allocation2 + $0xc8] sm:$0xff]
        %v2348 = vld [vmem:[#allocation2 + $0xd8] sm:$0xff]
        %v2349 = vld [vmem:[#allocation2 + $0xe0] sm:$0xff]
        %v2350 = vld [vmem:[#allocation2 + $0xf0] sm:$0xff]
        %v2351 = vld [vmem:[#allocation2 + $0xf8] sm:$0xff]
        %v2352 = vld [vmem:[#allocation2 + $0x108] sm:$0xff]
        %v2353 = vld [vmem:[#allocation2 + $0x110] sm:$0xff]
        %v2354 = vld [vmem:[#allocation2 + $0x120] sm:$0xff]
        %v2355 = vld [vmem:[#allocation2 + $0x128] sm:$0xff]
        %v2356 = vld [vmem:[#allocation2 + $0x138] sm:$0xff]
        %v2357 = vld [vmem:[#allocation2 + $0x140] sm:$0xff]
        %v2358 = vld [vmem:[#allocation2 + $0x150] sm:$0xff]
        %v2359 = vld [vmem:[#allocation2 + $0x158] sm:$0xff]
        %v2360 = vld [vmem:[#allocation2 + $0x168] sm:$0xff]
        %v2361 = vld [vmem:[#allocation2 + $0x170] sm:$0xff]
        %v2362 = vld [vmem:[#allocation2 + $0x180] sm:$0xff]
        %v2363 = vld [vmem:[#allocation2 + $0x188] sm:$0xff]
        %v2364 = vld [vmem:[#allocation2 + $0x198] sm:$0xff]
        %v2365 = vld [vmem:[#allocation2 + $0x1a0] sm:$0xff]
        %2398 = vrot.lane.b32.xlu0 %v2332, 4
        %v2399 = vpop.permute.xlu0 %2398
        %2400 = vrot.lane.b32.xlu0 %v2333, 4
        %v2401 = vpop.permute.xlu0 %2400
        %2402 = vrot.lane.b32.xlu0 %v2334, 4
        %v2403 = vpop.permute.xlu0 %2402
        %2404 = vrot.lane.b32.xlu0 %v2335, 4
        %v2405 = vpop.permute.xlu0 %2404
        %2406 = vrot.lane.b32.xlu0 %v2336, 4
        %v2407 = vpop.permute.xlu0 %2406
        %2408 = vrot.lane.b32.xlu0 %v2337, 4
        %v2409 = vpop.permute.xlu0 %2408
        %2410 = vrot.lane.b32.xlu0 %v2338, 4
        %v2411 = vpop.permute.xlu0 %2410
        %2412 = vrot.lane.b32.xlu0 %v2339, 4
        %v2413 = vpop.permute.xlu0 %2412
        %2414 = vrot.lane.b32.xlu0 %v2340, 4
        %v2415 = vpop.permute.xlu0 %2414
        %2416 = vrot.lane.b32.xlu0 %v2341, 4
        %v2417 = vpop.permute.xlu0 %2416
        %2418 = vrot.lane.b32.xlu0 %v2342, 4
        %v2419 = vpop.permute.xlu0 %2418
        %2420 = vrot.lane.b32.xlu0 %v2343, 4
        %v2421 = vpop.permute.xlu0 %2420
        %2422 = vrot.lane.b32.xlu0 %v2344, 4
        %v2423 = vpop.permute.xlu0 %2422
        %2424 = vrot.lane.b32.xlu0 %v2345, 4
        %v2425 = vpop.permute.xlu0 %2424
        %2426 = vrot.lane.b32.xlu0 %v2346, 4
        %v2427 = vpop.permute.xlu0 %2426
        %2428 = vrot.lane.b32.xlu0 %v2347, 4
        %v2429 = vpop.permute.xlu0 %2428
        %2430 = vrot.lane.b32.xlu0 %v2348, 4
        %v2431 = vpop.permute.xlu0 %2430
        %2432 = vrot.lane.b32.xlu0 %v2349, 4
        %v2433 = vpop.permute.xlu0 %2432
        %2434 = vrot.lane.b32.xlu0 %v2350, 4
        %v2435 = vpop.permute.xlu0 %2434
        %2436 = vrot.lane.b32.xlu0 %v2351, 4
        %v2437 = vpop.permute.xlu0 %2436
        %2438 = vrot.lane.b32.xlu0 %v2352, 4
        %v2439 = vpop.permute.xlu0 %2438
        %2440 = vrot.lane.b32.xlu0 %v2353, 4
        %v2441 = vpop.permute.xlu0 %2440
        %2442 = vrot.lane.b32.xlu0 %v2354, 4
        %v2443 = vpop.permute.xlu0 %2442
        %2444 = vrot.lane.b32.xlu0 %v2355, 4
        %v2445 = vpop.permute.xlu0 %2444
        %2446 = vrot.lane.b32.xlu0 %v2356, 4
        %v2447 = vpop.permute.xlu0 %2446
        %2448 = vrot.lane.b32.xlu0 %v2357, 4
        %v2449 = vpop.permute.xlu0 %2448
        %2450 = vrot.lane.b32.xlu0 %v2358, 4
        %v2451 = vpop.permute.xlu0 %2450
        %2452 = vrot.lane.b32.xlu0 %v2359, 4
        %v2453 = vpop.permute.xlu0 %2452
        %2454 = vrot.lane.b32.xlu0 %v2360, 4
        %v2455 = vpop.permute.xlu0 %2454
        %2456 = vrot.lane.b32.xlu0 %v2361, 4
        %v2457 = vpop.permute.xlu0 %2456
        %2458 = vrot.lane.b32.xlu0 %v2362, 4
        %v2459 = vpop.permute.xlu0 %2458
        %2460 = vrot.lane.b32.xlu0 %v2363, 4
        %v2461 = vpop.permute.xlu0 %2460
        %2496 = vrot.lane.b32.xlu0 %v2334, 8
        %v2497 = vpop.permute.xlu0 %2496
        %2498 = vrot.lane.b32.xlu0 %v2335, 8
        %v2499 = vpop.permute.xlu0 %2498
        %2500 = vrot.lane.b32.xlu0 %v2336, 8
        %v2501 = vpop.permute.xlu0 %2500
        %2502 = vrot.lane.b32.xlu0 %v2337, 8
        %v2503 = vpop.permute.xlu0 %2502
        %2504 = vrot.lane.b32.xlu0 %v2338, 8
        %v2505 = vpop.permute.xlu0 %2504
        %2506 = vrot.lane.b32.xlu0 %v2339, 8
        %v2507 = vpop.permute.xlu0 %2506
        %2508 = vrot.lane.b32.xlu0 %v2340, 8
        %v2509 = vpop.permute.xlu0 %2508
        %2510 = vrot.lane.b32.xlu0 %v2341, 8
        %v2511 = vpop.permute.xlu0 %2510
        %2512 = vrot.lane.b32.xlu0 %v2342, 8
        %v2513 = vpop.permute.xlu0 %2512
        %2514 = vrot.lane.b32.xlu0 %v2343, 8
        %v2515 = vpop.permute.xlu0 %2514
        %2516 = vrot.lane.b32.xlu0 %v2344, 8
        %v2517 = vpop.permute.xlu0 %2516
        %2518 = vrot.lane.b32.xlu0 %v2345, 8
        %v2519 = vpop.permute.xlu0 %2518
        %2520 = vrot.lane.b32.xlu0 %v2346, 8
        %v2521 = vpop.permute.xlu0 %2520
        %2522 = vrot.lane.b32.xlu0 %v2347, 8
        %v2523 = vpop.permute.xlu0 %2522
        %2524 = vrot.lane.b32.xlu0 %v2348, 8
        %v2525 = vpop.permute.xlu0 %2524
        %2526 = vrot.lane.b32.xlu0 %v2349, 8
        %v2527 = vpop.permute.xlu0 %2526
        %2528 = vrot.lane.b32.xlu0 %v2350, 8
        %v2529 = vpop.permute.xlu0 %2528
        %2530 = vrot.lane.b32.xlu0 %v2351, 8
        %v2531 = vpop.permute.xlu0 %2530
        %2532 = vrot.lane.b32.xlu0 %v2352, 8
        %v2533 = vpop.permute.xlu0 %2532
        %2534 = vrot.lane.b32.xlu0 %v2353, 8
        %v2535 = vpop.permute.xlu0 %2534
        %2536 = vrot.lane.b32.xlu0 %v2354, 8
        %v2537 = vpop.permute.xlu0 %2536
        %2538 = vrot.lane.b32.xlu0 %v2355, 8
        %v2539 = vpop.permute.xlu0 %2538
        %2540 = vrot.lane.b32.xlu0 %v2356, 8
        %v2541 = vpop.permute.xlu0 %2540
        %2542 = vrot.lane.b32.xlu0 %v2357, 8
        %v2543 = vpop.permute.xlu0 %2542
        %2544 = vrot.lane.b32.xlu0 %v2358, 8
        %v2545 = vpop.permute.xlu0 %2544
        %2546 = vrot.lane.b32.xlu0 %v2359, 8
        %v2547 = vpop.permute.xlu0 %2546
        %2548 = vrot.lane.b32.xlu0 %v2360, 8
        %v2549 = vpop.permute.xlu0 %2548
        %2550 = vrot.lane.b32.xlu0 %v2361, 8
        %v2551 = vpop.permute.xlu0 %2550
        %2552 = vrot.lane.b32.xlu0 %v2362, 8
        %v2553 = vpop.permute.xlu0 %2552
        %2554 = vrot.lane.b32.xlu0 %v2363, 8
        %v2555 = vpop.permute.xlu0 %2554
        %2556 = vrot.lane.b32.xlu0 %v2364, 8
        %v2557 = vpop.permute.xlu0 %2556
        %2558 = vrot.lane.b32.xlu0 %v2365, 8
        %v2559 = vpop.permute.xlu0 %2558
        %v2592 = vsel %vm257, %v2330, %v2399
        %v2593 = vsel %vm257, %v2331, %v2401
        %v2594 = vsel %vm257, %v2332, %v2403
        %v2595 = vsel %vm257, %v2333, %v2405
        %v2596 = vsel %vm257, %v2334, %v2407
        %v2597 = vsel %vm257, %v2335, %v2409
        %v2598 = vsel %vm257, %v2336, %v2411
        %v2599 = vsel %vm257, %v2337, %v2413
        %v2600 = vsel %vm257, %v2338, %v2415
        %v2601 = vsel %vm257, %v2339, %v2417
        %v2602 = vsel %vm257, %v2340, %v2419
        %v2603 = vsel %vm257, %v2341, %v2421
        %v2604 = vsel %vm257, %v2342, %v2423
        %v2605 = vsel %vm257, %v2343, %v2425
        %v2606 = vsel %vm257, %v2344, %v2427
        %v2607 = vsel %vm257, %v2345, %v2429
        %v2608 = vsel %vm257, %v2346, %v2431
        %v2609 = vsel %vm257, %v2347, %v2433
        %v2610 = vsel %vm257, %v2348, %v2435
        %v2611 = vsel %vm257, %v2349, %v2437
        %v2612 = vsel %vm257, %v2350, %v2439
        %v2613 = vsel %vm257, %v2351, %v2441
        %v2614 = vsel %vm257, %v2352, %v2443
        %v2615 = vsel %vm257, %v2353, %v2445
        %v2616 = vsel %vm257, %v2354, %v2447
        %v2617 = vsel %vm257, %v2355, %v2449
        %v2618 = vsel %vm257, %v2356, %v2451
        %v2619 = vsel %vm257, %v2357, %v2453
        %v2620 = vsel %vm257, %v2358, %v2455
        %v2621 = vsel %vm257, %v2359, %v2457
        %v2622 = vsel %vm257, %v2360, %v2459
        %v2623 = vsel %vm257, %v2361, %v2461
        %v2624 = vsel %vm704, %v2592, %v2497
        %v2625 = vsel %vm704, %v2593, %v2499
        %v2626 = vsel %vm704, %v2594, %v2501
        %v2627 = vsel %vm704, %v2595, %v2503
        %v2628 = vsel %vm704, %v2596, %v2505
        %v2629 = vsel %vm704, %v2597, %v2507
        %v2630 = vsel %vm704, %v2598, %v2509
        %v2631 = vsel %vm704, %v2599, %v2511
        %v2632 = vsel %vm704, %v2600, %v2513
        %v2633 = vsel %vm704, %v2601, %v2515
        %v2634 = vsel %vm704, %v2602, %v2517
        %v2635 = vsel %vm704, %v2603, %v2519
        %v2636 = vsel %vm704, %v2604, %v2521
        %v2637 = vsel %vm704, %v2605, %v2523
        %v2638 = vsel %vm704, %v2606, %v2525
        %v2639 = vsel %vm704, %v2607, %v2527
        %v2640 = vsel %vm704, %v2608, %v2529
        %v2641 = vsel %vm704, %v2609, %v2531
        %v2642 = vsel %vm704, %v2610, %v2533
        %v2643 = vsel %vm704, %v2611, %v2535
        %v2644 = vsel %vm704, %v2612, %v2537
        %v2645 = vsel %vm704, %v2613, %v2539
        %v2646 = vsel %vm704, %v2614, %v2541
        %v2647 = vsel %vm704, %v2615, %v2543
        %v2648 = vsel %vm704, %v2616, %v2545
        %v2649 = vsel %vm704, %v2617, %v2547
        %v2650 = vsel %vm704, %v2618, %v2549
        %v2651 = vsel %vm704, %v2619, %v2551
        %v2652 = vsel %vm704, %v2620, %v2553
        %v2653 = vsel %vm704, %v2621, %v2555
        %v2654 = vsel %vm704, %v2622, %v2557
        %v2655 = vsel %vm704, %v2623, %v2559
        %v2656 = vpack.c.bf16 %v2625, %v2624
        %v2657 = vpack.c.bf16 %v2627, %v2626
        %v2658 = vpack.c.bf16 %v2629, %v2628
        %v2659 = vpack.c.bf16 %v2631, %v2630
        %v2660 = vpack.c.bf16 %v2633, %v2632
        %v2661 = vpack.c.bf16 %v2635, %v2634
        %v2662 = vpack.c.bf16 %v2637, %v2636
        %v2663 = vpack.c.bf16 %v2639, %v2638
        %v2664 = vpack.c.bf16 %v2641, %v2640
        %v2665 = vpack.c.bf16 %v2643, %v2642
        %v2666 = vpack.c.bf16 %v2645, %v2644
        %v2667 = vpack.c.bf16 %v2647, %v2646
        %v2668 = vpack.c.bf16 %v2649, %v2648
        %v2669 = vpack.c.bf16 %v2651, %v2650
        %v2670 = vpack.c.bf16 %v2653, %v2652
        %v2671 = vpack.c.bf16 %v2655, %v2654
        %v2672 = vld [vmem:[%s1] sm:$0xf]
        %v2673 = vld [vmem:[%s1 + $0x4] sm:$0x3]
        %v2674 = vld [vmem:[#allocation2 + $0x1] sm:$0xff]
        %v2675 = vld [vmem:[#allocation2 + $0x9] sm:$0xff]
        %v2676 = vld [vmem:[#allocation2 + $0x19] sm:$0xff]
        %v2677 = vld [vmem:[#allocation2 + $0x21] sm:$0xff]
        %v2678 = vld [vmem:[#allocation2 + $0x31] sm:$0xff]
        %v2679 = vld [vmem:[#allocation2 + $0x39] sm:$0xff]
        %v2680 = vld [vmem:[#allocation2 + $0x49] sm:$0xff]
        %v2681 = vld [vmem:[#allocation2 + $0x51] sm:$0xff]
        %v2682 = vld [vmem:[#allocation2 + $0x61] sm:$0xff]
        %v2683 = vld [vmem:[#allocation2 + $0x69] sm:$0xff]
        %v2684 = vld [vmem:[#allocation2 + $0x79] sm:$0xff]
        %v2685 = vld [vmem:[#allocation2 + $0x81] sm:$0xff]
        %v2686 = vld [vmem:[#allocation2 + $0x91] sm:$0xff]
        %v2687 = vld [vmem:[#allocation2 + $0x99] sm:$0xff]
        %v2688 = vld [vmem:[#allocation2 + $0xa9] sm:$0xff]
        %v2689 = vld [vmem:[#allocation2 + $0xb1] sm:$0xff]
        %v2690 = vld [vmem:[#allocation2 + $0xc1] sm:$0xff]
        %v2691 = vld [vmem:[#allocation2 + $0xc9] sm:$0xff]
        %v2692 = vld [vmem:[#allocation2 + $0xd9] sm:$0xff]
        %v2693 = vld [vmem:[#allocation2 + $0xe1] sm:$0xff]
        %v2694 = vld [vmem:[#allocation2 + $0xf1] sm:$0xff]
        %v2695 = vld [vmem:[#allocation2 + $0xf9] sm:$0xff]
        %v2696 = vld [vmem:[#allocation2 + $0x109] sm:$0xff]
        %v2697 = vld [vmem:[#allocation2 + $0x111] sm:$0xff]
        %v2698 = vld [vmem:[#allocation2 + $0x121] sm:$0xff]
        %v2699 = vld [vmem:[#allocation2 + $0x129] sm:$0xff]
        %v2700 = vld [vmem:[#allocation2 + $0x139] sm:$0xff]
        %v2701 = vld [vmem:[#allocation2 + $0x141] sm:$0xff]
        %v2702 = vld [vmem:[#allocation2 + $0x151] sm:$0xff]
        %v2703 = vld [vmem:[#allocation2 + $0x159] sm:$0xff]
        %v2704 = vld [vmem:[#allocation2 + $0x169] sm:$0xff]
        %v2705 = vld [vmem:[#allocation2 + $0x171] sm:$0xff]
        %v2706 = vld [vmem:[#allocation2 + $0x181] sm:$0xff]
        %v2707 = vld [vmem:[#allocation2 + $0x189] sm:$0xff]
        %v2708 = vld [vmem:[#allocation2 + $0x199] sm:$0xff]
        %v2709 = vld [vmem:[#allocation2 + $0x1a1] sm:$0xff]
        %2742 = vrot.lane.b32.xlu0 %v2676, 4
        %v2743 = vpop.permute.xlu0 %2742
        %2744 = vrot.lane.b32.xlu0 %v2677, 4
        %v2745 = vpop.permute.xlu0 %2744
        %2746 = vrot.lane.b32.xlu0 %v2678, 4
        %v2747 = vpop.permute.xlu0 %2746
        %2748 = vrot.lane.b32.xlu0 %v2679, 4
        %v2749 = vpop.permute.xlu0 %2748
        %2750 = vrot.lane.b32.xlu0 %v2680, 4
        %v2751 = vpop.permute.xlu0 %2750
        %2752 = vrot.lane.b32.xlu0 %v2681, 4
        %v2753 = vpop.permute.xlu0 %2752
        %2754 = vrot.lane.b32.xlu0 %v2682, 4
        %v2755 = vpop.permute.xlu0 %2754
        %2756 = vrot.lane.b32.xlu0 %v2683, 4
        %v2757 = vpop.permute.xlu0 %2756
        %2758 = vrot.lane.b32.xlu0 %v2684, 4
        %v2759 = vpop.permute.xlu0 %2758
        %2760 = vrot.lane.b32.xlu0 %v2685, 4
        %v2761 = vpop.permute.xlu0 %2760
        %2762 = vrot.lane.b32.xlu0 %v2686, 4
        %v2763 = vpop.permute.xlu0 %2762
        %2764 = vrot.lane.b32.xlu0 %v2687, 4
        %v2765 = vpop.permute.xlu0 %2764
        %2766 = vrot.lane.b32.xlu0 %v2688, 4
        %v2767 = vpop.permute.xlu0 %2766
        %2768 = vrot.lane.b32.xlu0 %v2689, 4
        %v2769 = vpop.permute.xlu0 %2768
        %2770 = vrot.lane.b32.xlu0 %v2690, 4
        %v2771 = vpop.permute.xlu0 %2770
        %2772 = vrot.lane.b32.xlu0 %v2691, 4
        %v2773 = vpop.permute.xlu0 %2772
        %2774 = vrot.lane.b32.xlu0 %v2692, 4
        %v2775 = vpop.permute.xlu0 %2774
        %2776 = vrot.lane.b32.xlu0 %v2693, 4
        %v2777 = vpop.permute.xlu0 %2776
        %2778 = vrot.lane.b32.xlu0 %v2694, 4
        %v2779 = vpop.permute.xlu0 %2778
        %2780 = vrot.lane.b32.xlu0 %v2695, 4
        %v2781 = vpop.permute.xlu0 %2780
        %2782 = vrot.lane.b32.xlu0 %v2696, 4
        %v2783 = vpop.permute.xlu0 %2782
        %2784 = vrot.lane.b32.xlu0 %v2697, 4
        %v2785 = vpop.permute.xlu0 %2784
        %2786 = vrot.lane.b32.xlu0 %v2698, 4
        %v2787 = vpop.permute.xlu0 %2786
        %2788 = vrot.lane.b32.xlu0 %v2699, 4
        %v2789 = vpop.permute.xlu0 %2788
        %2790 = vrot.lane.b32.xlu0 %v2700, 4
        %v2791 = vpop.permute.xlu0 %2790
        %2792 = vrot.lane.b32.xlu0 %v2701, 4
        %v2793 = vpop.permute.xlu0 %2792
        %2794 = vrot.lane.b32.xlu0 %v2702, 4
        %v2795 = vpop.permute.xlu0 %2794
        %2796 = vrot.lane.b32.xlu0 %v2703, 4
        %v2797 = vpop.permute.xlu0 %2796
        %2798 = vrot.lane.b32.xlu0 %v2704, 4
        %v2799 = vpop.permute.xlu0 %2798
        %2800 = vrot.lane.b32.xlu0 %v2705, 4
        %v2801 = vpop.permute.xlu0 %2800
        %2802 = vrot.lane.b32.xlu0 %v2706, 4
        %v2803 = vpop.permute.xlu0 %2802
        %2804 = vrot.lane.b32.xlu0 %v2707, 4
        %v2805 = vpop.permute.xlu0 %2804
        %2840 = vrot.lane.b32.xlu0 %v2678, 8
        %v2841 = vpop.permute.xlu0 %2840
        %2842 = vrot.lane.b32.xlu0 %v2679, 8
        %v2843 = vpop.permute.xlu0 %2842
        %2844 = vrot.lane.b32.xlu0 %v2680, 8
        %v2845 = vpop.permute.xlu0 %2844
        %2846 = vrot.lane.b32.xlu0 %v2681, 8
        %v2847 = vpop.permute.xlu0 %2846
        %2848 = vrot.lane.b32.xlu0 %v2682, 8
        %v2849 = vpop.permute.xlu0 %2848
        %2850 = vrot.lane.b32.xlu0 %v2683, 8
        %v2851 = vpop.permute.xlu0 %2850
        %2852 = vrot.lane.b32.xlu0 %v2684, 8
        %v2853 = vpop.permute.xlu0 %2852
        %2854 = vrot.lane.b32.xlu0 %v2685, 8
        %v2855 = vpop.permute.xlu0 %2854
        %2856 = vrot.lane.b32.xlu0 %v2686, 8
        %v2857 = vpop.permute.xlu0 %2856
        %2858 = vrot.lane.b32.xlu0 %v2687, 8
        %v2859 = vpop.permute.xlu0 %2858
        %2860 = vrot.lane.b32.xlu0 %v2688, 8
        %v2861 = vpop.permute.xlu0 %2860
        %2862 = vrot.lane.b32.xlu0 %v2689, 8
        %v2863 = vpop.permute.xlu0 %2862
        %2864 = vrot.lane.b32.xlu0 %v2690, 8
        %v2865 = vpop.permute.xlu0 %2864
        %2866 = vrot.lane.b32.xlu0 %v2691, 8
        %v2867 = vpop.permute.xlu0 %2866
        %2868 = vrot.lane.b32.xlu0 %v2692, 8
        %v2869 = vpop.permute.xlu0 %2868
        %2870 = vrot.lane.b32.xlu0 %v2693, 8
        %v2871 = vpop.permute.xlu0 %2870
        %2872 = vrot.lane.b32.xlu0 %v2694, 8
        %v2873 = vpop.permute.xlu0 %2872
        %2874 = vrot.lane.b32.xlu0 %v2695, 8
        %v2875 = vpop.permute.xlu0 %2874
        %2876 = vrot.lane.b32.xlu0 %v2696, 8
        %v2877 = vpop.permute.xlu0 %2876
        %2878 = vrot.lane.b32.xlu0 %v2697, 8
        %v2879 = vpop.permute.xlu0 %2878
        %2880 = vrot.lane.b32.xlu0 %v2698, 8
        %v2881 = vpop.permute.xlu0 %2880
        %2882 = vrot.lane.b32.xlu0 %v2699, 8
        %v2883 = vpop.permute.xlu0 %2882
        %2884 = vrot.lane.b32.xlu0 %v2700, 8
        %v2885 = vpop.permute.xlu0 %2884
        %2886 = vrot.lane.b32.xlu0 %v2701, 8
        %v2887 = vpop.permute.xlu0 %2886
        %2888 = vrot.lane.b32.xlu0 %v2702, 8
        %v2889 = vpop.permute.xlu0 %2888
        %2890 = vrot.lane.b32.xlu0 %v2703, 8
        %v2891 = vpop.permute.xlu0 %2890
        %2892 = vrot.lane.b32.xlu0 %v2704, 8
        %v2893 = vpop.permute.xlu0 %2892
        %2894 = vrot.lane.b32.xlu0 %v2705, 8
        %v2895 = vpop.permute.xlu0 %2894
        %2896 = vrot.lane.b32.xlu0 %v2706, 8
        %v2897 = vpop.permute.xlu0 %2896
        %2898 = vrot.lane.b32.xlu0 %v2707, 8
        %v2899 = vpop.permute.xlu0 %2898
        %2900 = vrot.lane.b32.xlu0 %v2708, 8
        %v2901 = vpop.permute.xlu0 %2900
        %2902 = vrot.lane.b32.xlu0 %v2709, 8
        %v2903 = vpop.permute.xlu0 %2902
        %v2936 = vsel %vm257, %v2674, %v2743
        %v2937 = vsel %vm257, %v2675, %v2745
        %v2938 = vsel %vm257, %v2676, %v2747
        %v2939 = vsel %vm257, %v2677, %v2749
        %v2940 = vsel %vm257, %v2678, %v2751
        %v2941 = vsel %vm257, %v2679, %v2753
        %v2942 = vsel %vm257, %v2680, %v2755
        %v2943 = vsel %vm257, %v2681, %v2757
        %v2944 = vsel %vm257, %v2682, %v2759
        %v2945 = vsel %vm257, %v2683, %v2761
        %v2946 = vsel %vm257, %v2684, %v2763
        %v2947 = vsel %vm257, %v2685, %v2765
        %v2948 = vsel %vm257, %v2686, %v2767
        %v2949 = vsel %vm257, %v2687, %v2769
        %v2950 = vsel %vm257, %v2688, %v2771
        %v2951 = vsel %vm257, %v2689, %v2773
        %v2952 = vsel %vm257, %v2690, %v2775
        %v2953 = vsel %vm257, %v2691, %v2777
        %v2954 = vsel %vm257, %v2692, %v2779
        %v2955 = vsel %vm257, %v2693, %v2781
        %v2956 = vsel %vm257, %v2694, %v2783
        %v2957 = vsel %vm257, %v2695, %v2785
        %v2958 = vsel %vm257, %v2696, %v2787
        %v2959 = vsel %vm257, %v2697, %v2789
        %v2960 = vsel %vm257, %v2698, %v2791
        %v2961 = vsel %vm257, %v2699, %v2793
        %v2962 = vsel %vm257, %v2700, %v2795
        %v2963 = vsel %vm257, %v2701, %v2797
        %v2964 = vsel %vm257, %v2702, %v2799
        %v2965 = vsel %vm257, %v2703, %v2801
        %v2966 = vsel %vm257, %v2704, %v2803
        %v2967 = vsel %vm257, %v2705, %v2805
        %v2968 = vsel %vm704, %v2936, %v2841
        %v2969 = vsel %vm704, %v2937, %v2843
        %v2970 = vsel %vm704, %v2938, %v2845
        %v2971 = vsel %vm704, %v2939, %v2847
        %v2972 = vsel %vm704, %v2940, %v2849
        %v2973 = vsel %vm704, %v2941, %v2851
        %v2974 = vsel %vm704, %v2942, %v2853
        %v2975 = vsel %vm704, %v2943, %v2855
        %v2976 = vsel %vm704, %v2944, %v2857
        %v2977 = vsel %vm704, %v2945, %v2859
        %v2978 = vsel %vm704, %v2946, %v2861
        %v2979 = vsel %vm704, %v2947, %v2863
        %v2980 = vsel %vm704, %v2948, %v2865
        %v2981 = vsel %vm704, %v2949, %v2867
        %v2982 = vsel %vm704, %v2950, %v2869
        %v2983 = vsel %vm704, %v2951, %v2871
        %v2984 = vsel %vm704, %v2952, %v2873
        %v2985 = vsel %vm704, %v2953, %v2875
        %v2986 = vsel %vm704, %v2954, %v2877
        %v2987 = vsel %vm704, %v2955, %v2879
        %v2988 = vsel %vm704, %v2956, %v2881
        %v2989 = vsel %vm704, %v2957, %v2883
        %v2990 = vsel %vm704, %v2958, %v2885
        %v2991 = vsel %vm704, %v2959, %v2887
        %v2992 = vsel %vm704, %v2960, %v2889
        %v2993 = vsel %vm704, %v2961, %v2891
        %v2994 = vsel %vm704, %v2962, %v2893
        %v2995 = vsel %vm704, %v2963, %v2895
        %v2996 = vsel %vm704, %v2964, %v2897
        %v2997 = vsel %vm704, %v2965, %v2899
        %v2998 = vsel %vm704, %v2966, %v2901
        %v2999 = vsel %vm704, %v2967, %v2903
        %v3000 = vpack.c.bf16 %v2969, %v2968
        %v3001 = vpack.c.bf16 %v2971, %v2970
        %v3002 = vpack.c.bf16 %v2973, %v2972
        %v3003 = vpack.c.bf16 %v2975, %v2974
        %v3004 = vpack.c.bf16 %v2977, %v2976
        %v3005 = vpack.c.bf16 %v2979, %v2978
        %v3006 = vpack.c.bf16 %v2981, %v2980
        %v3007 = vpack.c.bf16 %v2983, %v2982
        %v3008 = vpack.c.bf16 %v2985, %v2984
        %v3009 = vpack.c.bf16 %v2987, %v2986
        %v3010 = vpack.c.bf16 %v2989, %v2988
        %v3011 = vpack.c.bf16 %v2991, %v2990
        %v3012 = vpack.c.bf16 %v2993, %v2992
        %v3013 = vpack.c.bf16 %v2995, %v2994
        %v3014 = vpack.c.bf16 %v2997, %v2996
        %v3015 = vpack.c.bf16 %v2999, %v2998
        %v3016 = vld [vmem:[%s1097] sm:$0xf]
        %v3017 = vld [vmem:[%s1097 + $0x4] sm:$0x3]
        %v3020 = vunpack.c.l.b16 %v3016
        %v3021 = vunpack.c.l.b16 %v3017
        %v3022 = vpack.c.b16 %v3021, %v3020
        %v3024 = vsel %vm1105, %v3000, 0
        %v3027 = vsel %vm1105, %v3001, 0
        %v3030 = vsel %vm1105, %v3002, 0
        %v3033 = vsel %vm1105, %v3003, 0
        %v3036 = vsel %vm1105, %v3004, 0
        %v3039 = vsel %vm1105, %v3005, 0
        %v3042 = vsel %vm1105, %v3006, 0
        %v3045 = vsel %vm1105, %v3007, 0
        %v3048 = vsel %vm1105, %v3008, 0
        %v3051 = vsel %vm1105, %v3009, 0
        %v3054 = vsel %vm1105, %v3010, 0
        %v3057 = vsel %vm1105, %v3011, 0
        %v3060 = vsel %vm1105, %v3012, 0
        %v3063 = vsel %vm1105, %v3013, 0
        %v3066 = vsel %vm1105, %v3014, 0
        %v3069 = vsel %vm1105, %v3015, 0
        %v3072 = vsel %vm1154, %v3022, 0
        %3074 = vmatprep.subr.bf16.mxu0 0
        %3075 = vmatpush1.bf16.msra.mxu0 %v3072
        %3076 = vmatprep.subr.bf16.mxu0 0
        %3077 = vmatpush1.bf16.msra.mxu0 0
        %3078 = vmatprep.subr.bf16.mxu0 0
        %3079 = vmatpush1.bf16.msra.mxu0 0
        %3080 = vmatprep.subr.bf16.mxu0 0
        %3081 = vmatpush1.bf16.msra.mxu0 0
        %3082 = vmatprep.subr.bf16.mxu0 0
        %3083 = vmatpush1.bf16.msra.mxu0 0
        %3084 = vmatprep.subr.bf16.mxu0 0
        %3085 = vmatpush1.bf16.msra.mxu0 0
        %3086 = vmatprep.subr.bf16.mxu0 0
        %3087 = vmatpush1.bf16.msra.mxu0 0
        %3088 = vmatprep.subr.bf16.mxu0 0
        %3089 = vmatpush1.bf16.msra.mxu0 0
        %3090 = vmatprep.subr.bf16.mxu0 0
        %3091 = vmatpush1.bf16.msra.mxu0 0
        %3092 = vmatprep.subr.bf16.mxu0 0
        %3093 = vmatpush1.bf16.msra.mxu0 0
        %3094 = vmatprep.subr.bf16.mxu0 0
        %3095 = vmatpush1.bf16.msra.mxu0 0
        %3096 = vmatprep.subr.bf16.mxu0 0
        %3097 = vmatpush1.bf16.msra.mxu0 0
        %3098 = vmatprep.subr.bf16.mxu0 0
        %3099 = vmatpush1.bf16.msra.mxu0 0
        %3100 = vmatprep.subr.bf16.mxu0 0
        %3101 = vmatpush1.bf16.msra.mxu0 0
        %3102 = vmatprep.subr.bf16.mxu0 0
        %3103 = vmatpush1.bf16.msra.mxu0 0
        %3104 = vmatprep.subr.bf16.mxu0 0
        %3105 = vmatpush1.bf16.msra.mxu0 0
        %3106 = vmatprep.mubr.bf16.mxu0 0
        %3107 = vmatmul.mubr.bf16.gmra.mrb[0].mxu0 %v3024
        %v3108 = vpop.f32.mrb[0].mxu0
        %v3109 = vadd.f32 0.0, %v3108
        %v3110 = vpop.f32.mrb[0].mxu0
        %v3111 = vpop.f32.mrb[0].mxu0
        %v3112 = vadd.f32 0.0, %v3111
        %v3113 = vpop.f32.mrb[0].mxu0
        %3114 = vmatprep.mubr.bf16.mxu0 0
        %3115 = vmatmul.mubr.bf16.gmra.mrb[0].mxu0 %v3027
        %v3116 = vpop.f32.mrb[0].mxu0
        %v3117 = vadd.f32 0.0, %v3116
        %v3118 = vpop.f32.mrb[0].mxu0
        %v3119 = vpop.f32.mrb[0].mxu0
        %v3120 = vadd.f32 0.0, %v3119
        %v3121 = vpop.f32.mrb[0].mxu0
        %3122 = vmatprep.mubr.bf16.mxu0 0
        %3123 = vmatmul.mubr.bf16.gmra.mrb[0].mxu0 %v3030
        %v3124 = vpop.f32.mrb[0].mxu0
        %v3125 = vadd.f32 0.0, %v3124
        %v3126 = vpop.f32.mrb[0].mxu0
        %v3127 = vpop.f32.mrb[0].mxu0
        %v3128 = vadd.f32 0.0, %v3127
        %v3129 = vpop.f32.mrb[0].mxu0
        %3130 = vmatprep.mubr.bf16.mxu0 0
        %3131 = vmatmul.mubr.bf16.gmra.mrb[0].mxu0 %v3033
        %v3132 = vpop.f32.mrb[0].mxu0
        %v3133 = vadd.f32 0.0, %v3132
        %v3134 = vpop.f32.mrb[0].mxu0
        %v3135 = vpop.f32.mrb[0].mxu0
        %v3136 = vadd.f32 0.0, %v3135
        %v3137 = vpop.f32.mrb[0].mxu0
        %3138 = vmatprep.mubr.bf16.mxu0 0
        %3139 = vmatmul.mubr.bf16.gmra.mrb[0].mxu0 %v3036
        %v3140 = vpop.f32.mrb[0].mxu0
        %v3141 = vadd.f32 0.0, %v3140
        %v3142 = vpop.f32.mrb[0].mxu0
        %v3143 = vpop.f32.mrb[0].mxu0
        %v3144 = vadd.f32 0.0, %v3143
        %v3145 = vpop.f32.mrb[0].mxu0
        %3146 = vmatprep.mubr.bf16.mxu0 0
        %3147 = vmatmul.mubr.bf16.gmra.mrb[0].mxu0 %v3039
        %v3148 = vpop.f32.mrb[0].mxu0
        %v3149 = vadd.f32 0.0, %v3148
        %v3150 = vpop.f32.mrb[0].mxu0
        %v3151 = vpop.f32.mrb[0].mxu0
        %v3152 = vadd.f32 0.0, %v3151
        %v3153 = vpop.f32.mrb[0].mxu0
        %3154 = vmatprep.mubr.bf16.mxu0 0
        %3155 = vmatmul.mubr.bf16.gmra.mrb[0].mxu0 %v3042
        %v3156 = vpop.f32.mrb[0].mxu0
        %v3157 = vadd.f32 0.0, %v3156
        %v3158 = vpop.f32.mrb[0].mxu0
        %v3159 = vpop.f32.mrb[0].mxu0
        %v3160 = vadd.f32 0.0, %v3159
        %v3161 = vpop.f32.mrb[0].mxu0
        %3162 = vmatprep.mubr.bf16.mxu0 0
        %3163 = vmatmul.mubr.bf16.gmra.mrb[0].mxu0 %v3045
        %v3164 = vpop.f32.mrb[0].mxu0
        %v3165 = vadd.f32 0.0, %v3164
        %v3166 = vpop.f32.mrb[0].mxu0
        %v3167 = vpop.f32.mrb[0].mxu0
        %v3168 = vadd.f32 0.0, %v3167
        %v3169 = vpop.f32.mrb[0].mxu0
        %3170 = vmatprep.mubr.bf16.mxu0 0
        %3171 = vmatmul.mubr.bf16.gmra.mrb[0].mxu0 %v3048
        %v3172 = vpop.f32.mrb[0].mxu0
        %v3173 = vadd.f32 0.0, %v3172
        %v3174 = vpop.f32.mrb[0].mxu0
        %v3175 = vpop.f32.mrb[0].mxu0
        %v3176 = vadd.f32 0.0, %v3175
        %v3177 = vpop.f32.mrb[0].mxu0
        %3178 = vmatprep.mubr.bf16.mxu0 0
        %3179 = vmatmul.mubr.bf16.gmra.mrb[0].mxu0 %v3051
        %v3180 = vpop.f32.mrb[0].mxu0
        %v3181 = vadd.f32 0.0, %v3180
        %v3182 = vpop.f32.mrb[0].mxu0
        %v3183 = vpop.f32.mrb[0].mxu0
        %v3184 = vadd.f32 0.0, %v3183
        %v3185 = vpop.f32.mrb[0].mxu0
        %3186 = vmatprep.mubr.bf16.mxu0 0
        %3187 = vmatmul.mubr.bf16.gmra.mrb[0].mxu0 %v3054
        %v3188 = vpop.f32.mrb[0].mxu0
        %v3189 = vadd.f32 0.0, %v3188
        %v3190 = vpop.f32.mrb[0].mxu0
        %v3191 = vpop.f32.mrb[0].mxu0
        %v3192 = vadd.f32 0.0, %v3191
        %v3193 = vpop.f32.mrb[0].mxu0
        %3194 = vmatprep.mubr.bf16.mxu0 0
        %3195 = vmatmul.mubr.bf16.gmra.mrb[0].mxu0 %v3057
        %v3196 = vpop.f32.mrb[0].mxu0
        %v3197 = vadd.f32 0.0, %v3196
        %v3198 = vpop.f32.mrb[0].mxu0
        %v3199 = vpop.f32.mrb[0].mxu0
        %v3200 = vadd.f32 0.0, %v3199
        %v3201 = vpop.f32.mrb[0].mxu0
        %3202 = vmatprep.mubr.bf16.mxu0 0
        %3203 = vmatmul.mubr.bf16.gmra.mrb[0].mxu0 %v3060
        %v3204 = vpop.f32.mrb[0].mxu0
        %v3205 = vadd.f32 0.0, %v3204
        %v3206 = vpop.f32.mrb[0].mxu0
        %v3207 = vpop.f32.mrb[0].mxu0
        %v3208 = vadd.f32 0.0, %v3207
        %v3209 = vpop.f32.mrb[0].mxu0
        %3210 = vmatprep.mubr.bf16.mxu0 0
        %3211 = vmatmul.mubr.bf16.gmra.mrb[0].mxu0 %v3063
        %v3212 = vpop.f32.mrb[0].mxu0
        %v3213 = vadd.f32 0.0, %v3212
        %v3214 = vpop.f32.mrb[0].mxu0
        %v3215 = vpop.f32.mrb[0].mxu0
        %v3216 = vadd.f32 0.0, %v3215
        %v3217 = vpop.f32.mrb[0].mxu0
        %3218 = vmatprep.mubr.bf16.mxu0 0
        %3219 = vmatmul.mubr.bf16.gmra.mrb[0].mxu0 %v3066
        %v3220 = vpop.f32.mrb[0].mxu0
        %v3221 = vadd.f32 0.0, %v3220
        %v3222 = vpop.f32.mrb[0].mxu0
        %v3223 = vpop.f32.mrb[0].mxu0
        %v3224 = vadd.f32 0.0, %v3223
        %v3225 = vpop.f32.mrb[0].mxu0
        %3226 = vmatprep.mubr.bf16.mxu0 0
        %3227 = vmatmul.mubr.bf16.gmra.mrb[0].mxu0 %v3069
        %v3228 = vpop.f32.mrb[0].mxu0
        %v3229 = vadd.f32 0.0, %v3228
        %v3230 = vpop.f32.mrb[0].mxu0
        %v3231 = vpop.f32.mrb[0].mxu0
        %v3232 = vadd.f32 0.0, %v3231
        %v3233 = vpop.f32.mrb[0].mxu0
        %3234 = vdwg.mxu0
        %v3237 = vunpack.c.l.b16 %v2672
        %v3238 = vunpack.c.l.b16 %v2673
        %v3239 = vpack.c.b16 %v3238, %v3237
        %v3241 = vsel %vm1105, %v2656, 0
        %v3244 = vsel %vm1105, %v2657, 0
        %v3247 = vsel %vm1105, %v2658, 0
        %v3250 = vsel %vm1105, %v2659, 0
        %v3253 = vsel %vm1105, %v2660, 0
        %v3256 = vsel %vm1105, %v2661, 0
        %v3259 = vsel %vm1105, %v2662, 0
        %v3262 = vsel %vm1105, %v2663, 0
        %v3265 = vsel %vm1105, %v2664, 0
        %v3268 = vsel %vm1105, %v2665, 0
        %v3271 = vsel %vm1105, %v2666, 0
        %v3274 = vsel %vm1105, %v2667, 0
        %v3277 = vsel %vm1105, %v2668, 0
        %v3280 = vsel %vm1105, %v2669, 0
        %v3283 = vsel %vm1105, %v2670, 0
        %v3286 = vsel %vm1105, %v2671, 0
        %v3289 = vsel %vm1154, %v3239, 0
        %3291 = vmatprep.subr.bf16.mxu0 0
        %3292 = vmatpush1.bf16.msra.mxu0 %v3289
        %3293 = vmatprep.subr.bf16.mxu0 0
        %3294 = vmatpush1.bf16.msra.mxu0 0
        %3295 = vmatprep.subr.bf16.mxu0 0
        %3296 = vmatpush1.bf16.msra.mxu0 0
        %3297 = vmatprep.subr.bf16.mxu0 0
        %3298 = vmatpush1.bf16.msra.mxu0 0
        %3299 = vmatprep.subr.bf16.mxu0 0
        %3300 = vmatpush1.bf16.msra.mxu0 0
        %3301 = vmatprep.subr.bf16.mxu0 0
        %3302 = vmatpush1.bf16.msra.mxu0 0
        %3303 = vmatprep.subr.bf16.mxu0 0
        %3304 = vmatpush1.bf16.msra.mxu0 0
        %3305 = vmatprep.subr.bf16.mxu0 0
        %3306 = vmatpush1.bf16.msra.mxu0 0
        %3307 = vmatprep.subr.bf16.mxu0 0
        %3308 = vmatpush1.bf16.msra.mxu0 0
        %3309 = vmatprep.subr.bf16.mxu0 0
        %3310 = vmatpush1.bf16.msra.mxu0 0
        %3311 = vmatprep.subr.bf16.mxu0 0
        %3312 = vmatpush1.bf16.msra.mxu0 0
        %3313 = vmatprep.subr.bf16.mxu0 0
        %3314 = vmatpush1.bf16.msra.mxu0 0
        %3315 = vmatprep.subr.bf16.mxu0 0
        %3316 = vmatpush1.bf16.msra.mxu0 0
        %3317 = vmatprep.subr.bf16.mxu0 0
        %3318 = vmatpush1.bf16.msra.mxu0 0
        %3319 = vmatprep.subr.bf16.mxu0 0
        %3320 = vmatpush1.bf16.msra.mxu0 0
        %3321 = vmatprep.subr.bf16.mxu0 0
        %3322 = vmatpush1.bf16.msra.mxu0 0
        %3323 = vmatprep.mubr.bf16.mxu0 0
        %3324 = vmatmul.mubr.bf16.gmra.mrb[0].mxu0 %v3241
        %v3325 = vpop.f32.mrb[0].mxu0
        %v3326 = vadd.f32 %v3109, %v3325
        %v3327 = vpop.f32.mrb[0].mxu0
        %v3328 = vpop.f32.mrb[0].mxu0
        %v3329 = vadd.f32 %v3112, %v3328
        %v3330 = vpop.f32.mrb[0].mxu0
        %3331 = vmatprep.mubr.bf16.mxu0 0
        %3332 = vmatmul.mubr.bf16.gmra.mrb[0].mxu0 %v3244
        %v3333 = vpop.f32.mrb[0].mxu0
        %v3334 = vadd.f32 %v3117, %v3333
        %v3335 = vpop.f32.mrb[0].mxu0
        %v3336 = vpop.f32.mrb[0].mxu0
        %v3337 = vadd.f32 %v3120, %v3336
        %v3338 = vpop.f32.mrb[0].mxu0
        %3339 = vmatprep.mubr.bf16.mxu0 0
        %3340 = vmatmul.mubr.bf16.gmra.mrb[0].mxu0 %v3247
        %v3341 = vpop.f32.mrb[0].mxu0
        %v3342 = vadd.f32 %v3125, %v3341
        %v3343 = vpop.f32.mrb[0].mxu0
        %v3344 = vpop.f32.mrb[0].mxu0
        %v3345 = vadd.f32 %v3128, %v3344
        %v3346 = vpop.f32.mrb[0].mxu0
        %3347 = vmatprep.mubr.bf16.mxu0 0
        %3348 = vmatmul.mubr.bf16.gmra.mrb[0].mxu0 %v3250
        %v3349 = vpop.f32.mrb[0].mxu0
        %v3350 = vadd.f32 %v3133, %v3349
        %v3351 = vpop.f32.mrb[0].mxu0
        %v3352 = vpop.f32.mrb[0].mxu0
        %v3353 = vadd.f32 %v3136, %v3352
        %v3354 = vpop.f32.mrb[0].mxu0
        %3355 = vmatprep.mubr.bf16.mxu0 0
        %3356 = vmatmul.mubr.bf16.gmra.mrb[0].mxu0 %v3253
        %v3357 = vpop.f32.mrb[0].mxu0
        %v3358 = vadd.f32 %v3141, %v3357
        %v3359 = vpop.f32.mrb[0].mxu0
        %v3360 = vpop.f32.mrb[0].mxu0
        %v3361 = vadd.f32 %v3144, %v3360
        %v3362 = vpop.f32.mrb[0].mxu0
        %3363 = vmatprep.mubr.bf16.mxu0 0
        %3364 = vmatmul.mubr.bf16.gmra.mrb[0].mxu0 %v3256
        %v3365 = vpop.f32.mrb[0].mxu0
        %v3366 = vadd.f32 %v3149, %v3365
        %v3367 = vpop.f32.mrb[0].mxu0
        %v3368 = vpop.f32.mrb[0].mxu0
        %v3369 = vadd.f32 %v3152, %v3368
        %v3370 = vpop.f32.mrb[0].mxu0
        %3371 = vmatprep.mubr.bf16.mxu0 0
        %3372 = vmatmul.mubr.bf16.gmra.mrb[0].mxu0 %v3259
        %v3373 = vpop.f32.mrb[0].mxu0
        %v3374 = vadd.f32 %v3157, %v3373
        %v3375 = vpop.f32.mrb[0].mxu0
        %v3376 = vpop.f32.mrb[0].mxu0
        %v3377 = vadd.f32 %v3160, %v3376
        %v3378 = vpop.f32.mrb[0].mxu0
        %3379 = vmatprep.mubr.bf16.mxu0 0
        %3380 = vmatmul.mubr.bf16.gmra.mrb[0].mxu0 %v3262
        %v3381 = vpop.f32.mrb[0].mxu0
        %v3382 = vadd.f32 %v3165, %v3381
        %v3383 = vpop.f32.mrb[0].mxu0
        %v3384 = vpop.f32.mrb[0].mxu0
        %v3385 = vadd.f32 %v3168, %v3384
        %v3386 = vpop.f32.mrb[0].mxu0
        %3387 = vmatprep.mubr.bf16.mxu0 0
        %3388 = vmatmul.mubr.bf16.gmra.mrb[0].mxu0 %v3265
        %v3389 = vpop.f32.mrb[0].mxu0
        %v3390 = vadd.f32 %v3173, %v3389
        %v3391 = vpop.f32.mrb[0].mxu0
        %v3392 = vpop.f32.mrb[0].mxu0
        %v3393 = vadd.f32 %v3176, %v3392
        %v3394 = vpop.f32.mrb[0].mxu0
        %3395 = vmatprep.mubr.bf16.mxu0 0
        %3396 = vmatmul.mubr.bf16.gmra.mrb[0].mxu0 %v3268
        %v3397 = vpop.f32.mrb[0].mxu0
        %v3398 = vadd.f32 %v3181, %v3397
        %v3399 = vpop.f32.mrb[0].mxu0
        %v3400 = vpop.f32.mrb[0].mxu0
        %v3401 = vadd.f32 %v3184, %v3400
        %v3402 = vpop.f32.mrb[0].mxu0
        %3403 = vmatprep.mubr.bf16.mxu0 0
        %3404 = vmatmul.mubr.bf16.gmra.mrb[0].mxu0 %v3271
        %v3405 = vpop.f32.mrb[0].mxu0
        %v3406 = vadd.f32 %v3189, %v3405
        %v3407 = vpop.f32.mrb[0].mxu0
        %v3408 = vpop.f32.mrb[0].mxu0
        %v3409 = vadd.f32 %v3192, %v3408
        %v3410 = vpop.f32.mrb[0].mxu0
        %3411 = vmatprep.mubr.bf16.mxu0 0
        %3412 = vmatmul.mubr.bf16.gmra.mrb[0].mxu0 %v3274
        %v3413 = vpop.f32.mrb[0].mxu0
        %v3414 = vadd.f32 %v3197, %v3413
        %v3415 = vpop.f32.mrb[0].mxu0
        %v3416 = vpop.f32.mrb[0].mxu0
        %v3417 = vadd.f32 %v3200, %v3416
        %v3418 = vpop.f32.mrb[0].mxu0
        %3419 = vmatprep.mubr.bf16.mxu0 0
        %3420 = vmatmul.mubr.bf16.gmra.mrb[0].mxu0 %v3277
        %v3421 = vpop.f32.mrb[0].mxu0
        %v3422 = vadd.f32 %v3205, %v3421
        %v3423 = vpop.f32.mrb[0].mxu0
        %v3424 = vpop.f32.mrb[0].mxu0
        %v3425 = vadd.f32 %v3208, %v3424
        %v3426 = vpop.f32.mrb[0].mxu0
        %3427 = vmatprep.mubr.bf16.mxu0 0
        %3428 = vmatmul.mubr.bf16.gmra.mrb[0].mxu0 %v3280
        %v3429 = vpop.f32.mrb[0].mxu0
        %v3430 = vadd.f32 %v3213, %v3429
        %v3431 = vpop.f32.mrb[0].mxu0
        %v3432 = vpop.f32.mrb[0].mxu0
        %v3433 = vadd.f32 %v3216, %v3432
        %v3434 = vpop.f32.mrb[0].mxu0
        %3435 = vmatprep.mubr.bf16.mxu0 0
        %3436 = vmatmul.mubr.bf16.gmra.mrb[0].mxu0 %v3283
        %v3437 = vpop.f32.mrb[0].mxu0
        %v3438 = vadd.f32 %v3221, %v3437
        %v3439 = vpop.f32.mrb[0].mxu0
        %v3440 = vpop.f32.mrb[0].mxu0
        %v3441 = vadd.f32 %v3224, %v3440
        %v3442 = vpop.f32.mrb[0].mxu0
        %3443 = vmatprep.mubr.bf16.mxu0 0
        %3444 = vmatmul.mubr.bf16.gmra.mrb[0].mxu0 %v3286
        %v3445 = vpop.f32.mrb[0].mxu0
        %v3446 = vadd.f32 %v3229, %v3445
        %v3447 = vpop.f32.mrb[0].mxu0
        %v3448 = vpop.f32.mrb[0].mxu0
        %v3449 = vadd.f32 %v3232, %v3448
        %v3450 = vpop.f32.mrb[0].mxu0
        %3451 = vdwg.mxu0
        %v3452 = vld [vmem:[#allocation2 + $0x2] sm:$0xff]
        %v3453 = vld [vmem:[#allocation2 + $0xa] sm:$0xff]
        %v3454 = vld [vmem:[#allocation2 + $0x1a] sm:$0xff]
        %v3455 = vld [vmem:[#allocation2 + $0x22] sm:$0xff]
        %v3456 = vld [vmem:[#allocation2 + $0x32] sm:$0xff]
        %v3457 = vld [vmem:[#allocation2 + $0x3a] sm:$0xff]
        %v3458 = vld [vmem:[#allocation2 + $0x4a] sm:$0xff]
        %v3459 = vld [vmem:[#allocation2 + $0x52] sm:$0xff]
        %v3460 = vld [vmem:[#allocation2 + $0x62] sm:$0xff]
        %v3461 = vld [vmem:[#allocation2 + $0x6a] sm:$0xff]
        %v3462 = vld [vmem:[#allocation2 + $0x7a] sm:$0xff]
        %v3463 = vld [vmem:[#allocation2 + $0x82] sm:$0xff]
        %v3464 = vld [vmem:[#allocation2 + $0x92] sm:$0xff]
        %v3465 = vld [vmem:[#allocation2 + $0x9a] sm:$0xff]
        %v3466 = vld [vmem:[#allocation2 + $0xaa] sm:$0xff]
        %v3467 = vld [vmem:[#allocation2 + $0xb2] sm:$0xff]
        %v3468 = vld [vmem:[#allocation2 + $0xc2] sm:$0xff]
        %v3469 = vld [vmem:[#allocation2 + $0xca] sm:$0xff]
        %v3470 = vld [vmem:[#allocation2 + $0xda] sm:$0xff]
        %v3471 = vld [vmem:[#allocation2 + $0xe2] sm:$0xff]
        %v3472 = vld [vmem:[#allocation2 + $0xf2] sm:$0xff]
        %v3473 = vld [vmem:[#allocation2 + $0xfa] sm:$0xff]
        %v3474 = vld [vmem:[#allocation2 + $0x10a] sm:$0xff]
        %v3475 = vld [vmem:[#allocation2 + $0x112] sm:$0xff]
        %v3476 = vld [vmem:[#allocation2 + $0x122] sm:$0xff]
        %v3477 = vld [vmem:[#allocation2 + $0x12a] sm:$0xff]
        %v3478 = vld [vmem:[#allocation2 + $0x13a] sm:$0xff]
        %v3479 = vld [vmem:[#allocation2 + $0x142] sm:$0xff]
        %v3480 = vld [vmem:[#allocation2 + $0x152] sm:$0xff]
        %v3481 = vld [vmem:[#allocation2 + $0x15a] sm:$0xff]
        %v3482 = vld [vmem:[#allocation2 + $0x16a] sm:$0xff]
        %v3483 = vld [vmem:[#allocation2 + $0x172] sm:$0xff]
        %v3484 = vld [vmem:[#allocation2 + $0x182] sm:$0xff]
        %v3485 = vld [vmem:[#allocation2 + $0x18a] sm:$0xff]
        %v3486 = vld [vmem:[#allocation2 + $0x19a] sm:$0xff]
        %v3487 = vld [vmem:[#allocation2 + $0x1a2] sm:$0xff]
        %3520 = vrot.lane.b32.xlu0 %v3454, 4
        %v3521 = vpop.permute.xlu0 %3520
        %3522 = vrot.lane.b32.xlu0 %v3455, 4
        %v3523 = vpop.permute.xlu0 %3522
        %3524 = vrot.lane.b32.xlu0 %v3456, 4
        %v3525 = vpop.permute.xlu0 %3524
        %3526 = vrot.lane.b32.xlu0 %v3457, 4
        %v3527 = vpop.permute.xlu0 %3526
        %3528 = vrot.lane.b32.xlu0 %v3458, 4
        %v3529 = vpop.permute.xlu0 %3528
        %3530 = vrot.lane.b32.xlu0 %v3459, 4
        %v3531 = vpop.permute.xlu0 %3530
        %3532 = vrot.lane.b32.xlu0 %v3460, 4
        %v3533 = vpop.permute.xlu0 %3532
        %3534 = vrot.lane.b32.xlu0 %v3461, 4
        %v3535 = vpop.permute.xlu0 %3534
        %3536 = vrot.lane.b32.xlu0 %v3462, 4
        %v3537 = vpop.permute.xlu0 %3536
        %3538 = vrot.lane.b32.xlu0 %v3463, 4
        %v3539 = vpop.permute.xlu0 %3538
        %3540 = vrot.lane.b32.xlu0 %v3464, 4
        %v3541 = vpop.permute.xlu0 %3540
        %3542 = vrot.lane.b32.xlu0 %v3465, 4
        %v3543 = vpop.permute.xlu0 %3542
        %3544 = vrot.lane.b32.xlu0 %v3466, 4
        %v3545 = vpop.permute.xlu0 %3544
        %3546 = vrot.lane.b32.xlu0 %v3467, 4
        %v3547 = vpop.permute.xlu0 %3546
        %3548 = vrot.lane.b32.xlu0 %v3468, 4
        %v3549 = vpop.permute.xlu0 %3548
        %3550 = vrot.lane.b32.xlu0 %v3469, 4
        %v3551 = vpop.permute.xlu0 %3550
        %3552 = vrot.lane.b32.xlu0 %v3470, 4
        %v3553 = vpop.permute.xlu0 %3552
        %3554 = vrot.lane.b32.xlu0 %v3471, 4
        %v3555 = vpop.permute.xlu0 %3554
        %3556 = vrot.lane.b32.xlu0 %v3472, 4
        %v3557 = vpop.permute.xlu0 %3556
        %3558 = vrot.lane.b32.xlu0 %v3473, 4
        %v3559 = vpop.permute.xlu0 %3558
        %3560 = vrot.lane.b32.xlu0 %v3474, 4
        %v3561 = vpop.permute.xlu0 %3560
        %3562 = vrot.lane.b32.xlu0 %v3475, 4
        %v3563 = vpop.permute.xlu0 %3562
        %3564 = vrot.lane.b32.xlu0 %v3476, 4
        %v3565 = vpop.permute.xlu0 %3564
        %3566 = vrot.lane.b32.xlu0 %v3477, 4
        %v3567 = vpop.permute.xlu0 %3566
        %3568 = vrot.lane.b32.xlu0 %v3478, 4
        %v3569 = vpop.permute.xlu0 %3568
        %3570 = vrot.lane.b32.xlu0 %v3479, 4
        %v3571 = vpop.permute.xlu0 %3570
        %3572 = vrot.lane.b32.xlu0 %v3480, 4
        %v3573 = vpop.permute.xlu0 %3572
        %3574 = vrot.lane.b32.xlu0 %v3481, 4
        %v3575 = vpop.permute.xlu0 %3574
        %3576 = vrot.lane.b32.xlu0 %v3482, 4
        %v3577 = vpop.permute.xlu0 %3576
        %3578 = vrot.lane.b32.xlu0 %v3483, 4
        %v3579 = vpop.permute.xlu0 %3578
        %3580 = vrot.lane.b32.xlu0 %v3484, 4
        %v3581 = vpop.permute.xlu0 %3580
        %3582 = vrot.lane.b32.xlu0 %v3485, 4
        %v3583 = vpop.permute.xlu0 %3582
        %3618 = vrot.lane.b32.xlu0 %v3456, 8
        %v3619 = vpop.permute.xlu0 %3618
        %3620 = vrot.lane.b32.xlu0 %v3457, 8
        %v3621 = vpop.permute.xlu0 %3620
        %3622 = vrot.lane.b32.xlu0 %v3458, 8
        %v3623 = vpop.permute.xlu0 %3622
        %3624 = vrot.lane.b32.xlu0 %v3459, 8
        %v3625 = vpop.permute.xlu0 %3624
        %3626 = vrot.lane.b32.xlu0 %v3460, 8
        %v3627 = vpop.permute.xlu0 %3626
        %3628 = vrot.lane.b32.xlu0 %v3461, 8
        %v3629 = vpop.permute.xlu0 %3628
        %3630 = vrot.lane.b32.xlu0 %v3462, 8
        %v3631 = vpop.permute.xlu0 %3630
        %3632 = vrot.lane.b32.xlu0 %v3463, 8
        %v3633 = vpop.permute.xlu0 %3632
        %3634 = vrot.lane.b32.xlu0 %v3464, 8
        %v3635 = vpop.permute.xlu0 %3634
        %3636 = vrot.lane.b32.xlu0 %v3465, 8
        %v3637 = vpop.permute.xlu0 %3636
        %3638 = vrot.lane.b32.xlu0 %v3466, 8
        %v3639 = vpop.permute.xlu0 %3638
        %3640 = vrot.lane.b32.xlu0 %v3467, 8
        %v3641 = vpop.permute.xlu0 %3640
        %3642 = vrot.lane.b32.xlu0 %v3468, 8
        %v3643 = vpop.permute.xlu0 %3642
        %3644 = vrot.lane.b32.xlu0 %v3469, 8
        %v3645 = vpop.permute.xlu0 %3644
        %3646 = vrot.lane.b32.xlu0 %v3470, 8
        %v3647 = vpop.permute.xlu0 %3646
        %3648 = vrot.lane.b32.xlu0 %v3471, 8
        %v3649 = vpop.permute.xlu0 %3648
        %3650 = vrot.lane.b32.xlu0 %v3472, 8
        %v3651 = vpop.permute.xlu0 %3650
        %3652 = vrot.lane.b32.xlu0 %v3473, 8
        %v3653 = vpop.permute.xlu0 %3652
        %3654 = vrot.lane.b32.xlu0 %v3474, 8
        %v3655 = vpop.permute.xlu0 %3654
        %3656 = vrot.lane.b32.xlu0 %v3475, 8
        %v3657 = vpop.permute.xlu0 %3656
        %3658 = vrot.lane.b32.xlu0 %v3476, 8
        %v3659 = vpop.permute.xlu0 %3658
        %3660 = vrot.lane.b32.xlu0 %v3477, 8
        %v3661 = vpop.permute.xlu0 %3660
        %3662 = vrot.lane.b32.xlu0 %v3478, 8
        %v3663 = vpop.permute.xlu0 %3662
        %3664 = vrot.lane.b32.xlu0 %v3479, 8
        %v3665 = vpop.permute.xlu0 %3664
        %3666 = vrot.lane.b32.xlu0 %v3480, 8
        %v3667 = vpop.permute.xlu0 %3666
        %3668 = vrot.lane.b32.xlu0 %v3481, 8
        %v3669 = vpop.permute.xlu0 %3668
        %3670 = vrot.lane.b32.xlu0 %v3482, 8
        %v3671 = vpop.permute.xlu0 %3670
        %3672 = vrot.lane.b32.xlu0 %v3483, 8
        %v3673 = vpop.permute.xlu0 %3672
        %3674 = vrot.lane.b32.xlu0 %v3484, 8
        %v3675 = vpop.permute.xlu0 %3674
        %3676 = vrot.lane.b32.xlu0 %v3485, 8
        %v3677 = vpop.permute.xlu0 %3676
        %3678 = vrot.lane.b32.xlu0 %v3486, 8
        %v3679 = vpop.permute.xlu0 %3678
        %3680 = vrot.lane.b32.xlu0 %v3487, 8
        %v3681 = vpop.permute.xlu0 %3680
        %v3714 = vsel %vm257, %v3452, %v3521
        %v3715 = vsel %vm257, %v3453, %v3523
        %v3716 = vsel %vm257, %v3454, %v3525
        %v3717 = vsel %vm257, %v3455, %v3527
        %v3718 = vsel %vm257, %v3456, %v3529
        %v3719 = vsel %vm257, %v3457, %v3531
        %v3720 = vsel %vm257, %v3458, %v3533
        %v3721 = vsel %vm257, %v3459, %v3535
        %v3722 = vsel %vm257, %v3460, %v3537
        %v3723 = vsel %vm257, %v3461, %v3539
        %v3724 = vsel %vm257, %v3462, %v3541
        %v3725 = vsel %vm257, %v3463, %v3543
        %v3726 = vsel %vm257, %v3464, %v3545
        %v3727 = vsel %vm257, %v3465, %v3547
        %v3728 = vsel %vm257, %v3466, %v3549
        %v3729 = vsel %vm257, %v3467, %v3551
        %v3730 = vsel %vm257, %v3468, %v3553
        %v3731 = vsel %vm257, %v3469, %v3555
        %v3732 = vsel %vm257, %v3470, %v3557
        %v3733 = vsel %vm257, %v3471, %v3559
        %v3734 = vsel %vm257, %v3472, %v3561
        %v3735 = vsel %vm257, %v3473, %v3563
        %v3736 = vsel %vm257, %v3474, %v3565
        %v3737 = vsel %vm257, %v3475, %v3567
        %v3738 = vsel %vm257, %v3476, %v3569
        %v3739 = vsel %vm257, %v3477, %v3571
        %v3740 = vsel %vm257, %v3478, %v3573
        %v3741 = vsel %vm257, %v3479, %v3575
        %v3742 = vsel %vm257, %v3480, %v3577
        %v3743 = vsel %vm257, %v3481, %v3579
        %v3744 = vsel %vm257, %v3482, %v3581
        %v3745 = vsel %vm257, %v3483, %v3583
        %v3746 = vsel %vm704, %v3714, %v3619
        %v3747 = vsel %vm704, %v3715, %v3621
        %v3748 = vsel %vm704, %v3716, %v3623
        %v3749 = vsel %vm704, %v3717, %v3625
        %v3750 = vsel %vm704, %v3718, %v3627
        %v3751 = vsel %vm704, %v3719, %v3629
        %v3752 = vsel %vm704, %v3720, %v3631
        %v3753 = vsel %vm704, %v3721, %v3633
        %v3754 = vsel %vm704, %v3722, %v3635
        %v3755 = vsel %vm704, %v3723, %v3637
        %v3756 = vsel %vm704, %v3724, %v3639
        %v3757 = vsel %vm704, %v3725, %v3641
        %v3758 = vsel %vm704, %v3726, %v3643
        %v3759 = vsel %vm704, %v3727, %v3645
        %v3760 = vsel %vm704, %v3728, %v3647
        %v3761 = vsel %vm704, %v3729, %v3649
        %v3762 = vsel %vm704, %v3730, %v3651
        %v3763 = vsel %vm704, %v3731, %v3653
        %v3764 = vsel %vm704, %v3732, %v3655
        %v3765 = vsel %vm704, %v3733, %v3657
        %v3766 = vsel %vm704, %v3734, %v3659
        %v3767 = vsel %vm704, %v3735, %v3661
        %v3768 = vsel %vm704, %v3736, %v3663
        %v3769 = vsel %vm704, %v3737, %v3665
        %v3770 = vsel %vm704, %v3738, %v3667
        %v3771 = vsel %vm704, %v3739, %v3669
        %v3772 = vsel %vm704, %v3740, %v3671
        %v3773 = vsel %vm704, %v3741, %v3673
        %v3774 = vsel %vm704, %v3742, %v3675
        %v3775 = vsel %vm704, %v3743, %v3677
        %v3776 = vsel %vm704, %v3744, %v3679
        %v3777 = vsel %vm704, %v3745, %v3681
        %v3778 = vpack.c.bf16 %v3747, %v3746
        %v3779 = vpack.c.bf16 %v3749, %v3748
        %v3780 = vpack.c.bf16 %v3751, %v3750
        %v3781 = vpack.c.bf16 %v3753, %v3752
        %v3782 = vpack.c.bf16 %v3755, %v3754
        %v3783 = vpack.c.bf16 %v3757, %v3756
        %v3784 = vpack.c.bf16 %v3759, %v3758
        %v3785 = vpack.c.bf16 %v3761, %v3760
        %v3786 = vpack.c.bf16 %v3763, %v3762
        %v3787 = vpack.c.bf16 %v3765, %v3764
        %v3788 = vpack.c.bf16 %v3767, %v3766
        %v3789 = vpack.c.bf16 %v3769, %v3768
        %v3790 = vpack.c.bf16 %v3771, %v3770
        %v3791 = vpack.c.bf16 %v3773, %v3772
        %v3792 = vpack.c.bf16 %v3775, %v3774
        %v3793 = vpack.c.bf16 %v3777, %v3776
        %v3794 = vld [vmem:[%s1878] sm:$0xf]
        %v3795 = vld [vmem:[%s1878 + $0x4] sm:$0x3]
        %v3798 = vunpack.c.l.b16 %v3794
        %v3799 = vunpack.c.l.b16 %v3795
        %v3800 = vpack.c.b16 %v3799, %v3798
        %v3802 = vsel %vm1105, %v3778, 0
        %v3805 = vsel %vm1105, %v3779, 0
        %v3808 = vsel %vm1105, %v3780, 0
        %v3811 = vsel %vm1105, %v3781, 0
        %v3814 = vsel %vm1105, %v3782, 0
        %v3817 = vsel %vm1105, %v3783, 0
        %v3820 = vsel %vm1105, %v3784, 0
        %v3823 = vsel %vm1105, %v3785, 0
        %v3826 = vsel %vm1105, %v3786, 0
        %v3829 = vsel %vm1105, %v3787, 0
        %v3832 = vsel %vm1105, %v3788, 0
        %v3835 = vsel %vm1105, %v3789, 0
        %v3838 = vsel %vm1105, %v3790, 0
        %v3841 = vsel %vm1105, %v3791, 0
        %v3844 = vsel %vm1105, %v3792, 0
        %v3847 = vsel %vm1105, %v3793, 0
        %v3850 = vsel %vm1154, %v3800, 0
        %3852 = vmatprep.subr.bf16.mxu0 0
        %3853 = vmatpush1.bf16.msra.mxu0 %v3850
        %3854 = vmatprep.subr.bf16.mxu0 0
        %3855 = vmatpush1.bf16.msra.mxu0 0
        %3856 = vmatprep.subr.bf16.mxu0 0
        %3857 = vmatpush1.bf16.msra.mxu0 0
        %3858 = vmatprep.subr.bf16.mxu0 0
        %3859 = vmatpush1.bf16.msra.mxu0 0
        %3860 = vmatprep.subr.bf16.mxu0 0
        %3861 = vmatpush1.bf16.msra.mxu0 0
        %3862 = vmatprep.subr.bf16.mxu0 0
        %3863 = vmatpush1.bf16.msra.mxu0 0
        %3864 = vmatprep.subr.bf16.mxu0 0
        %3865 = vmatpush1.bf16.msra.mxu0 0
        %3866 = vmatprep.subr.bf16.mxu0 0
        %3867 = vmatpush1.bf16.msra.mxu0 0
        %3868 = vmatprep.subr.bf16.mxu0 0
        %3869 = vmatpush1.bf16.msra.mxu0 0
        %3870 = vmatprep.subr.bf16.mxu0 0
        %3871 = vmatpush1.bf16.msra.mxu0 0
        %3872 = vmatprep.subr.bf16.mxu0 0
        %3873 = vmatpush1.bf16.msra.mxu0 0
        %3874 = vmatprep.subr.bf16.mxu0 0
        %3875 = vmatpush1.bf16.msra.mxu0 0
        %3876 = vmatprep.subr.bf16.mxu0 0
        %3877 = vmatpush1.bf16.msra.mxu0 0
        %3878 = vmatprep.subr.bf16.mxu0 0
        %3879 = vmatpush1.bf16.msra.mxu0 0
        %3880 = vmatprep.subr.bf16.mxu0 0
        %3881 = vmatpush1.bf16.msra.mxu0 0
        %3882 = vmatprep.subr.bf16.mxu0 0
        %3883 = vmatpush1.bf16.msra.mxu0 0
        %3884 = vmatprep.mubr.bf16.mxu0 0
        %3885 = vmatmul.mubr.bf16.gmra.mrb[0].mxu0 %v3802
        %v3886 = vpop.f32.mrb[0].mxu0
        %v3887 = vadd.f32 0.0, %v3886
        %v3888 = vpop.f32.mrb[0].mxu0
        %v3889 = vpop.f32.mrb[0].mxu0
        %v3890 = vadd.f32 0.0, %v3889
        %v3891 = vpop.f32.mrb[0].mxu0
        %3892 = vmatprep.mubr.bf16.mxu0 0
        %3893 = vmatmul.mubr.bf16.gmra.mrb[0].mxu0 %v3805
        %v3894 = vpop.f32.mrb[0].mxu0
        %v3895 = vadd.f32 0.0, %v3894
        %v3896 = vpop.f32.mrb[0].mxu0
        %v3897 = vpop.f32.mrb[0].mxu0
        %v3898 = vadd.f32 0.0, %v3897
        %v3899 = vpop.f32.mrb[0].mxu0
        %3900 = vmatprep.mubr.bf16.mxu0 0
        %3901 = vmatmul.mubr.bf16.gmra.mrb[0].mxu0 %v3808
        %v3902 = vpop.f32.mrb[0].mxu0
        %v3903 = vadd.f32 0.0, %v3902
        %v3904 = vpop.f32.mrb[0].mxu0
        %v3905 = vpop.f32.mrb[0].mxu0
        %v3906 = vadd.f32 0.0, %v3905
        %v3907 = vpop.f32.mrb[0].mxu0
        %3908 = vmatprep.mubr.bf16.mxu0 0
        %3909 = vmatmul.mubr.bf16.gmra.mrb[0].mxu0 %v3811
        %v3910 = vpop.f32.mrb[0].mxu0
        %v3911 = vadd.f32 0.0, %v3910
        %v3912 = vpop.f32.mrb[0].mxu0
        %v3913 = vpop.f32.mrb[0].mxu0
        %v3914 = vadd.f32 0.0, %v3913
        %v3915 = vpop.f32.mrb[0].mxu0
        %3916 = vmatprep.mubr.bf16.mxu0 0
        %3917 = vmatmul.mubr.bf16.gmra.mrb[0].mxu0 %v3814
        %v3918 = vpop.f32.mrb[0].mxu0
        %v3919 = vadd.f32 0.0, %v3918
        %v3920 = vpop.f32.mrb[0].mxu0
        %v3921 = vpop.f32.mrb[0].mxu0
        %v3922 = vadd.f32 0.0, %v3921
        %v3923 = vpop.f32.mrb[0].mxu0
        %3924 = vmatprep.mubr.bf16.mxu0 0
        %3925 = vmatmul.mubr.bf16.gmra.mrb[0].mxu0 %v3817
        %v3926 = vpop.f32.mrb[0].mxu0
        %v3927 = vadd.f32 0.0, %v3926
        %v3928 = vpop.f32.mrb[0].mxu0
        %v3929 = vpop.f32.mrb[0].mxu0
        %v3930 = vadd.f32 0.0, %v3929
        %v3931 = vpop.f32.mrb[0].mxu0
        %3932 = vmatprep.mubr.bf16.mxu0 0
        %3933 = vmatmul.mubr.bf16.gmra.mrb[0].mxu0 %v3820
        %v3934 = vpop.f32.mrb[0].mxu0
        %v3935 = vadd.f32 0.0, %v3934
        %v3936 = vpop.f32.mrb[0].mxu0
        %v3937 = vpop.f32.mrb[0].mxu0
        %v3938 = vadd.f32 0.0, %v3937
        %v3939 = vpop.f32.mrb[0].mxu0
        %3940 = vmatprep.mubr.bf16.mxu0 0
        %3941 = vmatmul.mubr.bf16.gmra.mrb[0].mxu0 %v3823
        %v3942 = vpop.f32.mrb[0].mxu0
        %v3943 = vadd.f32 0.0, %v3942
        %v3944 = vpop.f32.mrb[0].mxu0
        %v3945 = vpop.f32.mrb[0].mxu0
        %v3946 = vadd.f32 0.0, %v3945
        %v3947 = vpop.f32.mrb[0].mxu0
        %3948 = vmatprep.mubr.bf16.mxu0 0
        %3949 = vmatmul.mubr.bf16.gmra.mrb[0].mxu0 %v3826
        %v3950 = vpop.f32.mrb[0].mxu0
        %v3951 = vadd.f32 0.0, %v3950
        %v3952 = vpop.f32.mrb[0].mxu0
        %v3953 = vpop.f32.mrb[0].mxu0
        %v3954 = vadd.f32 0.0, %v3953
        %v3955 = vpop.f32.mrb[0].mxu0
        %3956 = vmatprep.mubr.bf16.mxu0 0
        %3957 = vmatmul.mubr.bf16.gmra.mrb[0].mxu0 %v3829
        %v3958 = vpop.f32.mrb[0].mxu0
        %v3959 = vadd.f32 0.0, %v3958
        %v3960 = vpop.f32.mrb[0].mxu0
        %v3961 = vpop.f32.mrb[0].mxu0
        %v3962 = vadd.f32 0.0, %v3961
        %v3963 = vpop.f32.mrb[0].mxu0
        %3964 = vmatprep.mubr.bf16.mxu0 0
        %3965 = vmatmul.mubr.bf16.gmra.mrb[0].mxu0 %v3832
        %v3966 = vpop.f32.mrb[0].mxu0
        %v3967 = vadd.f32 0.0, %v3966
        %v3968 = vpop.f32.mrb[0].mxu0
        %v3969 = vpop.f32.mrb[0].mxu0
        %v3970 = vadd.f32 0.0, %v3969
        %v3971 = vpop.f32.mrb[0].mxu0
        %3972 = vmatprep.mubr.bf16.mxu0 0
        %3973 = vmatmul.mubr.bf16.gmra.mrb[0].mxu0 %v3835
        %v3974 = vpop.f32.mrb[0].mxu0
        %v3975 = vadd.f32 0.0, %v3974
        %v3976 = vpop.f32.mrb[0].mxu0
        %v3977 = vpop.f32.mrb[0].mxu0
        %v3978 = vadd.f32 0.0, %v3977
        %v3979 = vpop.f32.mrb[0].mxu0
        %3980 = vmatprep.mubr.bf16.mxu0 0
        %3981 = vmatmul.mubr.bf16.gmra.mrb[0].mxu0 %v3838
        %v3982 = vpop.f32.mrb[0].mxu0
        %v3983 = vadd.f32 0.0, %v3982
        %v3984 = vpop.f32.mrb[0].mxu0
        %v3985 = vpop.f32.mrb[0].mxu0
        %v3986 = vadd.f32 0.0, %v3985
        %v3987 = vpop.f32.mrb[0].mxu0
        %3988 = vmatprep.mubr.bf16.mxu0 0
        %3989 = vmatmul.mubr.bf16.gmra.mrb[0].mxu0 %v3841
        %v3990 = vpop.f32.mrb[0].mxu0
        %v3991 = vadd.f32 0.0, %v3990
        %v3992 = vpop.f32.mrb[0].mxu0
        %v3993 = vpop.f32.mrb[0].mxu0
        %v3994 = vadd.f32 0.0, %v3993
        %v3995 = vpop.f32.mrb[0].mxu0
        %3996 = vmatprep.mubr.bf16.mxu0 0
        %3997 = vmatmul.mubr.bf16.gmra.mrb[0].mxu0 %v3844
        %v3998 = vpop.f32.mrb[0].mxu0
        %v3999 = vadd.f32 0.0, %v3998
        %v4000 = vpop.f32.mrb[0].mxu0
        %v4001 = vpop.f32.mrb[0].mxu0
        %v4002 = vadd.f32 0.0, %v4001
        %v4003 = vpop.f32.mrb[0].mxu0
        %4004 = vmatprep.mubr.bf16.mxu0 0
        %4005 = vmatmul.mubr.bf16.gmra.mrb[0].mxu0 %v3847
        %v4006 = vpop.f32.mrb[0].mxu0
        %v4007 = vadd.f32 0.0, %v4006
        %v4008 = vpop.f32.mrb[0].mxu0
        %v4009 = vpop.f32.mrb[0].mxu0
        %v4010 = vadd.f32 0.0, %v4009
        %v4011 = vpop.f32.mrb[0].mxu0
        %4012 = vdwg.mxu0
        %v4013 = vadd.f32 %v3326, %v3887
        %v4014 = vadd.f32 %v3329, %v3890
        %v4015 = vadd.f32 %v3334, %v3895
        %v4016 = vadd.f32 %v3337, %v3898
        %v4017 = vadd.f32 %v3342, %v3903
        %v4018 = vadd.f32 %v3345, %v3906
        %v4019 = vadd.f32 %v3350, %v3911
        %v4020 = vadd.f32 %v3353, %v3914
        %v4021 = vadd.f32 %v3358, %v3919
        %v4022 = vadd.f32 %v3361, %v3922
        %v4023 = vadd.f32 %v3366, %v3927
        %v4024 = vadd.f32 %v3369, %v3930
        %v4025 = vadd.f32 %v3374, %v3935
        %v4026 = vadd.f32 %v3377, %v3938
        %v4027 = vadd.f32 %v3382, %v3943
        %v4028 = vadd.f32 %v3385, %v3946
        %v4029 = vadd.f32 %v3390, %v3951
        %v4030 = vadd.f32 %v3393, %v3954
        %v4031 = vadd.f32 %v3398, %v3959
        %v4032 = vadd.f32 %v3401, %v3962
        %v4033 = vadd.f32 %v3406, %v3967
        %v4034 = vadd.f32 %v3409, %v3970
        %v4035 = vadd.f32 %v3414, %v3975
        %v4036 = vadd.f32 %v3417, %v3978
        %v4037 = vadd.f32 %v3422, %v3983
        %v4038 = vadd.f32 %v3425, %v3986
        %v4039 = vadd.f32 %v3430, %v3991
        %v4040 = vadd.f32 %v3433, %v3994
        %v4041 = vadd.f32 %v3438, %v3999
        %v4042 = vadd.f32 %v3441, %v4002
        %v4043 = vadd.f32 %v3446, %v4007
        %v4044 = vadd.f32 %v3449, %v4010
        %v4045 = vld [vmem:[%s4] sm:$0x1]
        %v4047 = vlaneseq
        %v4048 = vshrl.u32 %v4047, 7
        %v4049 = vsub.s32 0, %v4048
        %v4050 = vrot.slane %v4045, %v4049
        %v4052 = vadd.f32 %v4013, %v4050
        %v4053 = vadd.f32 %v4014, %v4050
        %v4054 = vadd.f32 %v4015, %v4050
        %v4055 = vadd.f32 %v4016, %v4050
        %v4056 = vadd.f32 %v4017, %v4050
        %v4057 = vadd.f32 %v4018, %v4050
        %v4058 = vadd.f32 %v4019, %v4050
        %v4059 = vadd.f32 %v4020, %v4050
        %v4060 = vadd.f32 %v4021, %v4050
        %v4061 = vadd.f32 %v4022, %v4050
        %v4062 = vadd.f32 %v4023, %v4050
        %v4063 = vadd.f32 %v4024, %v4050
        %v4064 = vadd.f32 %v4025, %v4050
        %v4065 = vadd.f32 %v4026, %v4050
        %v4066 = vadd.f32 %v4027, %v4050
        %v4067 = vadd.f32 %v4028, %v4050
        %v4068 = vadd.f32 %v4029, %v4050
        %v4069 = vadd.f32 %v4030, %v4050
        %v4070 = vadd.f32 %v4031, %v4050
        %v4071 = vadd.f32 %v4032, %v4050
        %v4072 = vadd.f32 %v4033, %v4050
        %v4073 = vadd.f32 %v4034, %v4050
        %v4074 = vadd.f32 %v4035, %v4050
        %v4075 = vadd.f32 %v4036, %v4050
        %v4076 = vadd.f32 %v4037, %v4050
        %v4077 = vadd.f32 %v4038, %v4050
        %v4078 = vadd.f32 %v4039, %v4050
        %v4079 = vadd.f32 %v4040, %v4050
        %v4080 = vadd.f32 %v4041, %v4050
        %v4081 = vadd.f32 %v4042, %v4050
        %v4082 = vadd.f32 %v4043, %v4050
        %v4083 = vadd.f32 %v4044, %v4050
        %v4084 = vmax.f32 %v4052, 0.0
        %v4085 = vmax.f32 %v4053, 0.0
        %v4086 = vmax.f32 %v4054, 0.0
        %v4087 = vmax.f32 %v4055, 0.0
        %v4088 = vmax.f32 %v4056, 0.0
        %v4089 = vmax.f32 %v4057, 0.0
        %v4090 = vmax.f32 %v4058, 0.0
        %v4091 = vmax.f32 %v4059, 0.0
        %v4092 = vmax.f32 %v4060, 0.0
        %v4093 = vmax.f32 %v4061, 0.0
        %v4094 = vmax.f32 %v4062, 0.0
        %v4095 = vmax.f32 %v4063, 0.0
        %v4096 = vmax.f32 %v4064, 0.0
        %v4097 = vmax.f32 %v4065, 0.0
        %v4098 = vmax.f32 %v4066, 0.0
        %v4099 = vmax.f32 %v4067, 0.0
        %v4100 = vmax.f32 %v4068, 0.0
        %v4101 = vmax.f32 %v4069, 0.0
        %v4102 = vmax.f32 %v4070, 0.0
        %v4103 = vmax.f32 %v4071, 0.0
        %v4104 = vmax.f32 %v4072, 0.0
        %v4105 = vmax.f32 %v4073, 0.0
        %v4106 = vmax.f32 %v4074, 0.0
        %v4107 = vmax.f32 %v4075, 0.0
        %v4108 = vmax.f32 %v4076, 0.0
        %v4109 = vmax.f32 %v4077, 0.0
        %v4110 = vmax.f32 %v4078, 0.0
        %v4111 = vmax.f32 %v4079, 0.0
        %v4112 = vmax.f32 %v4080, 0.0
        %v4113 = vmax.f32 %v4081, 0.0
        %v4114 = vmax.f32 %v4082, 0.0
        %v4115 = vmax.f32 %v4083, 0.0
        %v4116 = vpack.c.bf16 %v4085, %v4084
        %v4117 = vpack.c.bf16 %v4087, %v4086
        %v4118 = vpack.c.bf16 %v4089, %v4088
        %v4119 = vpack.c.bf16 %v4091, %v4090
        %v4120 = vpack.c.bf16 %v4093, %v4092
        %v4121 = vpack.c.bf16 %v4095, %v4094
        %v4122 = vpack.c.bf16 %v4097, %v4096
        %v4123 = vpack.c.bf16 %v4099, %v4098
        %v4124 = vpack.c.bf16 %v4101, %v4100
        %v4125 = vpack.c.bf16 %v4103, %v4102
        %v4126 = vpack.c.bf16 %v4105, %v4104
        %v4127 = vpack.c.bf16 %v4107, %v4106
        %v4128 = vpack.c.bf16 %v4109, %v4108
        %v4129 = vpack.c.bf16 %v4111, %v4110
        %v4130 = vpack.c.bf16 %v4113, %v4112
        %v4131 = vpack.c.bf16 %v4115, %v4114
        %s4132 = scalar_lea.vmem [#allocation3], 128
        %4133 = vst.msk [vmem:[%s4132] sm:$0xff] %vm257, %v4116
        %4134 = vst.msk [vmem:[%s4132 + $0x8] sm:$0xff] %vm257, %v4117
        %4135 = vst.msk [vmem:[%s4132 + $0x10] sm:$0xff] %vm257, %v4118
        %4136 = vst.msk [vmem:[%s4132 + $0x18] sm:$0xff] %vm257, %v4119
        %4137 = vst.msk [vmem:[%s4132 + $0x20] sm:$0xff] %vm257, %v4120
        %4138 = vst.msk [vmem:[%s4132 + $0x28] sm:$0xff] %vm257, %v4121
        %4139 = vst.msk [vmem:[%s4132 + $0x30] sm:$0xff] %vm257, %v4122
        %4140 = vst.msk [vmem:[%s4132 + $0x38] sm:$0xff] %vm257, %v4123
        %4141 = vst.msk [vmem:[%s4132 + $0x40] sm:$0xff] %vm257, %v4124
        %4142 = vst.msk [vmem:[%s4132 + $0x48] sm:$0xff] %vm257, %v4125
        %4143 = vst.msk [vmem:[%s4132 + $0x50] sm:$0xff] %vm257, %v4126
        %4144 = vst.msk [vmem:[%s4132 + $0x58] sm:$0xff] %vm257, %v4127
        %4145 = vst.msk [vmem:[%s4132 + $0x60] sm:$0xff] %vm257, %v4128
        %4146 = vst.msk [vmem:[%s4132 + $0x68] sm:$0xff] %vm257, %v4129
        %4147 = vst.msk [vmem:[%s4132 + $0x70] sm:$0xff] %vm257, %v4130
        %4148 = vst.msk [vmem:[%s4132 + $0x78] sm:$0xff] %vm257, %v4131
        %v4149 = vld [vmem:[%s253] sm:$0xf]
        %v4150 = vld [vmem:[%s253 + $0x4] sm:$0xf]
        %v4151 = vld [vmem:[%s253 + $0x8] sm:$0xf]
        %v4152 = vld [vmem:[%s253 + $0xc] sm:$0xf]
        %v4153 = vld [vmem:[%s253 + $0x10] sm:$0xf]
        %v4154 = vld [vmem:[%s253 + $0x14] sm:$0xf]
        %v4155 = vld [vmem:[%s253 + $0x18] sm:$0xf]
        %v4156 = vld [vmem:[%s253 + $0x1c] sm:$0xf]
        %v4157 = vld [vmem:[%s253 + $0x20] sm:$0xf]
        %v4158 = vld [vmem:[%s253 + $0x24] sm:$0xf]
        %v4159 = vld [vmem:[%s253 + $0x28] sm:$0xf]
        %v4160 = vld [vmem:[%s253 + $0x2c] sm:$0xf]
        %v4161 = vld [vmem:[%s253 + $0x30] sm:$0xf]
        %v4162 = vld [vmem:[%s253 + $0x34] sm:$0xf]
        %v4163 = vld [vmem:[%s253 + $0x38] sm:$0xf]
        %v4164 = vld [vmem:[%s253 + $0x3c] sm:$0xf]
        %v4165 = vld [vmem:[%s253 + $0x40] sm:$0xf]
        %v4166 = vld [vmem:[%s253 + $0x44] sm:$0xf]
        %v4167 = vld [vmem:[%s253 + $0x48] sm:$0xf]
        %v4168 = vld [vmem:[%s253 + $0x4c] sm:$0xf]
        %v4169 = vld [vmem:[%s253 + $0x50] sm:$0xf]
        %v4170 = vld [vmem:[%s253 + $0x54] sm:$0xf]
        %v4171 = vld [vmem:[%s253 + $0x58] sm:$0xf]
        %v4172 = vld [vmem:[%s253 + $0x5c] sm:$0xf]
        %v4173 = vld [vmem:[%s253 + $0x60] sm:$0xf]
        %v4174 = vld [vmem:[%s253 + $0x64] sm:$0xf]
        %v4175 = vld [vmem:[%s253 + $0x68] sm:$0xf]
        %v4176 = vld [vmem:[%s253 + $0x6c] sm:$0xf]
        %v4177 = vld [vmem:[%s253 + $0x70] sm:$0xf]
        %v4178 = vld [vmem:[%s253 + $0x74] sm:$0xf]
        %v4179 = vld [vmem:[%s253 + $0x78] sm:$0xf]
        %v4180 = vld [vmem:[%s253 + $0x7c] sm:$0xf]
        %v4181 = vld [vmem:[%s253 + $0x80] sm:$0xf]
        %v4182 = vld [vmem:[%s253 + $0x84] sm:$0xf]
        %v4183 = vld [vmem:[%s253 + $0x88] sm:$0xf]
        %v4184 = vld [vmem:[%s253 + $0x8c] sm:$0xf]
        %v4185 = vld [vmem:[%s253 + $0x90] sm:$0xf]
        %v4186 = vld [vmem:[%s253 + $0x94] sm:$0xf]
        %v4187 = vld [vmem:[%s253 + $0x98] sm:$0xf]
        %v4188 = vld [vmem:[%s253 + $0x9c] sm:$0xf]
        %v4189 = vld [vmem:[%s253 + $0xa0] sm:$0xf]
        %v4190 = vld [vmem:[%s253 + $0xa4] sm:$0xf]
        %v4191 = vld [vmem:[%s253 + $0xa8] sm:$0xf]
        %v4192 = vld [vmem:[%s253 + $0xac] sm:$0xf]
        %v4193 = vld [vmem:[%s253 + $0xb0] sm:$0xf]
        %v4194 = vld [vmem:[%s253 + $0xb4] sm:$0xf]
        %v4195 = vld [vmem:[%s253 + $0xb8] sm:$0xf]
        %v4196 = vld [vmem:[%s253 + $0xbc] sm:$0xf]
        %v4197 = vld [vmem:[%s253 + $0xc0] sm:$0xf]
        %v4198 = vld [vmem:[%s253 + $0xc4] sm:$0xf]
        %v4199 = vld [vmem:[%s253 + $0xc8] sm:$0xf]
        %v4200 = vld [vmem:[%s253 + $0xcc] sm:$0xf]
        %v4201 = vld [vmem:[%s253 + $0xd0] sm:$0xf]
        %v4202 = vld [vmem:[%s253 + $0xd4] sm:$0xf]
        %v4203 = vld [vmem:[%s253 + $0xd8] sm:$0xf]
        %v4204 = vld [vmem:[%s253 + $0xdc] sm:$0xf]
        %v4205 = vld [vmem:[%s253 + $0xe0] sm:$0xf]
        %v4206 = vld [vmem:[%s253 + $0xe4] sm:$0xf]
        %v4207 = vld [vmem:[%s253 + $0xe8] sm:$0xf]
        %v4208 = vld [vmem:[%s253 + $0xec] sm:$0xf]
        %v4209 = vld [vmem:[%s253 + $0xf0] sm:$0xf]
        %v4210 = vld [vmem:[%s253 + $0xf4] sm:$0xf]
        %v4211 = vld [vmem:[%s253 + $0xf8] sm:$0xf]
        %v4212 = vld [vmem:[%s253 + $0xfc] sm:$0xf]
        %v4213 = vld [vmem:[#allocation3] sm:$0xff]
        %v4214 = vld [vmem:[#allocation3 + $0x8] sm:$0xff]
        %v4215 = vld [vmem:[#allocation3 + $0x10] sm:$0xff]
        %v4216 = vld [vmem:[#allocation3 + $0x18] sm:$0xff]
        %v4217 = vld [vmem:[#allocation3 + $0x20] sm:$0xff]
        %v4218 = vld [vmem:[#allocation3 + $0x28] sm:$0xff]
        %v4219 = vld [vmem:[#allocation3 + $0x30] sm:$0xff]
        %v4220 = vld [vmem:[#allocation3 + $0x38] sm:$0xff]
        %v4221 = vld [vmem:[#allocation3 + $0x40] sm:$0xff]
        %v4222 = vld [vmem:[#allocation3 + $0x48] sm:$0xff]
        %v4223 = vld [vmem:[#allocation3 + $0x50] sm:$0xff]
        %v4224 = vld [vmem:[#allocation3 + $0x58] sm:$0xff]
        %v4225 = vld [vmem:[#allocation3 + $0x60] sm:$0xff]
        %v4226 = vld [vmem:[#allocation3 + $0x68] sm:$0xff]
        %v4227 = vld [vmem:[#allocation3 + $0x70] sm:$0xff]
        %v4228 = vld [vmem:[#allocation3 + $0x78] sm:$0xff]
        %v4229 = vld [vmem:[#allocation3 + $0x80] sm:$0xff]
        %v4230 = vld [vmem:[#allocation3 + $0x88] sm:$0xff]
        %v4231 = vld [vmem:[#allocation3 + $0x90] sm:$0xff]
        %v4232 = vld [vmem:[#allocation3 + $0x98] sm:$0xff]
        %v4233 = vld [vmem:[#allocation3 + $0xa0] sm:$0xff]
        %v4234 = vld [vmem:[#allocation3 + $0xa8] sm:$0xff]
        %v4235 = vld [vmem:[#allocation3 + $0xb0] sm:$0xff]
        %v4236 = vld [vmem:[#allocation3 + $0xb8] sm:$0xff]
        %v4237 = vld [vmem:[#allocation3 + $0xc0] sm:$0xff]
        %v4238 = vld [vmem:[#allocation3 + $0xc8] sm:$0xff]
        %v4239 = vld [vmem:[#allocation3 + $0xd0] sm:$0xff]
        %v4240 = vld [vmem:[#allocation3 + $0xd8] sm:$0xff]
        %v4241 = vld [vmem:[#allocation3 + $0xe0] sm:$0xff]
        %v4242 = vld [vmem:[#allocation3 + $0xe8] sm:$0xff]
        %v4243 = vld [vmem:[#allocation3 + $0xf0] sm:$0xff]
        %v4244 = vld [vmem:[#allocation3 + $0xf8] sm:$0xff]
        %v4245 = vld [vmem:[%s2] sm:$0x3]
        %v4246 = vld [vmem:[%s3] sm:$0x3]
        %v4311 = vunpack.c.l.b16 %v4149
        %v4312 = vunpack.c.l.b16 %v4150
        %v4313 = vunpack.c.l.b16 %v4151
        %v4314 = vunpack.c.l.b16 %v4152
        %v4315 = vunpack.c.l.b16 %v4153
        %v4316 = vunpack.c.l.b16 %v4154
        %v4317 = vunpack.c.l.b16 %v4155
        %v4318 = vunpack.c.l.b16 %v4156
        %v4319 = vunpack.c.l.b16 %v4157
        %v4320 = vunpack.c.l.b16 %v4158
        %v4321 = vunpack.c.l.b16 %v4159
        %v4322 = vunpack.c.l.b16 %v4160
        %v4323 = vunpack.c.l.b16 %v4161
        %v4324 = vunpack.c.l.b16 %v4162
        %v4325 = vunpack.c.l.b16 %v4163
        %v4326 = vunpack.c.l.b16 %v4164
        %v4327 = vunpack.c.l.b16 %v4165
        %v4328 = vunpack.c.l.b16 %v4166
        %v4329 = vunpack.c.l.b16 %v4167
        %v4330 = vunpack.c.l.b16 %v4168
        %v4331 = vunpack.c.l.b16 %v4169
        %v4332 = vunpack.c.l.b16 %v4170
        %v4333 = vunpack.c.l.b16 %v4171
        %v4334 = vunpack.c.l.b16 %v4172
        %v4335 = vunpack.c.l.b16 %v4173
        %v4336 = vunpack.c.l.b16 %v4174
        %v4337 = vunpack.c.l.b16 %v4175
        %v4338 = vunpack.c.l.b16 %v4176
        %v4339 = vunpack.c.l.b16 %v4177
        %v4340 = vunpack.c.l.b16 %v4178
        %v4341 = vunpack.c.l.b16 %v4179
        %v4342 = vunpack.c.l.b16 %v4180
        %v4343 = vunpack.c.l.b16 %v4181
        %v4344 = vunpack.c.l.b16 %v4182
        %v4345 = vunpack.c.l.b16 %v4183
        %v4346 = vunpack.c.l.b16 %v4184
        %v4347 = vunpack.c.l.b16 %v4185
        %v4348 = vunpack.c.l.b16 %v4186
        %v4349 = vunpack.c.l.b16 %v4187
        %v4350 = vunpack.c.l.b16 %v4188
        %v4351 = vunpack.c.l.b16 %v4189
        %v4352 = vunpack.c.l.b16 %v4190
        %v4353 = vunpack.c.l.b16 %v4191
        %v4354 = vunpack.c.l.b16 %v4192
        %v4355 = vunpack.c.l.b16 %v4193
        %v4356 = vunpack.c.l.b16 %v4194
        %v4357 = vunpack.c.l.b16 %v4195
        %v4358 = vunpack.c.l.b16 %v4196
        %v4359 = vunpack.c.l.b16 %v4197
        %v4360 = vunpack.c.l.b16 %v4198
        %v4361 = vunpack.c.l.b16 %v4199
        %v4362 = vunpack.c.l.b16 %v4200
        %v4363 = vunpack.c.l.b16 %v4201
        %v4364 = vunpack.c.l.b16 %v4202
        %v4365 = vunpack.c.l.b16 %v4203
        %v4366 = vunpack.c.l.b16 %v4204
        %v4367 = vunpack.c.l.b16 %v4205
        %v4368 = vunpack.c.l.b16 %v4206
        %v4369 = vunpack.c.l.b16 %v4207
        %v4370 = vunpack.c.l.b16 %v4208
        %v4371 = vunpack.c.l.b16 %v4209
        %v4372 = vunpack.c.l.b16 %v4210
        %v4373 = vunpack.c.l.b16 %v4211
        %v4374 = vunpack.c.l.b16 %v4212
        %v4375 = vpack.c.b16 %v4312, %v4311
        %v4376 = vpack.c.b16 %v4314, %v4313
        %v4377 = vpack.c.b16 %v4316, %v4315
        %v4378 = vpack.c.b16 %v4318, %v4317
        %v4379 = vpack.c.b16 %v4320, %v4319
        %v4380 = vpack.c.b16 %v4322, %v4321
        %v4381 = vpack.c.b16 %v4324, %v4323
        %v4382 = vpack.c.b16 %v4326, %v4325
        %v4383 = vpack.c.b16 %v4328, %v4327
        %v4384 = vpack.c.b16 %v4330, %v4329
        %v4385 = vpack.c.b16 %v4332, %v4331
        %v4386 = vpack.c.b16 %v4334, %v4333
        %v4387 = vpack.c.b16 %v4336, %v4335
        %v4388 = vpack.c.b16 %v4338, %v4337
        %v4389 = vpack.c.b16 %v4340, %v4339
        %v4390 = vpack.c.b16 %v4342, %v4341
        %v4391 = vpack.c.b16 %v4344, %v4343
        %v4392 = vpack.c.b16 %v4346, %v4345
        %v4393 = vpack.c.b16 %v4348, %v4347
        %v4394 = vpack.c.b16 %v4350, %v4349
        %v4395 = vpack.c.b16 %v4352, %v4351
        %v4396 = vpack.c.b16 %v4354, %v4353
        %v4397 = vpack.c.b16 %v4356, %v4355
        %v4398 = vpack.c.b16 %v4358, %v4357
        %v4399 = vpack.c.b16 %v4360, %v4359
        %v4400 = vpack.c.b16 %v4362, %v4361
        %v4401 = vpack.c.b16 %v4364, %v4363
        %v4402 = vpack.c.b16 %v4366, %v4365
        %v4403 = vpack.c.b16 %v4368, %v4367
        %v4404 = vpack.c.b16 %v4370, %v4369
        %v4405 = vpack.c.b16 %v4372, %v4371
        %v4406 = vpack.c.b16 %v4374, %v4373
        %v4408 = vsel %vm257, %v4375, 0
        %v4411 = vsel %vm257, %v4376, 0
        %v4414 = vsel %vm257, %v4377, 0
        %v4417 = vsel %vm257, %v4378, 0
        %v4420 = vsel %vm257, %v4379, 0
        %v4423 = vsel %vm257, %v4380, 0
        %v4426 = vsel %vm257, %v4381, 0
        %v4429 = vsel %vm257, %v4382, 0
        %v4432 = vsel %vm257, %v4383, 0
        %v4435 = vsel %vm257, %v4384, 0
        %v4438 = vsel %vm257, %v4385, 0
        %v4441 = vsel %vm257, %v4386, 0
        %v4444 = vsel %vm257, %v4387, 0
        %v4447 = vsel %vm257, %v4388, 0
        %v4450 = vsel %vm257, %v4389, 0
        %v4453 = vsel %vm257, %v4390, 0
        %v4456 = vsel %vm257, %v4391, 0
        %v4459 = vsel %vm257, %v4392, 0
        %v4462 = vsel %vm257, %v4393, 0
        %v4465 = vsel %vm257, %v4394, 0
        %v4468 = vsel %vm257, %v4395, 0
        %v4471 = vsel %vm257, %v4396, 0
        %v4474 = vsel %vm257, %v4397, 0
        %v4477 = vsel %vm257, %v4398, 0
        %v4480 = vsel %vm257, %v4399, 0
        %v4483 = vsel %vm257, %v4400, 0
        %v4486 = vsel %vm257, %v4401, 0
        %v4489 = vsel %vm257, %v4402, 0
        %v4492 = vsel %vm257, %v4403, 0
        %v4495 = vsel %vm257, %v4404, 0
        %v4498 = vsel %vm257, %v4405, 0
        %v4501 = vsel %vm257, %v4406, 0
        %vm4503 = vcmask 1041408
        %v4505 = vsel %vm4503, %v4246, 0
        %4507 = vmatprep.subr.bf16.mxu0 0
        %4508 = vmatpush1.bf16.msra.mxu0 %v4505
        %4509 = vmatprep.subr.bf16.mxu0 0
        %4510 = vmatpush1.bf16.msra.mxu0 0
        %4511 = vmatprep.subr.bf16.mxu0 0
        %4512 = vmatpush1.bf16.msra.mxu0 0
        %4513 = vmatprep.subr.bf16.mxu0 0
        %4514 = vmatpush1.bf16.msra.mxu0 0
        %4515 = vmatprep.subr.bf16.mxu0 0
        %4516 = vmatpush1.bf16.msra.mxu0 0
        %4517 = vmatprep.subr.bf16.mxu0 0
        %4518 = vmatpush1.bf16.msra.mxu0 0
        %4519 = vmatprep.subr.bf16.mxu0 0
        %4520 = vmatpush1.bf16.msra.mxu0 0
        %4521 = vmatprep.subr.bf16.mxu0 0
        %4522 = vmatpush1.bf16.msra.mxu0 0
        %4523 = vmatprep.subr.bf16.mxu0 0
        %4524 = vmatpush1.bf16.msra.mxu0 0
        %4525 = vmatprep.subr.bf16.mxu0 0
        %4526 = vmatpush1.bf16.msra.mxu0 0
        %4527 = vmatprep.subr.bf16.mxu0 0
        %4528 = vmatpush1.bf16.msra.mxu0 0
        %4529 = vmatprep.subr.bf16.mxu0 0
        %4530 = vmatpush1.bf16.msra.mxu0 0
        %4531 = vmatprep.subr.bf16.mxu0 0
        %4532 = vmatpush1.bf16.msra.mxu0 0
        %4533 = vmatprep.subr.bf16.mxu0 0
        %4534 = vmatpush1.bf16.msra.mxu0 0
        %4535 = vmatprep.subr.bf16.mxu0 0
        %4536 = vmatpush1.bf16.msra.mxu0 0
        %4537 = vmatprep.subr.bf16.mxu0 0
        %4538 = vmatpush1.bf16.msra.mxu0 0
        %4539 = vmatprep.mubr.bf16.mxu0 0
        %4540 = vmatmul.mubr.bf16.gmra.mrb[0].mxu0 %v4408
        %v4541 = vpop.f32.mrb[0].mxu0
        %v4542 = vadd.f32 0.0, %v4541
        %v4543 = vpop.f32.mrb[0].mxu0
        %v4544 = vpop.f32.mrb[0].mxu0
        %v4545 = vadd.f32 0.0, %v4544
        %v4546 = vpop.f32.mrb[0].mxu0
        %4547 = vmatprep.mubr.bf16.mxu0 0
        %4548 = vmatmul.mubr.bf16.gmra.mrb[0].mxu0 %v4411
        %v4549 = vpop.f32.mrb[0].mxu0
        %v4550 = vadd.f32 0.0, %v4549
        %v4551 = vpop.f32.mrb[0].mxu0
        %v4552 = vpop.f32.mrb[0].mxu0
        %v4553 = vadd.f32 0.0, %v4552
        %v4554 = vpop.f32.mrb[0].mxu0
        %4555 = vmatprep.mubr.bf16.mxu0 0
        %4556 = vmatmul.mubr.bf16.gmra.mrb[0].mxu0 %v4414
        %v4557 = vpop.f32.mrb[0].mxu0
        %v4558 = vadd.f32 0.0, %v4557
        %v4559 = vpop.f32.mrb[0].mxu0
        %v4560 = vpop.f32.mrb[0].mxu0
        %v4561 = vadd.f32 0.0, %v4560
        %v4562 = vpop.f32.mrb[0].mxu0
        %4563 = vmatprep.mubr.bf16.mxu0 0
        %4564 = vmatmul.mubr.bf16.gmra.mrb[0].mxu0 %v4417
        %v4565 = vpop.f32.mrb[0].mxu0
        %v4566 = vadd.f32 0.0, %v4565
        %v4567 = vpop.f32.mrb[0].mxu0
        %v4568 = vpop.f32.mrb[0].mxu0
        %v4569 = vadd.f32 0.0, %v4568
        %v4570 = vpop.f32.mrb[0].mxu0
        %4571 = vmatprep.mubr.bf16.mxu0 0
        %4572 = vmatmul.mubr.bf16.gmra.mrb[0].mxu0 %v4420
        %v4573 = vpop.f32.mrb[0].mxu0
        %v4574 = vadd.f32 0.0, %v4573
        %v4575 = vpop.f32.mrb[0].mxu0
        %v4576 = vpop.f32.mrb[0].mxu0
        %v4577 = vadd.f32 0.0, %v4576
        %v4578 = vpop.f32.mrb[0].mxu0
        %4579 = vmatprep.mubr.bf16.mxu0 0
        %4580 = vmatmul.mubr.bf16.gmra.mrb[0].mxu0 %v4423
        %v4581 = vpop.f32.mrb[0].mxu0
        %v4582 = vadd.f32 0.0, %v4581
        %v4583 = vpop.f32.mrb[0].mxu0
        %v4584 = vpop.f32.mrb[0].mxu0
        %v4585 = vadd.f32 0.0, %v4584
        %v4586 = vpop.f32.mrb[0].mxu0
        %4587 = vmatprep.mubr.bf16.mxu0 0
        %4588 = vmatmul.mubr.bf16.gmra.mrb[0].mxu0 %v4426
        %v4589 = vpop.f32.mrb[0].mxu0
        %v4590 = vadd.f32 0.0, %v4589
        %v4591 = vpop.f32.mrb[0].mxu0
        %v4592 = vpop.f32.mrb[0].mxu0
        %v4593 = vadd.f32 0.0, %v4592
        %v4594 = vpop.f32.mrb[0].mxu0
        %4595 = vmatprep.mubr.bf16.mxu0 0
        %4596 = vmatmul.mubr.bf16.gmra.mrb[0].mxu0 %v4429
        %v4597 = vpop.f32.mrb[0].mxu0
        %v4598 = vadd.f32 0.0, %v4597
        %v4599 = vpop.f32.mrb[0].mxu0
        %v4600 = vpop.f32.mrb[0].mxu0
        %v4601 = vadd.f32 0.0, %v4600
        %v4602 = vpop.f32.mrb[0].mxu0
        %4603 = vmatprep.mubr.bf16.mxu0 0
        %4604 = vmatmul.mubr.bf16.gmra.mrb[0].mxu0 %v4432
        %v4605 = vpop.f32.mrb[0].mxu0
        %v4606 = vadd.f32 0.0, %v4605
        %v4607 = vpop.f32.mrb[0].mxu0
        %v4608 = vpop.f32.mrb[0].mxu0
        %v4609 = vadd.f32 0.0, %v4608
        %v4610 = vpop.f32.mrb[0].mxu0
        %4611 = vmatprep.mubr.bf16.mxu0 0
        %4612 = vmatmul.mubr.bf16.gmra.mrb[0].mxu0 %v4435
        %v4613 = vpop.f32.mrb[0].mxu0
        %v4614 = vadd.f32 0.0, %v4613
        %v4615 = vpop.f32.mrb[0].mxu0
        %v4616 = vpop.f32.mrb[0].mxu0
        %v4617 = vadd.f32 0.0, %v4616
        %v4618 = vpop.f32.mrb[0].mxu0
        %4619 = vmatprep.mubr.bf16.mxu0 0
        %4620 = vmatmul.mubr.bf16.gmra.mrb[0].mxu0 %v4438
        %v4621 = vpop.f32.mrb[0].mxu0
        %v4622 = vadd.f32 0.0, %v4621
        %v4623 = vpop.f32.mrb[0].mxu0
        %v4624 = vpop.f32.mrb[0].mxu0
        %v4625 = vadd.f32 0.0, %v4624
        %v4626 = vpop.f32.mrb[0].mxu0
        %4627 = vmatprep.mubr.bf16.mxu0 0
        %4628 = vmatmul.mubr.bf16.gmra.mrb[0].mxu0 %v4441
        %v4629 = vpop.f32.mrb[0].mxu0
        %v4630 = vadd.f32 0.0, %v4629
        %v4631 = vpop.f32.mrb[0].mxu0
        %v4632 = vpop.f32.mrb[0].mxu0
        %v4633 = vadd.f32 0.0, %v4632
        %v4634 = vpop.f32.mrb[0].mxu0
        %4635 = vmatprep.mubr.bf16.mxu0 0
        %4636 = vmatmul.mubr.bf16.gmra.mrb[0].mxu0 %v4444
        %v4637 = vpop.f32.mrb[0].mxu0
        %v4638 = vadd.f32 0.0, %v4637
        %v4639 = vpop.f32.mrb[0].mxu0
        %v4640 = vpop.f32.mrb[0].mxu0
        %v4641 = vadd.f32 0.0, %v4640
        %v4642 = vpop.f32.mrb[0].mxu0
        %4643 = vmatprep.mubr.bf16.mxu0 0
        %4644 = vmatmul.mubr.bf16.gmra.mrb[0].mxu0 %v4447
        %v4645 = vpop.f32.mrb[0].mxu0
        %v4646 = vadd.f32 0.0, %v4645
        %v4647 = vpop.f32.mrb[0].mxu0
        %v4648 = vpop.f32.mrb[0].mxu0
        %v4649 = vadd.f32 0.0, %v4648
        %v4650 = vpop.f32.mrb[0].mxu0
        %4651 = vmatprep.mubr.bf16.mxu0 0
        %4652 = vmatmul.mubr.bf16.gmra.mrb[0].mxu0 %v4450
        %v4653 = vpop.f32.mrb[0].mxu0
        %v4654 = vadd.f32 0.0, %v4653
        %v4655 = vpop.f32.mrb[0].mxu0
        %v4656 = vpop.f32.mrb[0].mxu0
        %v4657 = vadd.f32 0.0, %v4656
        %v4658 = vpop.f32.mrb[0].mxu0
        %4659 = vmatprep.mubr.bf16.mxu0 0
        %4660 = vmatmul.mubr.bf16.gmra.mrb[0].mxu0 %v4453
        %v4661 = vpop.f32.mrb[0].mxu0
        %v4662 = vadd.f32 0.0, %v4661
        %v4663 = vpop.f32.mrb[0].mxu0
        %v4664 = vpop.f32.mrb[0].mxu0
        %v4665 = vadd.f32 0.0, %v4664
        %v4666 = vpop.f32.mrb[0].mxu0
        %4667 = vmatprep.mubr.bf16.mxu0 0
        %4668 = vmatmul.mubr.bf16.gmra.mrb[0].mxu0 %v4456
        %v4669 = vpop.f32.mrb[0].mxu0
        %v4670 = vadd.f32 0.0, %v4669
        %v4671 = vpop.f32.mrb[0].mxu0
        %v4672 = vpop.f32.mrb[0].mxu0
        %v4673 = vadd.f32 0.0, %v4672
        %v4674 = vpop.f32.mrb[0].mxu0
        %4675 = vmatprep.mubr.bf16.mxu0 0
        %4676 = vmatmul.mubr.bf16.gmra.mrb[0].mxu0 %v4459
        %v4677 = vpop.f32.mrb[0].mxu0
        %v4678 = vadd.f32 0.0, %v4677
        %v4679 = vpop.f32.mrb[0].mxu0
        %v4680 = vpop.f32.mrb[0].mxu0
        %v4681 = vadd.f32 0.0, %v4680
        %v4682 = vpop.f32.mrb[0].mxu0
        %4683 = vmatprep.mubr.bf16.mxu0 0
        %4684 = vmatmul.mubr.bf16.gmra.mrb[0].mxu0 %v4462
        %v4685 = vpop.f32.mrb[0].mxu0
        %v4686 = vadd.f32 0.0, %v4685
        %v4687 = vpop.f32.mrb[0].mxu0
        %v4688 = vpop.f32.mrb[0].mxu0
        %v4689 = vadd.f32 0.0, %v4688
        %v4690 = vpop.f32.mrb[0].mxu0
        %4691 = vmatprep.mubr.bf16.mxu0 0
        %4692 = vmatmul.mubr.bf16.gmra.mrb[0].mxu0 %v4465
        %v4693 = vpop.f32.mrb[0].mxu0
        %v4694 = vadd.f32 0.0, %v4693
        %v4695 = vpop.f32.mrb[0].mxu0
        %v4696 = vpop.f32.mrb[0].mxu0
        %v4697 = vadd.f32 0.0, %v4696
        %v4698 = vpop.f32.mrb[0].mxu0
        %4699 = vmatprep.mubr.bf16.mxu0 0
        %4700 = vmatmul.mubr.bf16.gmra.mrb[0].mxu0 %v4468
        %v4701 = vpop.f32.mrb[0].mxu0
        %v4702 = vadd.f32 0.0, %v4701
        %v4703 = vpop.f32.mrb[0].mxu0
        %v4704 = vpop.f32.mrb[0].mxu0
        %v4705 = vadd.f32 0.0, %v4704
        %v4706 = vpop.f32.mrb[0].mxu0
        %4707 = vmatprep.mubr.bf16.mxu0 0
        %4708 = vmatmul.mubr.bf16.gmra.mrb[0].mxu0 %v4471
        %v4709 = vpop.f32.mrb[0].mxu0
        %v4710 = vadd.f32 0.0, %v4709
        %v4711 = vpop.f32.mrb[0].mxu0
        %v4712 = vpop.f32.mrb[0].mxu0
        %v4713 = vadd.f32 0.0, %v4712
        %v4714 = vpop.f32.mrb[0].mxu0
        %4715 = vmatprep.mubr.bf16.mxu0 0
        %4716 = vmatmul.mubr.bf16.gmra.mrb[0].mxu0 %v4474
        %v4717 = vpop.f32.mrb[0].mxu0
        %v4718 = vadd.f32 0.0, %v4717
        %v4719 = vpop.f32.mrb[0].mxu0
        %v4720 = vpop.f32.mrb[0].mxu0
        %v4721 = vadd.f32 0.0, %v4720
        %v4722 = vpop.f32.mrb[0].mxu0
        %4723 = vmatprep.mubr.bf16.mxu0 0
        %4724 = vmatmul.mubr.bf16.gmra.mrb[0].mxu0 %v4477
        %v4725 = vpop.f32.mrb[0].mxu0
        %v4726 = vadd.f32 0.0, %v4725
        %v4727 = vpop.f32.mrb[0].mxu0
        %v4728 = vpop.f32.mrb[0].mxu0
        %v4729 = vadd.f32 0.0, %v4728
        %v4730 = vpop.f32.mrb[0].mxu0
        %4731 = vmatprep.mubr.bf16.mxu0 0
        %4732 = vmatmul.mubr.bf16.gmra.mrb[0].mxu0 %v4480
        %v4733 = vpop.f32.mrb[0].mxu0
        %v4734 = vadd.f32 0.0, %v4733
        %v4735 = vpop.f32.mrb[0].mxu0
        %v4736 = vpop.f32.mrb[0].mxu0
        %v4737 = vadd.f32 0.0, %v4736
        %v4738 = vpop.f32.mrb[0].mxu0
        %4739 = vmatprep.mubr.bf16.mxu0 0
        %4740 = vmatmul.mubr.bf16.gmra.mrb[0].mxu0 %v4483
        %v4741 = vpop.f32.mrb[0].mxu0
        %v4742 = vadd.f32 0.0, %v4741
        %v4743 = vpop.f32.mrb[0].mxu0
        %v4744 = vpop.f32.mrb[0].mxu0
        %v4745 = vadd.f32 0.0, %v4744
        %v4746 = vpop.f32.mrb[0].mxu0
        %4747 = vmatprep.mubr.bf16.mxu0 0
        %4748 = vmatmul.mubr.bf16.gmra.mrb[0].mxu0 %v4486
        %v4749 = vpop.f32.mrb[0].mxu0
        %v4750 = vadd.f32 0.0, %v4749
        %v4751 = vpop.f32.mrb[0].mxu0
        %v4752 = vpop.f32.mrb[0].mxu0
        %v4753 = vadd.f32 0.0, %v4752
        %v4754 = vpop.f32.mrb[0].mxu0
        %4755 = vmatprep.mubr.bf16.mxu0 0
        %4756 = vmatmul.mubr.bf16.gmra.mrb[0].mxu0 %v4489
        %v4757 = vpop.f32.mrb[0].mxu0
        %v4758 = vadd.f32 0.0, %v4757
        %v4759 = vpop.f32.mrb[0].mxu0
        %v4760 = vpop.f32.mrb[0].mxu0
        %v4761 = vadd.f32 0.0, %v4760
        %v4762 = vpop.f32.mrb[0].mxu0
        %4763 = vmatprep.mubr.bf16.mxu0 0
        %4764 = vmatmul.mubr.bf16.gmra.mrb[0].mxu0 %v4492
        %v4765 = vpop.f32.mrb[0].mxu0
        %v4766 = vadd.f32 0.0, %v4765
        %v4767 = vpop.f32.mrb[0].mxu0
        %v4768 = vpop.f32.mrb[0].mxu0
        %v4769 = vadd.f32 0.0, %v4768
        %v4770 = vpop.f32.mrb[0].mxu0
        %4771 = vmatprep.mubr.bf16.mxu0 0
        %4772 = vmatmul.mubr.bf16.gmra.mrb[0].mxu0 %v4495
        %v4773 = vpop.f32.mrb[0].mxu0
        %v4774 = vadd.f32 0.0, %v4773
        %v4775 = vpop.f32.mrb[0].mxu0
        %v4776 = vpop.f32.mrb[0].mxu0
        %v4777 = vadd.f32 0.0, %v4776
        %v4778 = vpop.f32.mrb[0].mxu0
        %4779 = vmatprep.mubr.bf16.mxu0 0
        %4780 = vmatmul.mubr.bf16.gmra.mrb[0].mxu0 %v4498
        %v4781 = vpop.f32.mrb[0].mxu0
        %v4782 = vadd.f32 0.0, %v4781
        %v4783 = vpop.f32.mrb[0].mxu0
        %v4784 = vpop.f32.mrb[0].mxu0
        %v4785 = vadd.f32 0.0, %v4784
        %v4786 = vpop.f32.mrb[0].mxu0
        %4787 = vmatprep.mubr.bf16.mxu0 0
        %4788 = vmatmul.mubr.bf16.gmra.mrb[0].mxu0 %v4501
        %v4789 = vpop.f32.mrb[0].mxu0
        %v4790 = vadd.f32 0.0, %v4789
        %v4791 = vpop.f32.mrb[0].mxu0
        %v4792 = vpop.f32.mrb[0].mxu0
        %v4793 = vadd.f32 0.0, %v4792
        %v4794 = vpop.f32.mrb[0].mxu0
        %4795 = vdwg.mxu0
        %v4797 = vsel %vm257, %v4213, 0
        %v4800 = vsel %vm257, %v4214, 0
        %v4803 = vsel %vm257, %v4215, 0
        %v4806 = vsel %vm257, %v4216, 0
        %v4809 = vsel %vm257, %v4217, 0
        %v4812 = vsel %vm257, %v4218, 0
        %v4815 = vsel %vm257, %v4219, 0
        %v4818 = vsel %vm257, %v4220, 0
        %v4821 = vsel %vm257, %v4221, 0
        %v4824 = vsel %vm257, %v4222, 0
        %v4827 = vsel %vm257, %v4223, 0
        %v4830 = vsel %vm257, %v4224, 0
        %v4833 = vsel %vm257, %v4225, 0
        %v4836 = vsel %vm257, %v4226, 0
        %v4839 = vsel %vm257, %v4227, 0
        %v4842 = vsel %vm257, %v4228, 0
        %v4845 = vsel %vm257, %v4229, 0
        %v4848 = vsel %vm257, %v4230, 0
        %v4851 = vsel %vm257, %v4231, 0
        %v4854 = vsel %vm257, %v4232, 0
        %v4857 = vsel %vm257, %v4233, 0
        %v4860 = vsel %vm257, %v4234, 0
        %v4863 = vsel %vm257, %v4235, 0
        %v4866 = vsel %vm257, %v4236, 0
        %v4869 = vsel %vm257, %v4237, 0
        %v4872 = vsel %vm257, %v4238, 0
        %v4875 = vsel %vm257, %v4239, 0
        %v4878 = vsel %vm257, %v4240, 0
        %v4881 = vsel %vm257, %v4241, 0
        %v4884 = vsel %vm257, %v4242, 0
        %v4887 = vsel %vm257, %v4243, 0
        %v4890 = vsel %vm257, %v4244, 0
        %v4893 = vsel %vm4503, %v4245, 0
        %4895 = vmatprep.subr.bf16.mxu0 0
        %4896 = vmatpush1.bf16.msra.mxu0 %v4893
        %4897 = vmatprep.subr.bf16.mxu0 0
        %4898 = vmatpush1.bf16.msra.mxu0 0
        %4899 = vmatprep.subr.bf16.mxu0 0
        %4900 = vmatpush1.bf16.msra.mxu0 0
        %4901 = vmatprep.subr.bf16.mxu0 0
        %4902 = vmatpush1.bf16.msra.mxu0 0
        %4903 = vmatprep.subr.bf16.mxu0 0
        %4904 = vmatpush1.bf16.msra.mxu0 0
        %4905 = vmatprep.subr.bf16.mxu0 0
        %4906 = vmatpush1.bf16.msra.mxu0 0
        %4907 = vmatprep.subr.bf16.mxu0 0
        %4908 = vmatpush1.bf16.msra.mxu0 0
        %4909 = vmatprep.subr.bf16.mxu0 0
        %4910 = vmatpush1.bf16.msra.mxu0 0
        %4911 = vmatprep.subr.bf16.mxu0 0
        %4912 = vmatpush1.bf16.msra.mxu0 0
        %4913 = vmatprep.subr.bf16.mxu0 0
        %4914 = vmatpush1.bf16.msra.mxu0 0
        %4915 = vmatprep.subr.bf16.mxu0 0
        %4916 = vmatpush1.bf16.msra.mxu0 0
        %4917 = vmatprep.subr.bf16.mxu0 0
        %4918 = vmatpush1.bf16.msra.mxu0 0
        %4919 = vmatprep.subr.bf16.mxu0 0
        %4920 = vmatpush1.bf16.msra.mxu0 0
        %4921 = vmatprep.subr.bf16.mxu0 0
        %4922 = vmatpush1.bf16.msra.mxu0 0
        %4923 = vmatprep.subr.bf16.mxu0 0
        %4924 = vmatpush1.bf16.msra.mxu0 0
        %4925 = vmatprep.subr.bf16.mxu0 0
        %4926 = vmatpush1.bf16.msra.mxu0 0
        %4927 = vmatprep.mubr.bf16.mxu0 0
        %4928 = vmatmul.mubr.bf16.gmra.mrb[0].mxu0 %v4797
        %v4929 = vpop.f32.mrb[0].mxu0
        %v4930 = vadd.f32 %v4542, %v4929
        %v4931 = vpop.f32.mrb[0].mxu0
        %v4932 = vpop.f32.mrb[0].mxu0
        %v4933 = vadd.f32 %v4545, %v4932
        %v4934 = vpop.f32.mrb[0].mxu0
        %4935 = vmatprep.mubr.bf16.mxu0 0
        %4936 = vmatmul.mubr.bf16.gmra.mrb[0].mxu0 %v4800
        %v4937 = vpop.f32.mrb[0].mxu0
        %v4938 = vadd.f32 %v4550, %v4937
        %v4939 = vpop.f32.mrb[0].mxu0
        %v4940 = vpop.f32.mrb[0].mxu0
        %v4941 = vadd.f32 %v4553, %v4940
        %v4942 = vpop.f32.mrb[0].mxu0
        %4943 = vmatprep.mubr.bf16.mxu0 0
        %4944 = vmatmul.mubr.bf16.gmra.mrb[0].mxu0 %v4803
        %v4945 = vpop.f32.mrb[0].mxu0
        %v4946 = vadd.f32 %v4558, %v4945
        %v4947 = vpop.f32.mrb[0].mxu0
        %v4948 = vpop.f32.mrb[0].mxu0
        %v4949 = vadd.f32 %v4561, %v4948
        %v4950 = vpop.f32.mrb[0].mxu0
        %4951 = vmatprep.mubr.bf16.mxu0 0
        %4952 = vmatmul.mubr.bf16.gmra.mrb[0].mxu0 %v4806
        %v4953 = vpop.f32.mrb[0].mxu0
        %v4954 = vadd.f32 %v4566, %v4953
        %v4955 = vpop.f32.mrb[0].mxu0
        %v4956 = vpop.f32.mrb[0].mxu0
        %v4957 = vadd.f32 %v4569, %v4956
        %v4958 = vpop.f32.mrb[0].mxu0
        %4959 = vmatprep.mubr.bf16.mxu0 0
        %4960 = vmatmul.mubr.bf16.gmra.mrb[0].mxu0 %v4809
        %v4961 = vpop.f32.mrb[0].mxu0
        %v4962 = vadd.f32 %v4574, %v4961
        %v4963 = vpop.f32.mrb[0].mxu0
        %v4964 = vpop.f32.mrb[0].mxu0
        %v4965 = vadd.f32 %v4577, %v4964
        %v4966 = vpop.f32.mrb[0].mxu0
        %4967 = vmatprep.mubr.bf16.mxu0 0
        %4968 = vmatmul.mubr.bf16.gmra.mrb[0].mxu0 %v4812
        %v4969 = vpop.f32.mrb[0].mxu0
        %v4970 = vadd.f32 %v4582, %v4969
        %v4971 = vpop.f32.mrb[0].mxu0
        %v4972 = vpop.f32.mrb[0].mxu0
        %v4973 = vadd.f32 %v4585, %v4972
        %v4974 = vpop.f32.mrb[0].mxu0
        %4975 = vmatprep.mubr.bf16.mxu0 0
        %4976 = vmatmul.mubr.bf16.gmra.mrb[0].mxu0 %v4815
        %v4977 = vpop.f32.mrb[0].mxu0
        %v4978 = vadd.f32 %v4590, %v4977
        %v4979 = vpop.f32.mrb[0].mxu0
        %v4980 = vpop.f32.mrb[0].mxu0
        %v4981 = vadd.f32 %v4593, %v4980
        %v4982 = vpop.f32.mrb[0].mxu0
        %4983 = vmatprep.mubr.bf16.mxu0 0
        %4984 = vmatmul.mubr.bf16.gmra.mrb[0].mxu0 %v4818
        %v4985 = vpop.f32.mrb[0].mxu0
        %v4986 = vadd.f32 %v4598, %v4985
        %v4987 = vpop.f32.mrb[0].mxu0
        %v4988 = vpop.f32.mrb[0].mxu0
        %v4989 = vadd.f32 %v4601, %v4988
        %v4990 = vpop.f32.mrb[0].mxu0
        %4991 = vmatprep.mubr.bf16.mxu0 0
        %4992 = vmatmul.mubr.bf16.gmra.mrb[0].mxu0 %v4821
        %v4993 = vpop.f32.mrb[0].mxu0
        %v4994 = vadd.f32 %v4606, %v4993
        %v4995 = vpop.f32.mrb[0].mxu0
        %v4996 = vpop.f32.mrb[0].mxu0
        %v4997 = vadd.f32 %v4609, %v4996
        %v4998 = vpop.f32.mrb[0].mxu0
        %4999 = vmatprep.mubr.bf16.mxu0 0
        %5000 = vmatmul.mubr.bf16.gmra.mrb[0].mxu0 %v4824
        %v5001 = vpop.f32.mrb[0].mxu0
        %v5002 = vadd.f32 %v4614, %v5001
        %v5003 = vpop.f32.mrb[0].mxu0
        %v5004 = vpop.f32.mrb[0].mxu0
        %v5005 = vadd.f32 %v4617, %v5004
        %v5006 = vpop.f32.mrb[0].mxu0
        %5007 = vmatprep.mubr.bf16.mxu0 0
        %5008 = vmatmul.mubr.bf16.gmra.mrb[0].mxu0 %v4827
        %v5009 = vpop.f32.mrb[0].mxu0
        %v5010 = vadd.f32 %v4622, %v5009
        %v5011 = vpop.f32.mrb[0].mxu0
        %v5012 = vpop.f32.mrb[0].mxu0
        %v5013 = vadd.f32 %v4625, %v5012
        %v5014 = vpop.f32.mrb[0].mxu0
        %5015 = vmatprep.mubr.bf16.mxu0 0
        %5016 = vmatmul.mubr.bf16.gmra.mrb[0].mxu0 %v4830
        %v5017 = vpop.f32.mrb[0].mxu0
        %v5018 = vadd.f32 %v4630, %v5017
        %v5019 = vpop.f32.mrb[0].mxu0
        %v5020 = vpop.f32.mrb[0].mxu0
        %v5021 = vadd.f32 %v4633, %v5020
        %v5022 = vpop.f32.mrb[0].mxu0
        %5023 = vmatprep.mubr.bf16.mxu0 0
        %5024 = vmatmul.mubr.bf16.gmra.mrb[0].mxu0 %v4833
        %v5025 = vpop.f32.mrb[0].mxu0
        %v5026 = vadd.f32 %v4638, %v5025
        %v5027 = vpop.f32.mrb[0].mxu0
        %v5028 = vpop.f32.mrb[0].mxu0
        %v5029 = vadd.f32 %v4641, %v5028
        %v5030 = vpop.f32.mrb[0].mxu0
        %5031 = vmatprep.mubr.bf16.mxu0 0
        %5032 = vmatmul.mubr.bf16.gmra.mrb[0].mxu0 %v4836
        %v5033 = vpop.f32.mrb[0].mxu0
        %v5034 = vadd.f32 %v4646, %v5033
        %v5035 = vpop.f32.mrb[0].mxu0
        %v5036 = vpop.f32.mrb[0].mxu0
        %v5037 = vadd.f32 %v4649, %v5036
        %v5038 = vpop.f32.mrb[0].mxu0
        %5039 = vmatprep.mubr.bf16.mxu0 0
        %5040 = vmatmul.mubr.bf16.gmra.mrb[0].mxu0 %v4839
        %v5041 = vpop.f32.mrb[0].mxu0
        %v5042 = vadd.f32 %v4654, %v5041
        %v5043 = vpop.f32.mrb[0].mxu0
        %v5044 = vpop.f32.mrb[0].mxu0
        %v5045 = vadd.f32 %v4657, %v5044
        %v5046 = vpop.f32.mrb[0].mxu0
        %5047 = vmatprep.mubr.bf16.mxu0 0
        %5048 = vmatmul.mubr.bf16.gmra.mrb[0].mxu0 %v4842
        %v5049 = vpop.f32.mrb[0].mxu0
        %v5050 = vadd.f32 %v4662, %v5049
        %v5051 = vpop.f32.mrb[0].mxu0
        %v5052 = vpop.f32.mrb[0].mxu0
        %v5053 = vadd.f32 %v4665, %v5052
        %v5054 = vpop.f32.mrb[0].mxu0
        %5055 = vmatprep.mubr.bf16.mxu0 0
        %5056 = vmatmul.mubr.bf16.gmra.mrb[0].mxu0 %v4845
        %v5057 = vpop.f32.mrb[0].mxu0
        %v5058 = vadd.f32 %v4670, %v5057
        %v5059 = vpop.f32.mrb[0].mxu0
        %v5060 = vpop.f32.mrb[0].mxu0
        %v5061 = vadd.f32 %v4673, %v5060
        %v5062 = vpop.f32.mrb[0].mxu0
        %5063 = vmatprep.mubr.bf16.mxu0 0
        %5064 = vmatmul.mubr.bf16.gmra.mrb[0].mxu0 %v4848
        %v5065 = vpop.f32.mrb[0].mxu0
        %v5066 = vadd.f32 %v4678, %v5065
        %v5067 = vpop.f32.mrb[0].mxu0
        %v5068 = vpop.f32.mrb[0].mxu0
        %v5069 = vadd.f32 %v4681, %v5068
        %v5070 = vpop.f32.mrb[0].mxu0
        %5071 = vmatprep.mubr.bf16.mxu0 0
        %5072 = vmatmul.mubr.bf16.gmra.mrb[0].mxu0 %v4851
        %v5073 = vpop.f32.mrb[0].mxu0
        %v5074 = vadd.f32 %v4686, %v5073
        %v5075 = vpop.f32.mrb[0].mxu0
        %v5076 = vpop.f32.mrb[0].mxu0
        %v5077 = vadd.f32 %v4689, %v5076
        %v5078 = vpop.f32.mrb[0].mxu0
        %5079 = vmatprep.mubr.bf16.mxu0 0
        %5080 = vmatmul.mubr.bf16.gmra.mrb[0].mxu0 %v4854
        %v5081 = vpop.f32.mrb[0].mxu0
        %v5082 = vadd.f32 %v4694, %v5081
        %v5083 = vpop.f32.mrb[0].mxu0
        %v5084 = vpop.f32.mrb[0].mxu0
        %v5085 = vadd.f32 %v4697, %v5084
        %v5086 = vpop.f32.mrb[0].mxu0
        %5087 = vmatprep.mubr.bf16.mxu0 0
        %5088 = vmatmul.mubr.bf16.gmra.mrb[0].mxu0 %v4857
        %v5089 = vpop.f32.mrb[0].mxu0
        %v5090 = vadd.f32 %v4702, %v5089
        %v5091 = vpop.f32.mrb[0].mxu0
        %v5092 = vpop.f32.mrb[0].mxu0
        %v5093 = vadd.f32 %v4705, %v5092
        %v5094 = vpop.f32.mrb[0].mxu0
        %5095 = vmatprep.mubr.bf16.mxu0 0
        %5096 = vmatmul.mubr.bf16.gmra.mrb[0].mxu0 %v4860
        %v5097 = vpop.f32.mrb[0].mxu0
        %v5098 = vadd.f32 %v4710, %v5097
        %v5099 = vpop.f32.mrb[0].mxu0
        %v5100 = vpop.f32.mrb[0].mxu0
        %v5101 = vadd.f32 %v4713, %v5100
        %v5102 = vpop.f32.mrb[0].mxu0
        %5103 = vmatprep.mubr.bf16.mxu0 0
        %5104 = vmatmul.mubr.bf16.gmra.mrb[0].mxu0 %v4863
        %v5105 = vpop.f32.mrb[0].mxu0
        %v5106 = vadd.f32 %v4718, %v5105
        %v5107 = vpop.f32.mrb[0].mxu0
        %v5108 = vpop.f32.mrb[0].mxu0
        %v5109 = vadd.f32 %v4721, %v5108
        %v5110 = vpop.f32.mrb[0].mxu0
        %5111 = vmatprep.mubr.bf16.mxu0 0
        %5112 = vmatmul.mubr.bf16.gmra.mrb[0].mxu0 %v4866
        %v5113 = vpop.f32.mrb[0].mxu0
        %v5114 = vadd.f32 %v4726, %v5113
        %v5115 = vpop.f32.mrb[0].mxu0
        %v5116 = vpop.f32.mrb[0].mxu0
        %v5117 = vadd.f32 %v4729, %v5116
        %v5118 = vpop.f32.mrb[0].mxu0
        %5119 = vmatprep.mubr.bf16.mxu0 0
        %5120 = vmatmul.mubr.bf16.gmra.mrb[0].mxu0 %v4869
        %v5121 = vpop.f32.mrb[0].mxu0
        %v5122 = vadd.f32 %v4734, %v5121
        %v5123 = vpop.f32.mrb[0].mxu0
        %v5124 = vpop.f32.mrb[0].mxu0
        %v5125 = vadd.f32 %v4737, %v5124
        %v5126 = vpop.f32.mrb[0].mxu0
        %5127 = vmatprep.mubr.bf16.mxu0 0
        %5128 = vmatmul.mubr.bf16.gmra.mrb[0].mxu0 %v4872
        %v5129 = vpop.f32.mrb[0].mxu0
        %v5130 = vadd.f32 %v4742, %v5129
        %v5131 = vpop.f32.mrb[0].mxu0
        %v5132 = vpop.f32.mrb[0].mxu0
        %v5133 = vadd.f32 %v4745, %v5132
        %v5134 = vpop.f32.mrb[0].mxu0
        %5135 = vmatprep.mubr.bf16.mxu0 0
        %5136 = vmatmul.mubr.bf16.gmra.mrb[0].mxu0 %v4875
        %v5137 = vpop.f32.mrb[0].mxu0
        %v5138 = vadd.f32 %v4750, %v5137
        %v5139 = vpop.f32.mrb[0].mxu0
        %v5140 = vpop.f32.mrb[0].mxu0
        %v5141 = vadd.f32 %v4753, %v5140
        %v5142 = vpop.f32.mrb[0].mxu0
        %5143 = vmatprep.mubr.bf16.mxu0 0
        %5144 = vmatmul.mubr.bf16.gmra.mrb[0].mxu0 %v4878
        %v5145 = vpop.f32.mrb[0].mxu0
        %v5146 = vadd.f32 %v4758, %v5145
        %v5147 = vpop.f32.mrb[0].mxu0
        %v5148 = vpop.f32.mrb[0].mxu0
        %v5149 = vadd.f32 %v4761, %v5148
        %v5150 = vpop.f32.mrb[0].mxu0
        %5151 = vmatprep.mubr.bf16.mxu0 0
        %5152 = vmatmul.mubr.bf16.gmra.mrb[0].mxu0 %v4881
        %v5153 = vpop.f32.mrb[0].mxu0
        %v5154 = vadd.f32 %v4766, %v5153
        %v5155 = vpop.f32.mrb[0].mxu0
        %v5156 = vpop.f32.mrb[0].mxu0
        %v5157 = vadd.f32 %v4769, %v5156
        %v5158 = vpop.f32.mrb[0].mxu0
        %5159 = vmatprep.mubr.bf16.mxu0 0
        %5160 = vmatmul.mubr.bf16.gmra.mrb[0].mxu0 %v4884
        %v5161 = vpop.f32.mrb[0].mxu0
        %v5162 = vadd.f32 %v4774, %v5161
        %v5163 = vpop.f32.mrb[0].mxu0
        %v5164 = vpop.f32.mrb[0].mxu0
        %v5165 = vadd.f32 %v4777, %v5164
        %v5166 = vpop.f32.mrb[0].mxu0
        %5167 = vmatprep.mubr.bf16.mxu0 0
        %5168 = vmatmul.mubr.bf16.gmra.mrb[0].mxu0 %v4887
        %v5169 = vpop.f32.mrb[0].mxu0
        %v5170 = vadd.f32 %v4782, %v5169
        %v5171 = vpop.f32.mrb[0].mxu0
        %v5172 = vpop.f32.mrb[0].mxu0
        %v5173 = vadd.f32 %v4785, %v5172
        %v5174 = vpop.f32.mrb[0].mxu0
        %5175 = vmatprep.mubr.bf16.mxu0 0
        %5176 = vmatmul.mubr.bf16.gmra.mrb[0].mxu0 %v4890
        %v5177 = vpop.f32.mrb[0].mxu0
        %v5178 = vadd.f32 %v4790, %v5177
        %v5179 = vpop.f32.mrb[0].mxu0
        %v5180 = vpop.f32.mrb[0].mxu0
        %v5181 = vadd.f32 %v4793, %v5180
        %v5182 = vpop.f32.mrb[0].mxu0
        %5183 = vdwg.mxu0
        %v5184 = vld [vmem:[%s5] sm:$0x1]
        %v5186 = vlaneseq
        %v5187 = vshrl.u32 %v5186, 7
        %v5188 = vsub.s32 0, %v5187
        %v5189 = vrot.slane %v5184, %v5188
        %v5191 = vadd.f32 %v4930, %v5189
        %v5192 = vadd.f32 %v4933, %v5189
        %v5193 = vadd.f32 %v4938, %v5189
        %v5194 = vadd.f32 %v4941, %v5189
        %v5195 = vadd.f32 %v4946, %v5189
        %v5196 = vadd.f32 %v4949, %v5189
        %v5197 = vadd.f32 %v4954, %v5189
        %v5198 = vadd.f32 %v4957, %v5189
        %v5199 = vadd.f32 %v4962, %v5189
        %v5200 = vadd.f32 %v4965, %v5189
        %v5201 = vadd.f32 %v4970, %v5189
        %v5202 = vadd.f32 %v4973, %v5189
        %v5203 = vadd.f32 %v4978, %v5189
        %v5204 = vadd.f32 %v4981, %v5189
        %v5205 = vadd.f32 %v4986, %v5189
        %v5206 = vadd.f32 %v4989, %v5189
        %v5207 = vadd.f32 %v4994, %v5189
        %v5208 = vadd.f32 %v4997, %v5189
        %v5209 = vadd.f32 %v5002, %v5189
        %v5210 = vadd.f32 %v5005, %v5189
        %v5211 = vadd.f32 %v5010, %v5189
        %v5212 = vadd.f32 %v5013, %v5189
        %v5213 = vadd.f32 %v5018, %v5189
        %v5214 = vadd.f32 %v5021, %v5189
        %v5215 = vadd.f32 %v5026, %v5189
        %v5216 = vadd.f32 %v5029, %v5189
        %v5217 = vadd.f32 %v5034, %v5189
        %v5218 = vadd.f32 %v5037, %v5189
        %v5219 = vadd.f32 %v5042, %v5189
        %v5220 = vadd.f32 %v5045, %v5189
        %v5221 = vadd.f32 %v5050, %v5189
        %v5222 = vadd.f32 %v5053, %v5189
        %v5223 = vadd.f32 %v5058, %v5189
        %v5224 = vadd.f32 %v5061, %v5189
        %v5225 = vadd.f32 %v5066, %v5189
        %v5226 = vadd.f32 %v5069, %v5189
        %v5227 = vadd.f32 %v5074, %v5189
        %v5228 = vadd.f32 %v5077, %v5189
        %v5229 = vadd.f32 %v5082, %v5189
        %v5230 = vadd.f32 %v5085, %v5189
        %v5231 = vadd.f32 %v5090, %v5189
        %v5232 = vadd.f32 %v5093, %v5189
        %v5233 = vadd.f32 %v5098, %v5189
        %v5234 = vadd.f32 %v5101, %v5189
        %v5235 = vadd.f32 %v5106, %v5189
        %v5236 = vadd.f32 %v5109, %v5189
        %v5237 = vadd.f32 %v5114, %v5189
        %v5238 = vadd.f32 %v5117, %v5189
        %v5239 = vadd.f32 %v5122, %v5189
        %v5240 = vadd.f32 %v5125, %v5189
        %v5241 = vadd.f32 %v5130, %v5189
        %v5242 = vadd.f32 %v5133, %v5189
        %v5243 = vadd.f32 %v5138, %v5189
        %v5244 = vadd.f32 %v5141, %v5189
        %v5245 = vadd.f32 %v5146, %v5189
        %v5246 = vadd.f32 %v5149, %v5189
        %v5247 = vadd.f32 %v5154, %v5189
        %v5248 = vadd.f32 %v5157, %v5189
        %v5249 = vadd.f32 %v5162, %v5189
        %v5250 = vadd.f32 %v5165, %v5189
        %v5251 = vadd.f32 %v5170, %v5189
        %v5252 = vadd.f32 %v5173, %v5189
        %v5253 = vadd.f32 %v5178, %v5189
        %v5254 = vadd.f32 %v5181, %v5189
        %v5255 = vmax.f32 %v5191, 0.0
        %v5256 = vmax.f32 %v5192, 0.0
        %v5257 = vmax.f32 %v5193, 0.0
        %v5258 = vmax.f32 %v5194, 0.0
        %v5259 = vmax.f32 %v5195, 0.0
        %v5260 = vmax.f32 %v5196, 0.0
        %v5261 = vmax.f32 %v5197, 0.0
        %v5262 = vmax.f32 %v5198, 0.0
        %v5263 = vmax.f32 %v5199, 0.0
        %v5264 = vmax.f32 %v5200, 0.0
        %v5265 = vmax.f32 %v5201, 0.0
        %v5266 = vmax.f32 %v5202, 0.0
        %v5267 = vmax.f32 %v5203, 0.0
        %v5268 = vmax.f32 %v5204, 0.0
        %v5269 = vmax.f32 %v5205, 0.0
        %v5270 = vmax.f32 %v5206, 0.0
        %v5271 = vmax.f32 %v5207, 0.0
        %v5272 = vmax.f32 %v5208, 0.0
        %v5273 = vmax.f32 %v5209, 0.0
        %v5274 = vmax.f32 %v5210, 0.0
        %v5275 = vmax.f32 %v5211, 0.0
        %v5276 = vmax.f32 %v5212, 0.0
        %v5277 = vmax.f32 %v5213, 0.0
        %v5278 = vmax.f32 %v5214, 0.0
        %v5279 = vmax.f32 %v5215, 0.0
        %v5280 = vmax.f32 %v5216, 0.0
        %v5281 = vmax.f32 %v5217, 0.0
        %v5282 = vmax.f32 %v5218, 0.0
        %v5283 = vmax.f32 %v5219, 0.0
        %v5284 = vmax.f32 %v5220, 0.0
        %v5285 = vmax.f32 %v5221, 0.0
        %v5286 = vmax.f32 %v5222, 0.0
        %v5287 = vmax.f32 %v5223, 0.0
        %v5288 = vmax.f32 %v5224, 0.0
        %v5289 = vmax.f32 %v5225, 0.0
        %v5290 = vmax.f32 %v5226, 0.0
        %v5291 = vmax.f32 %v5227, 0.0
        %v5292 = vmax.f32 %v5228, 0.0
        %v5293 = vmax.f32 %v5229, 0.0
        %v5294 = vmax.f32 %v5230, 0.0
        %v5295 = vmax.f32 %v5231, 0.0
        %v5296 = vmax.f32 %v5232, 0.0
        %v5297 = vmax.f32 %v5233, 0.0
        %v5298 = vmax.f32 %v5234, 0.0
        %v5299 = vmax.f32 %v5235, 0.0
        %v5300 = vmax.f32 %v5236, 0.0
        %v5301 = vmax.f32 %v5237, 0.0
        %v5302 = vmax.f32 %v5238, 0.0
        %v5303 = vmax.f32 %v5239, 0.0
        %v5304 = vmax.f32 %v5240, 0.0
        %v5305 = vmax.f32 %v5241, 0.0
        %v5306 = vmax.f32 %v5242, 0.0
        %v5307 = vmax.f32 %v5243, 0.0
        %v5308 = vmax.f32 %v5244, 0.0
        %v5309 = vmax.f32 %v5245, 0.0
        %v5310 = vmax.f32 %v5246, 0.0
        %v5311 = vmax.f32 %v5247, 0.0
        %v5312 = vmax.f32 %v5248, 0.0
        %v5313 = vmax.f32 %v5249, 0.0
        %v5314 = vmax.f32 %v5250, 0.0
        %v5315 = vmax.f32 %v5251, 0.0
        %v5316 = vmax.f32 %v5252, 0.0
        %v5317 = vmax.f32 %v5253, 0.0
        %v5318 = vmax.f32 %v5254, 0.0
        %5319 = vxpose.xlu0.b32.start [1/16] %v5255, 128
        %5320 = vxpose.xlu0.b32.cont [2/16] %v5256, 128
        %5321 = vxpose.xlu0.b32.cont [3/16] %v5257, 128
        %5322 = vxpose.xlu0.b32.cont [4/16] %v5258, 128
        %5323 = vxpose.xlu0.b32.cont [5/16] %v5259, 128
        %5324 = vxpose.xlu0.b32.cont [6/16] %v5260, 128
        %5325 = vxpose.xlu0.b32.cont [7/16] %v5261, 128
        %5326 = vxpose.xlu0.b32.cont [8/16] %v5262, 128
        %5327 = vxpose.xlu0.b32.cont [9/16] %v5263, 128
        %5328 = vxpose.xlu0.b32.cont [10/16] %v5264, 128
        %5329 = vxpose.xlu0.b32.cont [11/16] %v5265, 128
        %5330 = vxpose.xlu0.b32.cont [12/16] %v5266, 128
        %5331 = vxpose.xlu0.b32.cont [13/16] %v5267, 128
        %5332 = vxpose.xlu0.b32.cont [14/16] %v5268, 128
        %5333 = vxpose.xlu0.b32.cont [15/16] %v5269, 128
        %5334 = vxpose.xlu0.b32.end [16/16] %v5270, 128
        %v5335 = vpop.trf.xlu0
        %v5336 = vpop.trf.xlu0
        %v5337 = vpop.trf.xlu0
        %v5338 = vpop.trf.xlu0
        %v5339 = vpop.trf.xlu0
        %v5340 = vpop.trf.xlu0
        %v5341 = vpop.trf.xlu0
        %v5342 = vpop.trf.xlu0
        %v5343 = vpop.trf.xlu0
        %v5344 = vpop.trf.xlu0
        %v5345 = vpop.trf.xlu0
        %v5346 = vpop.trf.xlu0
        %v5347 = vpop.trf.xlu0
        %v5348 = vpop.trf.xlu0
        %v5349 = vpop.trf.xlu0
        %v5350 = vpop.trf.xlu0
        %5351 = vxpose.xlu0.b32.start [1/16] %v5271, 128
        %5352 = vxpose.xlu0.b32.cont [2/16] %v5272, 128
        %5353 = vxpose.xlu0.b32.cont [3/16] %v5273, 128
        %5354 = vxpose.xlu0.b32.cont [4/16] %v5274, 128
        %5355 = vxpose.xlu0.b32.cont [5/16] %v5275, 128
        %5356 = vxpose.xlu0.b32.cont [6/16] %v5276, 128
        %5357 = vxpose.xlu0.b32.cont [7/16] %v5277, 128
        %5358 = vxpose.xlu0.b32.cont [8/16] %v5278, 128
        %5359 = vxpose.xlu0.b32.cont [9/16] %v5279, 128
        %5360 = vxpose.xlu0.b32.cont [10/16] %v5280, 128
        %5361 = vxpose.xlu0.b32.cont [11/16] %v5281, 128
        %5362 = vxpose.xlu0.b32.cont [12/16] %v5282, 128
        %5363 = vxpose.xlu0.b32.cont [13/16] %v5283, 128
        %5364 = vxpose.xlu0.b32.cont [14/16] %v5284, 128
        %5365 = vxpose.xlu0.b32.cont [15/16] %v5285, 128
        %5366 = vxpose.xlu0.b32.end [16/16] %v5286, 128
        %v5367 = vpop.trf.xlu0
        %v5368 = vpop.trf.xlu0
        %v5369 = vpop.trf.xlu0
        %v5370 = vpop.trf.xlu0
        %v5371 = vpop.trf.xlu0
        %v5372 = vpop.trf.xlu0
        %v5373 = vpop.trf.xlu0
        %v5374 = vpop.trf.xlu0
        %v5375 = vpop.trf.xlu0
        %v5376 = vpop.trf.xlu0
        %v5377 = vpop.trf.xlu0
        %v5378 = vpop.trf.xlu0
        %v5379 = vpop.trf.xlu0
        %v5380 = vpop.trf.xlu0
        %v5381 = vpop.trf.xlu0
        %v5382 = vpop.trf.xlu0
        %v5383 = vpack.c.bf16 %v5335, %v5335
        %v5384 = vpack.c.bf16 %v5367, %v5367
        %v5387 = vunpack.c.l.b16 %v5383
        %v5388 = vunpack.c.l.b16 %v5384
        %v5389 = vpack.c.b16 %v5388, %v5387
        %5391 = vst [vmem:[%s247] sm:$0xff] %v5389
        %5392 = vxpose.xlu0.b32.start [1/16] %v5287, 128
        %5393 = vxpose.xlu0.b32.cont [2/16] %v5288, 128
        %5394 = vxpose.xlu0.b32.cont [3/16] %v5289, 128
        %5395 = vxpose.xlu0.b32.cont [4/16] %v5290, 128
        %5396 = vxpose.xlu0.b32.cont [5/16] %v5291, 128
        %5397 = vxpose.xlu0.b32.cont [6/16] %v5292, 128
        %5398 = vxpose.xlu0.b32.cont [7/16] %v5293, 128
        %5399 = vxpose.xlu0.b32.cont [8/16] %v5294, 128
        %5400 = vxpose.xlu0.b32.cont [9/16] %v5295, 128
        %5401 = vxpose.xlu0.b32.cont [10/16] %v5296, 128
        %5402 = vxpose.xlu0.b32.cont [11/16] %v5297, 128
        %5403 = vxpose.xlu0.b32.cont [12/16] %v5298, 128
        %5404 = vxpose.xlu0.b32.cont [13/16] %v5299, 128
        %5405 = vxpose.xlu0.b32.cont [14/16] %v5300, 128
        %5406 = vxpose.xlu0.b32.cont [15/16] %v5301, 128
        %5407 = vxpose.xlu0.b32.end [16/16] %v5302, 128
        %v5408 = vpop.trf.xlu0
        %v5409 = vpop.trf.xlu0
        %v5410 = vpop.trf.xlu0
        %v5411 = vpop.trf.xlu0
        %v5412 = vpop.trf.xlu0
        %v5413 = vpop.trf.xlu0
        %v5414 = vpop.trf.xlu0
        %v5415 = vpop.trf.xlu0
        %v5416 = vpop.trf.xlu0
        %v5417 = vpop.trf.xlu0
        %v5418 = vpop.trf.xlu0
        %v5419 = vpop.trf.xlu0
        %v5420 = vpop.trf.xlu0
        %v5421 = vpop.trf.xlu0
        %v5422 = vpop.trf.xlu0
        %v5423 = vpop.trf.xlu0
        %5424 = vxpose.xlu0.b32.start [1/16] %v5303, 128
        %5425 = vxpose.xlu0.b32.cont [2/16] %v5304, 128
        %5426 = vxpose.xlu0.b32.cont [3/16] %v5305, 128
        %5427 = vxpose.xlu0.b32.cont [4/16] %v5306, 128
        %5428 = vxpose.xlu0.b32.cont [5/16] %v5307, 128
        %5429 = vxpose.xlu0.b32.cont [6/16] %v5308, 128
        %5430 = vxpose.xlu0.b32.cont [7/16] %v5309, 128
        %5431 = vxpose.xlu0.b32.cont [8/16] %v5310, 128
        %5432 = vxpose.xlu0.b32.cont [9/16] %v5311, 128
        %5433 = vxpose.xlu0.b32.cont [10/16] %v5312, 128
        %5434 = vxpose.xlu0.b32.cont [11/16] %v5313, 128
        %5435 = vxpose.xlu0.b32.cont [12/16] %v5314, 128
        %5436 = vxpose.xlu0.b32.cont [13/16] %v5315, 128
        %5437 = vxpose.xlu0.b32.cont [14/16] %v5316, 128
        %5438 = vxpose.xlu0.b32.cont [15/16] %v5317, 128
        %5439 = vxpose.xlu0.b32.end [16/16] %v5318, 128
        %v5440 = vpop.trf.xlu0
        %v5441 = vpop.trf.xlu0
        %v5442 = vpop.trf.xlu0
        %v5443 = vpop.trf.xlu0
        %v5444 = vpop.trf.xlu0
        %v5445 = vpop.trf.xlu0
        %v5446 = vpop.trf.xlu0
        %v5447 = vpop.trf.xlu0
        %v5448 = vpop.trf.xlu0
        %v5449 = vpop.trf.xlu0
        %v5450 = vpop.trf.xlu0
        %v5451 = vpop.trf.xlu0
        %v5452 = vpop.trf.xlu0
        %v5453 = vpop.trf.xlu0
        %v5454 = vpop.trf.xlu0
        %v5455 = vpop.trf.xlu0
        %v5456 = vpack.c.bf16 %v5408, %v5408
        %v5457 = vpack.c.bf16 %v5440, %v5440
        %v5460 = vunpack.c.l.b16 %v5456
        %v5461 = vunpack.c.l.b16 %v5457
        %v5462 = vpack.c.b16 %v5461, %v5460
        %s5464 = scalar_lea.vmem %s247, 8 [#allocation4]
        %5465 = vst [vmem:[%s5464] sm:$0xff] %v5462
        %s5466 = sand.u32 %s159, 1
        %s5467 = scalar_lea.sflag [#allocation5], %s5466
        %s5468 = sand.u32 %s159, 1
        %s5469 = smul.addr %s5468, 16
        %s5470 = scalar_lea.vmem [#allocation4], %s5469
        // Predicated region
        $region45: #{tpu_custom_call.1} parent=43 // pred_check
          %p5471 = pneg %p169
        $region46: #{tpu_custom_call.1} parent=43 // pred_check_branch
          %5473 = sbr.rel (%p5471) target = $region48
        $region47: #{tpu_custom_call.1} parent=43 // pred_region
          %s5474 = smul.u32 2, %s20
          %s5476 = ssub.s32 256, 256
          %5477 = vsyncadd %s5467, %s5476
          %s5478 = smul.addr %s5474, 2
          %s5479 = smul.addr %s5478, 64
          %s5480 = scalar_lea.hbm %s6, %s5479
          %s5481 = sshll.u32 %s5470, 4
          %s5482 = int_to_ptr.vmem [resolvable:$true] %s5481
          %5487 = dma.vmem_to_hbm [thread:$0]  %s5482, 256, %s5480, %s5467, 128, 128, 8
        $region48: #{tpu_custom_call.1} parent=43 // pred_fallthru
          _
      $region44: #{tpu_custom_call.1} parent=5 // pred_fallthru
        _
      %p5488 = scmp.le.s32.totalorder 2, %s15
      // Predicated region
      $region49: #{tpu_custom_call.1} parent=5 // pred_check
        %p5489 = pneg %p5488
      $region50: #{tpu_custom_call.1} parent=5 // pred_check_branch
        %5491 = sbr.rel (%p5489) target = $region52
      $region51: #{tpu_custom_call.1} parent=5 // pred_region
        %s5492 = ssub.s32 %s15, 2
        // Predicated region
        $region53: #{tpu_custom_call.1} parent=51 // pred_check
          %p5493 = pneg %p175
        $region54: #{tpu_custom_call.1} parent=51 // pred_check_branch
          %5495 = sbr.rel (%p5493) target = $region56
        $region55: #{tpu_custom_call.1} parent=51 // pred_region
          %s5496 = sand.u32 %s160, 1
          %s5497 = scalar_lea.sflag [#allocation5], %s5496
          %s5498 = sand.u32 %s160, 1
          %s5499 = smul.addr %s5498, 16
          %s5500 = scalar_lea.vmem [#allocation4], %s5499
          %5501 = dma.done %s5497, 256
        $region56: #{tpu_custom_call.1} parent=51 // pred_fallthru
          _
      $region52: #{tpu_custom_call.1} parent=5 // pred_fallthru
        _
    $region6: #{tpu_custom_call.1} parent=1 // loop_footer
      %s19 = sadd.s32 1, %s15
    $region7: #{tpu_custom_call.1} parent=1 // loop_footer_branch
      %14 = sbr.rel target = $region3
    $region8: #{tpu_custom_call.1} parent=1 // loop_exit
      _
    %5502 = vsyncpa [#allocation5], 1
    %s5503 = scalar_lea.sflag [#allocation5], 1
    %5504 = vsyncpa %s5503, 1

</llo_original>
